<compile_context>
chip_gen: v7x
topology: tpu7x:2x2x1
jax: 0.10.0
libtpu: 0.0.40
codegen_flags: <defaults>
</compile_context>

<pallas_src>
import functools
import math

import numpy as np
import jax
import jax.numpy as jnp
from jax import lax
from jax.experimental import pallas as pl
from jax.experimental.pallas import tpu as pltpu


# ----------------------------------------------------------------------------
# In-kernel helpers
# ----------------------------------------------------------------------------
def _bf16(x):
    return x.astype(jnp.bfloat16)


def _erf(x):
    # Abramowitz & Stegun 7.1.26 (max abs err ~1.5e-7): matches PyTorch's exact
    # erf-GELU to f32 precision; exp lands on the EUP slot.
    a1, a2, a3, a4, a5 = (0.254829592, -0.284496736, 1.421413741,
                          -1.453152027, 1.061405429)
    p = 0.3275911
    ax = jnp.abs(x)
    t = 1.0 / (1.0 + p * ax)
    poly = ((((a5 * t + a4) * t + a3) * t + a2) * t + a1) * t
    y = 1.0 - poly * jnp.exp(-ax * ax)
    return jnp.where(x >= 0, y, -y)


def _gelu_exact(x):
    return 0.5 * x * (1.0 + _erf(x * (1.0 / math.sqrt(2.0))))


def _layernorm(x, g, b, eps):
    mu = jnp.mean(x, axis=-1, keepdims=True)
    xc = x - mu
    var = jnp.mean(xc * xc, axis=-1, keepdims=True)
    return xc * lax.rsqrt(var + eps) * g + b


# ----------------------------------------------------------------------------
# Pallas kernels
# ----------------------------------------------------------------------------
def _patch_embed_kernel(xp_ref, w_ref, b_ref, g_ref, bn_ref, pos_ref, o_ref,
                        *, eps):
    """Patch-flatten matmul + bias + LayerNorm + absolute pos emb (row tile)."""
    x = xp_ref[0]                                            # (TL, K) f32
    y = jnp.dot(_bf16(x), w_ref[...],
                preferred_element_type=jnp.float32) + b_ref[...]
    y = _layernorm(y, g_ref[...], bn_ref[...], eps)
    o_ref[0] = (y + pos_ref[...]).astype(o_ref.dtype)


def _swin_block_kernel(xq_ref, xkv_ref, bias_ref, lmask_ref,
                       g1_ref, b1_ref,
                       wq_ref, bq_ref, wk_ref, bk_ref, wv_ref, bv_ref,
                       pw_ref, pb_ref,
                       g2_ref, b2_ref, w1_ref, c1_ref, w2_ref, c2_ref,
                       o_ref, *, num_heads, scale, eps):
    """Fully fused Swin block on a tile of query tokens.

    xq_ref : (1, TQ, C) query-row tile of the image
    xkv_ref: (1, L,  C) all tokens of the image (keys / values)
    bias_ref: (nH, TQ, L) precomputed rel-pos bias + window / shift mask
    lmask_ref: (TQ, L) additive land mask (scattered to token pairs)
    """
    xq = xq_ref[0]                                           # (TQ, C) f32
    xkv = xkv_ref[0]                                         # (L,  C) f32
    C = xq.shape[-1]
    Dh = C // num_heads

    # ---- attention half -----------------------------------------------------
    yq = _bf16(_layernorm(xq, g1_ref[...], b1_ref[...], eps))
    ykv = _bf16(_layernorm(xkv, g1_ref[...], b1_ref[...], eps))

    q = jnp.dot(yq, wq_ref[...], preferred_element_type=jnp.float32) + bq_ref[...]
    k = jnp.dot(ykv, wk_ref[...], preferred_element_type=jnp.float32) + bk_ref[...]
    v = jnp.dot(ykv, wv_ref[...], preferred_element_type=jnp.float32) + bv_ref[...]
    q = q * scale                                            # fold scale once

    # Head-major stacks -> ONE batched matmul per einsum (no per-head MXU loop).
    qh = jnp.stack([_bf16(q[:, h * Dh:(h + 1) * Dh]) for h in range(num_heads)], 0)
    kh = jnp.stack([_bf16(k[:, h * Dh:(h + 1) * Dh]) for h in range(num_heads)], 0)
    vh = jnp.stack([_bf16(v[:, h * Dh:(h + 1) * Dh]) for h in range(num_heads)], 0)

    s = jnp.einsum("hqd,hkd->hqk", qh, kh,
                   preferred_element_type=jnp.float32)       # (nH, TQ, L)
    s = s + bias_ref[...] + lmask_ref[...][None, :, :]
    s = s - jnp.max(s, axis=-1, keepdims=True)
    p = jnp.exp(s)
    p = p * pl.reciprocal(jnp.sum(p, axis=-1, keepdims=True), approx=True)
    oh = jnp.einsum("hqk,hkd->hqd", _bf16(p), vh,
                    preferred_element_type=jnp.float32)      # (nH, TQ, Dh)

    # Concatenate heads and do ONE full-width output projection.
    o_cat = jnp.concatenate([oh[h] for h in range(num_heads)], axis=-1)  # (TQ, C)
    attn = jnp.dot(_bf16(o_cat), pw_ref[...],
                   preferred_element_type=jnp.float32) + pb_ref[...]
    x1 = xq + attn                                           # residual (drop_path=0)

    # ---- MLP half -------------------------------------------------------------
    y2 = _bf16(_layernorm(x1, g2_ref[...], b2_ref[...], eps))
    h1 = jnp.dot(y2, w1_ref[...], preferred_element_type=jnp.float32) + c1_ref[...]
    h1 = _gelu_exact(h1)                                     # hid = 128/256 lanes
    mlp = jnp.dot(_bf16(h1), w2_ref[...],
                  preferred_element_type=jnp.float32) + c2_ref[...]
    o_ref[0] = (x1 + mlp).astype(o_ref.dtype)


def _patch_merge_kernel(x_ref, g_ref, b_ref, w_ref, o_ref, *, eps):
    x = x_ref[0]                                             # (L, 4C) f32
    y = _layernorm(x, g_ref[...], b_ref[...], eps)
    o_ref[0] = jnp.dot(_bf16(y), w_ref[...],
                       preferred_element_type=jnp.float32).astype(o_ref.dtype)


def _ln_kernel(x_ref, g_ref, b_ref, o_ref, *, eps):
    o_ref[0] = _layernorm(x_ref[0], g_ref[...], b_ref[...], eps).astype(o_ref.dtype)


_PAR1 = pltpu.CompilerParams(dimension_semantics=("parallel",))
_PAR2 = pltpu.CompilerParams(dimension_semantics=("parallel", "parallel"))


def _row_tile(L):
    # >= 2 row tiles when possible (feeds both v7x cores / enables pipelining),
    # while respecting the (8, 128) sublane rule.
    return 8 if (L % 8 == 0 and L >= 16) else L


# ----------------------------------------------------------------------------
# Kernel wrappers
# ----------------------------------------------------------------------------
def patch_embed(xp, pe, eps):
    B, L, K = xp.shape
    C = pe["proj_w"].shape[1]
    TL = _row_tile(L)
    return pl.pallas_call(
        functools.partial(_patch_embed_kernel, eps=eps),
        out_shape=jax.ShapeDtypeStruct((B, L, C), jnp.float32),
        grid=(B, L // TL),
        in_specs=[
            pl.BlockSpec((1, TL, K), lambda b, t: (b, t, 0)),
            pl.BlockSpec((K, C), lambda b, t: (0, 0)),
            pl.BlockSpec((1, C), lambda b, t: (0, 0)),
            pl.BlockSpec((1, C), lambda b, t: (0, 0)),
            pl.BlockSpec((1, C), lambda b, t: (0, 0)),
            pl.BlockSpec((TL, C), lambda b, t: (t, 0)),
        ],
        out_specs=pl.BlockSpec((1, TL, C), lambda b, t: (b, t, 0)),
        compiler_params=_PAR2,
    )(xp, pe["proj_w"], pe["proj_b"].reshape(1, C),
      pe["norm_g"].reshape(1, C), pe["norm_b"].reshape(1, C), pe["pos_emb"])


def swin_block(x, land_LL, p, num_heads, eps):
    B, L, C = x.shape
    Hd = p["fc1_w"].shape[1]
    Dh = C // num_heads
    scale = Dh ** -0.5
    TQ = _row_tile(L)
    return pl.pallas_call(
        functools.partial(_swin_block_kernel, num_heads=num_heads,
                          scale=scale, eps=eps),
        out_shape=jax.ShapeDtypeStruct((B, L, C), jnp.float32),
        grid=(B, L // TQ),
        in_specs=[
            pl.BlockSpec((1, TQ, C), lambda b, t: (b, t, 0)),         # query rows
            pl.BlockSpec((1, L, C), lambda b, t: (b, 0, 0)),          # key/value rows
            pl.BlockSpec((num_heads, TQ, L), lambda b, t: (0, t, 0)),  # rpb+win mask
            pl.BlockSpec((TQ, L), lambda b, t: (t, 0)),               # land mask
            pl.BlockSpec((1, C), lambda b, t: (0, 0)),                # ln1 g
            pl.BlockSpec((1, C), lambda b, t: (0, 0)),                # ln1 b
            pl.BlockSpec((C, C), lambda b, t: (0, 0)),                # wq (bf16)
            pl.BlockSpec((1, C), lambda b, t: (0, 0)),                # bq
            pl.BlockSpec((C, C), lambda b, t: (0, 0)),                # wk (bf16)
            pl.BlockSpec((1, C), lambda b, t: (0, 0)),                # bk
            pl.BlockSpec((C, C), lambda b, t: (0, 0)),                # wv (bf16)
            pl.BlockSpec((1, C), lambda b, t: (0, 0)),                # bv
            pl.BlockSpec((C, C), lambda b, t: (0, 0)),                # proj w (bf16)
            pl.BlockSpec((1, C), lambda b, t: (0, 0)),                # proj b
            pl.BlockSpec((1, C), lambda b, t: (0, 0)),                # ln2 g
            pl.BlockSpec((1, C), lambda b, t: (0, 0)),                # ln2 b
            pl.BlockSpec((C, Hd), lambda b, t: (0, 0)),               # fc1 w (bf16)
            pl.BlockSpec((1, Hd), lambda b, t: (0, 0)),               # fc1 b
            pl.BlockSpec((Hd, C), lambda b, t: (0, 0)),               # fc2 w (bf16)
            pl.BlockSpec((1, C), lambda b, t: (0, 0)),                # fc2 b
        ],
        out_specs=pl.BlockSpec((1, TQ, C), lambda b, t: (b, t, 0)),
        compiler_params=_PAR2,
    )(x, x, p["attn_bias"], land_LL,
      p["ln1_g"].reshape(1, C), p["ln1_b"].reshape(1, C),
      p["wq"], p["bq"].reshape(1, C), p["wk"], p["bk"].reshape(1, C),
      p["wv"], p["bv"].reshape(1, C),
      p["proj_w"], p["proj_b"].reshape(1, C),
      p["ln2_g"].reshape(1, C), p["ln2_b"].reshape(1, C),
      p["fc1_w"], p["fc1_b"].reshape(1, Hd),
      p["fc2_w"], p["fc2_b"].reshape(1, C))


def patch_merging(x, p, eps):
    B, H, W, C = x.shape
    # 2x2 neighbourhood gather stays as cheap XLA glue (strided slices + concat).
    x4 = jnp.concatenate(
        [x[:, 0::2, 0::2, :], x[:, 1::2, 0::2, :],
         x[:, 0::2, 1::2, :], x[:, 1::2, 1::2, :]], axis=-1)   # (B, H/2, W/2, 4C)
    L = (H // 2) * (W // 2)
    x4 = x4.reshape(B, L, 4 * C)
    return pl.pallas_call(
        functools.partial(_patch_merge_kernel, eps=eps),
        out_shape=jax.ShapeDtypeStruct((B, L, 2 * C), jnp.float32),
        grid=(B,),
        in_specs=[
            pl.BlockSpec((1, L, 4 * C), lambda b: (b, 0, 0)),
            pl.BlockSpec((1, 4 * C), lambda b: (0, 0)),
            pl.BlockSpec((1, 4 * C), lambda b: (0, 0)),
            pl.BlockSpec((4 * C, 2 * C), lambda b: (0, 0)),
        ],
        out_specs=pl.BlockSpec((1, L, 2 * C), lambda b: (b, 0, 0)),
        compiler_params=_PAR1,
    )(x4, p["norm_g"].reshape(1, 4 * C), p["norm_b"].reshape(1, 4 * C),
      p["red_w"])


def layernorm(x3, gamma, beta, eps):
    B, L, C = x3.shape
    return pl.pallas_call(
        functools.partial(_ln_kernel, eps=eps),
        out_shape=jax.ShapeDtypeStruct((B, L, C), jnp.float32),
        grid=(B,),
        in_specs=[
            pl.BlockSpec((1, L, C), lambda b: (b, 0, 0)),
            pl.BlockSpec((1, C), lambda b: (0, 0)),
            pl.BlockSpec((1, C), lambda b: (0, 0)),
        ],
        out_specs=pl.BlockSpec((1, L, C), lambda b: (b, 0, 0)),
        compiler_params=_PAR1,
    )(x3, gamma.reshape(1, C), beta.reshape(1, C))


# ----------------------------------------------------------------------------
# Static Swin window / shift / rel-pos layout (precomputed at init)
# ----------------------------------------------------------------------------
def _block_shift(Hi, Wi, ws, depth_idx):
    # Odd blocks are shifted; never shift when the feature map is <= window size.
    return (ws // 2) if (depth_idx % 2 == 1 and min(Hi, Wi) > ws) else 0


def _swin_pair_layout(Hf, Wf, ws, shift):
    """Per raster-token window membership / in-window index, and per-pair
    rel-pos-table index + allowed-pair mask for a (possibly shifted) window
    partition.  All static (numpy)."""
    r = np.repeat(np.arange(Hf), Wf)
    c = np.tile(np.arange(Wf), Hf)
    rr = (r - shift) % Hf                       # coords in the rolled frame
    cc = (c - shift) % Wf
    win_id = (rr // ws) * (Wf // ws) + (cc // ws)
    in_id = (rr % ws) * ws + (cc % ws)

    def _region(x, n):
        reg = np.zeros_like(x)
        if shift > 0:                           # standard Swin boundary regions
            reg = np.where(x >= n - ws, 1, reg)
            reg = np.where(x >= n - shift, 2, reg)
        return reg

    reg = _region(rr, Hf) * 3 + _region(cc, Wf)
    same = (win_id[:, None] == win_id[None, :]) & (reg[:, None] == reg[None, :])
    dr = (rr % ws)[:, None] - (rr % ws)[None, :] + ws - 1
    dc = (cc % ws)[:, None] - (cc % ws)[None, :] + ws - 1
    rel_idx = dr * (2 * ws - 1) + dc
    return win_id, in_id, rel_idx, same


def _build_attn_bias(rpb_table, Hf, Wf, ws, shift):
    win_id, in_id, rel_idx, same = _swin_pair_layout(Hf, Wf, ws, shift)
    bias = jnp.transpose(rpb_table[rel_idx], (2, 0, 1))      # (nH, L, L)
    bias = jnp.where(jnp.asarray(same)[None, :, :], bias, -1e9)
    return (bias.astype(jnp.float32),
            jnp.asarray(win_id, jnp.int32), jnp.asarray(in_id, jnp.int32))


# ----------------------------------------------------------------------------
# Encoder config / params / forward
# ----------------------------------------------------------------------------
CFG = dict(
    input_shape=(16, 16), patch_size=4, embed_dim=32,
    enc_depths=(2, 2), enc_heads=(2, 4), window_size=2,
    mlp_ratio=4, max_t=4, layer_norm_eps=1e-5,
    drop_rate=0.0, drop_path_rate=0.0,
)


def init_params(key, cfg, in_chans):
    def nrm(k, shape, dtype=jnp.float32):
        return (0.02 * jax.random.normal(k, shape, jnp.float32)).astype(dtype)

    keys = iter(jax.random.split(key, 256))
    P, C0 = cfg["patch_size"], cfg["embed_dim"]
    Hp, Wp = cfg["input_shape"][0] // P, cfg["input_shape"][1] // P
    ws = cfg["window_size"]

    params = {
        "patch_embed": {
            "proj_w": nrm(next(keys), (in_chans * P * P, C0), jnp.bfloat16),
            "proj_b": jnp.zeros((C0,), jnp.float32),
            "norm_g": jnp.ones((C0,), jnp.float32),
            "norm_b": jnp.zeros((C0,), jnp.float32),
            "pos_emb": nrm(next(keys), (Hp * Wp, C0)),
        },
        "stages": [],
    }
    num_stages = len(cfg["enc_depths"])
    Hi, Wi = Hp, Wp
    for i in range(num_stages):
        dim = C0 * 2 ** i
        nH = cfg["enc_heads"][i]
        hid = dim * cfg["mlp_ratio"]
        blocks = []
        for d in range(cfg["enc_depths"][i]):
            shift = _block_shift(Hi, Wi, ws, d)
            rpb_table = nrm(next(keys), ((2 * ws - 1) ** 2, nH))
            attn_bias, win_id, in_id = _build_attn_bias(rpb_table, Hi, Wi, ws, shift)
            blocks.append({
                "ln1_g": jnp.ones((dim,), jnp.float32),
                "ln1_b": jnp.zeros((dim,), jnp.float32),
                "wq": nrm(next(keys), (dim, dim), jnp.bfloat16),
                "bq": jnp.zeros((dim,), jnp.float32),
                "wk": nrm(next(keys), (dim, dim), jnp.bfloat16),
                "bk": jnp.zeros((dim,), jnp.float32),
                "wv": nrm(next(keys), (dim, dim), jnp.bfloat16),
                "bv": jnp.zeros((dim,), jnp.float32),
                "proj_w": nrm(next(keys), (dim, dim), jnp.bfloat16),
                "proj_b": jnp.zeros((dim,), jnp.float32),
                "rpb_table": rpb_table,
                "attn_bias": attn_bias,     # (nH, L, L) precomputed at init
                "win_id": win_id,           # (L,) raster token -> window id
                "in_id": in_id,             # (L,) raster token -> in-window id
                "ln2_g": jnp.ones((dim,), jnp.float32),
                "ln2_b": jnp.zeros((dim,), jnp.float32),
                "fc1_w": nrm(next(keys), (dim, hid), jnp.bfloat16),
                "fc1_b": jnp.zeros((hid,), jnp.float32),
                "fc2_w": nrm(next(keys), (hid, dim), jnp.bfloat16),
                "fc2_b": jnp.zeros((dim,), jnp.float32),
            })
        stage = {"blocks": blocks,
                 "lead_emb": nrm(next(keys), (cfg["max_t"], dim))}
        if i < num_stages - 1:
            stage["downsample"] = {
                "norm_g": jnp.ones((4 * dim,), jnp.float32),
                "norm_b": jnp.zeros((4 * dim,), jnp.float32),
                "red_w": nrm(next(keys), (4 * dim, 2 * dim), jnp.bfloat16),
            }
        params["stages"].append(stage)
        if i < num_stages - 1:
            Hi, Wi = Hi // 2, Wi // 2

    nf = C0 * 2 ** (num_stages - 1)
    params["norm_g"] = jnp.ones((nf,), jnp.float32)
    params["norm_b"] = jnp.zeros((nf,), jnp.float32)
    return params


def encoder_forward(params, x, lead_time, land_masks, land_masks_shifted):
    cfg = CFG
    eps = cfg["layer_norm_eps"]
    P, ws = cfg["patch_size"], cfg["window_size"]
    B, Cin, H, W = x.shape
    Hp, Wp = H // P, W // P

    # --- PatchEmbed: conv-as-matmul + patch_norm + abs pos emb (fused kernel) ---
    pe = params["patch_embed"]
    xp = (x.reshape(B, Cin, Hp, P, Wp, P)
            .transpose(0, 2, 4, 1, 3, 5)
            .reshape(B, Hp * Wp, Cin * P * P))
    xtok = patch_embed(xp, pe, eps)           # (B, L0, C0), raster (h, w) order
    # pos_drop: p = 0.0 -> identity.

    hidden_before = ()
    Hi, Wi = Hp, Wp
    num_stages = len(cfg["enc_depths"])
    for i in range(num_stages):
        sp = params["stages"][i]
        C = xtok.shape[-1]
        # TODO(synk): lead-time conditioning of the original stage is unspecified;
        # assumed to be an additive per-stage embedding.
        xtok = xtok + sp["lead_emb"][lead_time][:, None, :]
        for d in range(cfg["enc_depths"][i]):
            blk = sp["blocks"][d]
            shift = _block_shift(Hi, Wi, ws, d)
            land = land_masks_shifted[i] if shift > 0 else land_masks[i]
            # Scatter the (nW, N, N) land mask to per-token-pair (L, L) form.
            land_LL = land[blk["win_id"][:, None], blk["in_id"][:, None],
                           blk["in_id"][None, :]].astype(jnp.float32)
            xtok = swin_block(xtok, land_LL, blk, cfg["enc_heads"][i], eps)
        x_before = xtok.reshape(B, Hi, Wi, C)
        hidden_before += (x_before,)
        if i < num_stages - 1:
            xtok = patch_merging(x_before, sp["downsample"], eps)  # (B, L/4, 2C)
            Hi, Wi = Hi // 2, Wi // 2

    out = layernorm(xtok, params["norm_g"], params["norm_b"], eps)
    out = out.reshape(B, Hi, Wi, -1)
    return out, hidden_before


# ----------------------------------------------------------------------------
if __name__ == "__main__":
    key = jax.random.PRNGKey(0)
    B, Cin, H, W = 2, 4, 16, 16
    params = init_params(key, CFG, Cin)

    kx, _ = jax.random.split(key)
    x = jax.random.normal(kx, (B, Cin, H, W), jnp.float32)
    lead_time = jnp.zeros((B,), jnp.int32)

    # Land masks consumed as additive per-window attention biases (0 == no mask).
    P, ws = CFG["patch_size"], CFG["window_size"]
    Hp = H // P
    land_masks, land_masks_shifted = [], []
    for i in range(len(CFG["enc_depths"])):
        Hi = Hp // (2 ** i)
        nW = (Hi // ws) * (Hi // ws)
        N = ws * ws
        land_masks.append(jnp.zeros((nW, N, N), jnp.float32))
        land_masks_shifted.append(jnp.zeros((nW, N, N), jnp.float32))

    fwd = jax.jit(encoder_forward)
    out, hiddens = fwd(params, x, lead_time, tuple(land_masks),
                       tuple(land_masks_shifted))
    jax.block_until_ready(out)
    jax.block_until_ready(hiddens)

    assert out.shape == (B, 2, 2, 64)
    assert hiddens[0].shape == (B, 4, 4, 32)
    assert hiddens[1].shape == (B, 2, 2, 64)
    assert bool(jnp.all(jnp.isfinite(out)))
    print("KERNEL_OK")
</pallas_src>

<mosaic_0001>
module attributes {stable_mosaic.version = 11 : i64} {
  func.func @_patch_embed_kernel(%arg0: i32, %arg1: i32, %arg2: memref<1x8x64xf32, #tpu.memory_space<vmem>>, %arg3: memref<64x32xbf16, #tpu.memory_space<vmem>>, %arg4: memref<1x32xf32, #tpu.memory_space<vmem>>, %arg5: memref<1x32xf32, #tpu.memory_space<vmem>>, %arg6: memref<1x32xf32, #tpu.memory_space<vmem>>, %arg7: memref<8x32xf32, #tpu.memory_space<vmem>>, %arg8: memref<1x8x32xf32, #tpu.memory_space<vmem>>) attributes {dimension_semantics = [#tpu.dimension_semantics<parallel>, #tpu.dimension_semantics<parallel>], iteration_bounds = array<i64: 2, 2>, scalar_prefetch = 0 : i64, scratch_operands = 0 : i64, tpu.core_type = #tpu.core_type<tc>, window_params = [{transform_indices = @transform_0, window_bounds = array<i64: 1, 8, 64>}, {pipeline_mode = #tpu.pipeline_mode<synchronous>, transform_indices = @transform_1, window_bounds = array<i64: 64, 32>}, {pipeline_mode = #tpu.pipeline_mode<synchronous>, transform_indices = @transform_2, window_bounds = array<i64: 1, 32>}, {pipeline_mode = #tpu.pipeline_mode<synchronous>, transform_indices = @transform_3, window_bounds = array<i64: 1, 32>}, {pipeline_mode = #tpu.pipeline_mode<synchronous>, transform_indices = @transform_4, window_bounds = array<i64: 1, 32>}, {transform_indices = @transform_5, window_bounds = array<i64: 8, 32>}, {transform_indices = @transform_6, window_bounds = array<i64: 1, 8, 32>}]} {
    %c0 = arith.constant 0 : index
    %c0_0 = arith.constant 0 : index
    %c0_1 = arith.constant 0 : index
    %0 = vector.load %arg2[%c0, %c0_0, %c0_1] : memref<1x8x64xf32, #tpu.memory_space<vmem>>, vector<1x8x64xf32>
    %1 = vector.shape_cast %0 : vector<1x8x64xf32> to vector<8x64xf32>
    %2 = arith.truncf %1 : vector<8x64xf32> to vector<8x64xbf16>
    %c0_2 = arith.constant 0 : index
    %c0_3 = arith.constant 0 : index
    %3 = vector.load %arg3[%c0_2, %c0_3] : memref<64x32xbf16, #tpu.memory_space<vmem>>, vector<64x32xbf16>
    %cst = arith.constant dense<0.000000e+00> : vector<8x32xf32>
    %4 = tpu.matmul %2, %3, %cst {dimension_numbers = #tpu.dot_dimension_numbers<[1], [0], [0], [1], [0, 0, 1, 1], [], []>} : vector<8x64xbf16>, vector<64x32xbf16>, vector<8x32xf32> -> vector<8x32xf32>
    %c0_4 = arith.constant 0 : index
    %c0_5 = arith.constant 0 : index
    %5 = vector.load %arg4[%c0_4, %c0_5] : memref<1x32xf32, #tpu.memory_space<vmem>>, vector<1x32xf32>
    %6 = vector.broadcast %5 : vector<1x32xf32> to vector<8x32xf32>
    %7 = arith.addf %4, %6 : vector<8x32xf32>
    %c0_6 = arith.constant 0 : index
    %c0_7 = arith.constant 0 : index
    %8 = vector.load %arg5[%c0_6, %c0_7] : memref<1x32xf32, #tpu.memory_space<vmem>>, vector<1x32xf32>
    %c0_8 = arith.constant 0 : index
    %c0_9 = arith.constant 0 : index
    %9 = vector.load %arg6[%c0_8, %c0_9] : memref<1x32xf32, #tpu.memory_space<vmem>>, vector<1x32xf32>
    %cst_10 = arith.constant dense<0.000000e+00> : vector<8xf32>
    %10 = vector.multi_reduction <add>, %7, %cst_10 [1] : vector<8x32xf32> to vector<8xf32>
    %11 = vector.shape_cast %10 : vector<8xf32> to vector<8x1xf32>
    %cst_11 = arith.constant 3.200000e+01 : f32
    %12 = vector.broadcast %cst_11 : f32 to vector<8x1xf32>
    %13 = arith.divf %11, %12 : vector<8x1xf32>
    %14 = vector.broadcast %13 : vector<8x1xf32> to vector<8x32xf32>
    %15 = arith.subf %7, %14 : vector<8x32xf32>
    %16 = arith.mulf %15, %15 : vector<8x32xf32>
    %cst_12 = arith.constant dense<0.000000e+00> : vector<8xf32>
    %17 = vector.multi_reduction <add>, %16, %cst_12 [1] : vector<8x32xf32> to vector<8xf32>
    %18 = vector.shape_cast %17 : vector<8xf32> to vector<8x1xf32>
    %cst_13 = arith.constant 3.200000e+01 : f32
    %19 = vector.broadcast %cst_13 : f32 to vector<8x1xf32>
    %20 = arith.divf %18, %19 : vector<8x1xf32>
    %cst_14 = arith.constant 9.99999974E-6 : f32
    %21 = vector.broadcast %cst_14 : f32 to vector<8x1xf32>
    %22 = arith.addf %20, %21 : vector<8x1xf32>
    %23 = math.rsqrt %22 : vector<8x1xf32>
    %24 = vector.broadcast %23 : vector<8x1xf32> to vector<8x32xf32>
    %25 = arith.mulf %15, %24 : vector<8x32xf32>
    %26 = vector.broadcast %8 : vector<1x32xf32> to vector<8x32xf32>
    %27 = arith.mulf %25, %26 : vector<8x32xf32>
    %28 = vector.broadcast %9 : vector<1x32xf32> to vector<8x32xf32>
    %29 = arith.addf %27, %28 : vector<8x32xf32>
    %c0_15 = arith.constant 0 : index
    %c0_16 = arith.constant 0 : index
    %30 = vector.load %arg7[%c0_15, %c0_16] : memref<8x32xf32, #tpu.memory_space<vmem>>, vector<8x32xf32>
    %31 = arith.addf %29, %30 : vector<8x32xf32>
    %c0_17 = arith.constant 0 : index
    %c0_18 = arith.constant 0 : index
    %c0_19 = arith.constant 0 : index
    %32 = vector.load %arg8[%c0_17, %c0_18, %c0_19] : memref<1x8x32xf32, #tpu.memory_space<vmem>>, vector<1x8x32xf32>
    %33 = vector.shape_cast %32 : vector<1x8x32xf32> to vector<8x32xf32>
    %34 = vector.shape_cast %31 : vector<8x32xf32> to vector<1x8x32xf32>
    tpu.vector_store %arg8[%c0_17, %c0_18, %c0_19], %34 {strides = array<i32>} : memref<1x8x32xf32, #tpu.memory_space<vmem>>, vector<1x8x32xf32>,
    return
  }
  func.func @transform_0(%arg0: i32, %arg1: i32) -> (i32, i32, i32) {
    %c0_i32 = arith.constant 0 : i32
    %c0_i32_0 = arith.constant 0 : i32
    return %arg0, %arg1, %c0_i32 : i32, i32, i32
  }
  func.func @transform_1(%arg0: i32, %arg1: i32) -> (i32, i32) {
    %c0_i32 = arith.constant 0 : i32
    %c0_i32_0 = arith.constant 0 : i32
    %c0_i32_1 = arith.constant 0 : i32
    return %c0_i32, %c0_i32_0 : i32, i32
  }
  func.func @transform_2(%arg0: i32, %arg1: i32) -> (i32, i32) {
    %c0_i32 = arith.constant 0 : i32
    %c0_i32_0 = arith.constant 0 : i32
    %c0_i32_1 = arith.constant 0 : i32
    return %c0_i32, %c0_i32_0 : i32, i32
  }
  func.func @transform_3(%arg0: i32, %arg1: i32) -> (i32, i32) {
    %c0_i32 = arith.constant 0 : i32
    %c0_i32_0 = arith.constant 0 : i32
    %c0_i32_1 = arith.constant 0 : i32
    return %c0_i32, %c0_i32_0 : i32, i32
  }
  func.func @transform_4(%arg0: i32, %arg1: i32) -> (i32, i32) {
    %c0_i32 = arith.constant 0 : i32
    %c0_i32_0 = arith.constant 0 : i32
    %c0_i32_1 = arith.constant 0 : i32
    return %c0_i32, %c0_i32_0 : i32, i32
  }
  func.func @transform_5(%arg0: i32, %arg1: i32) -> (i32, i32) {
    %c0_i32 = arith.constant 0 : i32
    %c0_i32_0 = arith.constant 0 : i32
    return %arg1, %c0_i32 : i32, i32
  }
  func.func @transform_6(%arg0: i32, %arg1: i32) -> (i32, i32, i32) {
    %c0_i32 = arith.constant 0 : i32
    %c0_i32_0 = arith.constant 0 : i32
    return %arg0, %arg1, %c0_i32 : i32, i32, i32
  }
}

module attributes {stable_mosaic.version = 11 : i64} {
  func.func @_swin_block_kernel(%arg0: i32, %arg1: i32, %arg2: memref<1x8x32xf32, #tpu.memory_space<vmem>>, %arg3: memref<1x16x32xf32, #tpu.memory_space<vmem>>, %arg4: memref<2x8x16xf32, #tpu.memory_space<vmem>>, %arg5: memref<8x16xf32, #tpu.memory_space<vmem>>, %arg6: memref<1x32xf32, #tpu.memory_space<vmem>>, %arg7: memref<1x32xf32, #tpu.memory_space<vmem>>, %arg8: memref<32x32xbf16, #tpu.memory_space<vmem>>, %arg9: memref<1x32xf32, #tpu.memory_space<vmem>>, %arg10: memref<32x32xbf16, #tpu.memory_space<vmem>>, %arg11: memref<1x32xf32, #tpu.memory_space<vmem>>, %arg12: memref<32x32xbf16, #tpu.memory_space<vmem>>, %arg13: memref<1x32xf32, #tpu.memory_space<vmem>>, %arg14: memref<32x32xbf16, #tpu.memory_space<vmem>>, %arg15: memref<1x32xf32, #tpu.memory_space<vmem>>, %arg16: memref<1x32xf32, #tpu.memory_space<vmem>>, %arg17: memref<1x32xf32, #tpu.memory_space<vmem>>, %arg18: memref<32x128xbf16, #tpu.memory_space<vmem>>, %arg19: memref<1x128xf32, #tpu.memory_space<vmem>>, %arg20: memref<128x32xbf16, #tpu.memory_space<vmem>>, %arg21: memref<1x32xf32, #tpu.memory_space<vmem>>, %arg22: memref<1x8x32xf32, #tpu.memory_space<vmem>>) attributes {dimension_semantics = [#tpu.dimension_semantics<parallel>, #tpu.dimension_semantics<parallel>], iteration_bounds = array<i64: 2, 2>, scalar_prefetch = 0 : i64, scratch_operands = 0 : i64, tpu.core_type = #tpu.core_type<tc>, window_params = [{transform_indices = @transform_0, window_bounds = array<i64: 1, 8, 32>}, {transform_indices = @transform_1, window_bounds = array<i64: 1, 16, 32>}, {transform_indices = @transform_2, window_bounds = array<i64: 2, 8, 16>}, {transform_indices = @transform_3, window_bounds = array<i64: 8, 16>}, {pipeline_mode = #tpu.pipeline_mode<synchronous>, transform_indices = @transform_4, window_bounds = array<i64: 1, 32>}, {pipeline_mode = #tpu.pipeline_mode<synchronous>, transform_indices = @transform_5, window_bounds = array<i64: 1, 32>}, {pipeline_mode = #tpu.pipeline_mode<synchronous>, transform_indices = @transform_6, window_bounds = array<i64: 32, 32>}, {pipeline_mode = #tpu.pipeline_mode<synchronous>, transform_indices = @transform_7, window_bounds = array<i64: 1, 32>}, {pipeline_mode = #tpu.pipeline_mode<synchronous>, transform_indices = @transform_8, window_bounds = array<i64: 32, 32>}, {pipeline_mode = #tpu.pipeline_mode<synchronous>, transform_indices = @transform_9, window_bounds = array<i64: 1, 32>}, {pipeline_mode = #tpu.pipeline_mode<synchronous>, transform_indices = @transform_10, window_bounds = array<i64: 32, 32>}, {pipeline_mode = #tpu.pipeline_mode<synchronous>, transform_indices = @transform_11, window_bounds = array<i64: 1, 32>}, {pipeline_mode = #tpu.pipeline_mode<synchronous>, transform_indices = @transform_12, window_bounds = array<i64: 32, 32>}, {pipeline_mode = #tpu.pipeline_mode<synchronous>, transform_indices = @transform_13, window_bounds = array<i64: 1, 32>}, {pipeline_mode = #tpu.pipeline_mode<synchronous>, transform_indices = @transform_14, window_bounds = array<i64: 1, 32>}, {pipeline_mode = #tpu.pipeline_mode<synchronous>, transform_indices = @transform_15, window_bounds = array<i64: 1, 32>}, {pipeline_mode = #tpu.pipeline_mode<synchronous>, transform_indices = @transform_16, window_bounds = array<i64: 32, 128>}, {pipeline_mode = #tpu.pipeline_mode<synchronous>, transform_indices = @transform_17, window_bounds = array<i64: 1, 128>}, {pipeline_mode = #tpu.pipeline_mode<synchronous>, transform_indices = @transform_18, window_bounds = array<i64: 128, 32>}, {pipeline_mode = #tpu.pipeline_mode<synchronous>, transform_indices = @transform_19, window_bounds = array<i64: 1, 32>}, {transform_indices = @transform_20, window_bounds = array<i64: 1, 8, 32>}]} {
    %c0 = arith.constant 0 : index
    %c0_0 = arith.constant 0 : index
    %c0_1 = arith.constant 0 : index
    %0 = vector.load %arg2[%c0, %c0_0, %c0_1] : memref<1x8x32xf32, #tpu.memory_space<vmem>>, vector<1x8x32xf32>
    %1 = vector.shape_cast %0 : vector<1x8x32xf32> to vector<8x32xf32>
    %c0_2 = arith.constant 0 : index
    %c0_3 = arith.constant 0 : index
    %c0_4 = arith.constant 0 : index
    %2 = vector.load %arg3[%c0_2, %c0_3, %c0_4] : memref<1x16x32xf32, #tpu.memory_space<vmem>>, vector<1x16x32xf32>
    %3 = vector.shape_cast %2 : vector<1x16x32xf32> to vector<16x32xf32>
    %c0_5 = arith.constant 0 : index
    %c0_6 = arith.constant 0 : index
    %4 = vector.load %arg6[%c0_5, %c0_6] : memref<1x32xf32, #tpu.memory_space<vmem>>, vector<1x32xf32>
    %c0_7 = arith.constant 0 : index
    %c0_8 = arith.constant 0 : index
    %5 = vector.load %arg7[%c0_7, %c0_8] : memref<1x32xf32, #tpu.memory_space<vmem>>, vector<1x32xf32>
    %cst = arith.constant dense<0.000000e+00> : vector<8xf32>
    %6 = vector.multi_reduction <add>, %1, %cst [1] : vector<8x32xf32> to vector<8xf32>
    %7 = vector.shape_cast %6 : vector<8xf32> to vector<8x1xf32>
    %cst_9 = arith.constant 3.200000e+01 : f32
    %8 = vector.broadcast %cst_9 : f32 to vector<8x1xf32>
    %9 = arith.divf %7, %8 : vector<8x1xf32>
    %10 = vector.broadcast %9 : vector<8x1xf32> to vector<8x32xf32>
    %11 = arith.subf %1, %10 : vector<8x32xf32>
    %12 = arith.mulf %11, %11 : vector<8x32xf32>
    %cst_10 = arith.constant dense<0.000000e+00> : vector<8xf32>
    %13 = vector.multi_reduction <add>, %12, %cst_10 [1] : vector<8x32xf32> to vector<8xf32>
    %14 = vector.shape_cast %13 : vector<8xf32> to vector<8x1xf32>
    %cst_11 = arith.constant 3.200000e+01 : f32
    %15 = vector.broadcast %cst_11 : f32 to vector<8x1xf32>
    %16 = arith.divf %14, %15 : vector<8x1xf32>
    %cst_12 = arith.constant 9.99999974E-6 : f32
    %17 = vector.broadcast %cst_12 : f32 to vector<8x1xf32>
    %18 = arith.addf %16, %17 : vector<8x1xf32>
    %19 = math.rsqrt %18 : vector<8x1xf32>
    %20 = vector.broadcast %19 : vector<8x1xf32> to vector<8x32xf32>
    %21 = arith.mulf %11, %20 : vector<8x32xf32>
    %22 = vector.broadcast %4 : vector<1x32xf32> to vector<8x32xf32>
    %23 = arith.mulf %21, %22 : vector<8x32xf32>
    %24 = vector.broadcast %5 : vector<1x32xf32> to vector<8x32xf32>
    %25 = arith.addf %23, %24 : vector<8x32xf32>
    %26 = arith.truncf %25 : vector<8x32xf32> to vector<8x32xbf16>
    %c0_13 = arith.constant 0 : index
    %c0_14 = arith.constant 0 : index
    %27 = vector.load %arg6[%c0_13, %c0_14] : memref<1x32xf32, #tpu.memory_space<vmem>>, vector<1x32xf32>
    %c0_15 = arith.constant 0 : index
    %c0_16 = arith.constant 0 : index
    %28 = vector.load %arg7[%c0_15, %c0_16] : memref<1x32xf32, #tpu.memory_space<vmem>>, vector<1x32xf32>
    %cst_17 = arith.constant dense<0.000000e+00> : vector<16xf32>
    %29 = vector.multi_reduction <add>, %3, %cst_17 [1] : vector<16x32xf32> to vector<16xf32>
    %30 = vector.shape_cast %29 : vector<16xf32> to vector<16x1xf32>
    %cst_18 = arith.constant 3.200000e+01 : f32
    %31 = vector.broadcast %cst_18 : f32 to vector<16x1xf32>
    %32 = arith.divf %30, %31 : vector<16x1xf32>
    %33 = vector.broadcast %32 : vector<16x1xf32> to vector<16x32xf32>
    %34 = arith.subf %3, %33 : vector<16x32xf32>
    %35 = arith.mulf %34, %34 : vector<16x32xf32>
    %cst_19 = arith.constant dense<0.000000e+00> : vector<16xf32>
    %36 = vector.multi_reduction <add>, %35, %cst_19 [1] : vector<16x32xf32> to vector<16xf32>
    %37 = vector.shape_cast %36 : vector<16xf32> to vector<16x1xf32>
    %cst_20 = arith.constant 3.200000e+01 : f32
    %38 = vector.broadcast %cst_20 : f32 to vector<16x1xf32>
    %39 = arith.divf %37, %38 : vector<16x1xf32>
    %cst_21 = arith.constant 9.99999974E-6 : f32
    %40 = vector.broadcast %cst_21 : f32 to vector<16x1xf32>
    %41 = arith.addf %39, %40 : vector<16x1xf32>
    %42 = math.rsqrt %41 : vector<16x1xf32>
    %43 = vector.broadcast %42 : vector<16x1xf32> to vector<16x32xf32>
    %44 = arith.mulf %34, %43 : vector<16x32xf32>
    %45 = vector.broadcast %27 : vector<1x32xf32> to vector<16x32xf32>
    %46 = arith.mulf %44, %45 : vector<16x32xf32>
    %47 = vector.broadcast %28 : vector<1x32xf32> to vector<16x32xf32>
    %48 = arith.addf %46, %47 : vector<16x32xf32>
    %49 = arith.truncf %48 : vector<16x32xf32> to vector<16x32xbf16>
    %c0_22 = arith.constant 0 : index
    %c0_23 = arith.constant 0 : index
    %50 = vector.load %arg8[%c0_22, %c0_23] : memref<32x32xbf16, #tpu.memory_space<vmem>>, vector<32x32xbf16>
    %cst_24 = arith.constant dense<0.000000e+00> : vector<8x32xf32>
    %51 = tpu.matmul %26, %50, %cst_24 {dimension_numbers = #tpu.dot_dimension_numbers<[1], [0], [0], [1], [0, 0, 1, 1], [], []>} : vector<8x32xbf16>, vector<32x32xbf16>, vector<8x32xf32> -> vector<8x32xf32>
    %c0_25 = arith.constant 0 : index
    %c0_26 = arith.constant 0 : index
    %52 = vector.load %arg9[%c0_25, %c0_26] : memref<1x32xf32, #tpu.memory_space<vmem>>, vector<1x32xf32>
    %53 = vector.broadcast %52 : vector<1x32xf32> to vector<8x32xf32>
    %54 = arith.addf %51, %53 : vector<8x32xf32>
    %c0_27 = arith.constant 0 : index
    %c0_28 = arith.constant 0 : index
    %55 = vector.load %arg10[%c0_27, %c0_28] : memref<32x32xbf16, #tpu.memory_space<vmem>>, vector<32x32xbf16>
    %cst_29 = arith.constant dense<0.000000e+00> : vector<16x32xf32>
    %56 = tpu.matmul %49, %55, %cst_29 {dimension_numbers = #tpu.dot_dimension_numbers<[1], [0], [0], [1], [0, 0, 1, 1], [], []>} : vector<16x32xbf16>, vector<32x32xbf16>, vector<16x32xf32> -> vector<16x32xf32>
    %c0_30 = arith.constant 0 : index
    %c0_31 = arith.constant 0 : index
    %57 = vector.load %arg11[%c0_30, %c0_31] : memref<1x32xf32, #tpu.memory_space<vmem>>, vector<1x32xf32>
    %58 = vector.broadcast %57 : vector<1x32xf32> to vector<16x32xf32>
    %59 = arith.addf %56, %58 : vector<16x32xf32>
    %c0_32 = arith.constant 0 : index
    %c0_33 = arith.constant 0 : index
    %60 = vector.load %arg12[%c0_32, %c0_33] : memref<32x32xbf16, #tpu.memory_space<vmem>>, vector<32x32xbf16>
    %cst_34 = arith.constant dense<0.000000e+00> : vector<16x32xf32>
    %61 = tpu.matmul %49, %60, %cst_34 {dimension_numbers = #tpu.dot_dimension_numbers<[1], [0], [0], [1], [0, 0, 1, 1], [], []>} : vector<16x32xbf16>, vector<32x32xbf16>, vector<16x32xf32> -> vector<16x32xf32>
    %c0_35 = arith.constant 0 : index
    %c0_36 = arith.constant 0 : index
    %62 = vector.load %arg13[%c0_35, %c0_36] : memref<1x32xf32, #tpu.memory_space<vmem>>, vector<1x32xf32>
    %63 = vector.broadcast %62 : vector<1x32xf32> to vector<16x32xf32>
    %64 = arith.addf %61, %63 : vector<16x32xf32>
    %cst_37 = arith.constant 2.500000e-01 : f32
    %65 = vector.broadcast %cst_37 : f32 to vector<8x32xf32>
    %66 = arith.mulf %54, %65 : vector<8x32xf32>
    %67 = vector.extract_strided_slice %66 {offsets = [0, 0], sizes = [8, 16], strides = [1, 1]} : vector<8x32xf32> to vector<8x16xf32>
    %68 = arith.truncf %67 : vector<8x16xf32> to vector<8x16xbf16>
    %69 = vector.extract_strided_slice %66 {offsets = [0, 16], sizes = [8, 16], strides = [1, 1]} : vector<8x32xf32> to vector<8x16xf32>
    %70 = arith.truncf %69 : vector<8x16xf32> to vector<8x16xbf16>
    %71 = vector.shape_cast %68 : vector<8x16xbf16> to vector<1x8x16xbf16>
    %72 = vector.shape_cast %70 : vector<8x16xbf16> to vector<1x8x16xbf16>
    %73 = tpu.concatenate %71, %72 in 0 : vector<1x8x16xbf16>, vector<1x8x16xbf16> -> vector<2x8x16xbf16>
    %74 = vector.extract_strided_slice %59 {offsets = [0, 0], sizes = [16, 16], strides = [1, 1]} : vector<16x32xf32> to vector<16x16xf32>
    %75 = arith.truncf %74 : vector<16x16xf32> to vector<16x16xbf16>
    %76 = vector.extract_strided_slice %59 {offsets = [0, 16], sizes = [16, 16], strides = [1, 1]} : vector<16x32xf32> to vector<16x16xf32>
    %77 = arith.truncf %76 : vector<16x16xf32> to vector<16x16xbf16>
    %78 = vector.shape_cast %75 : vector<16x16xbf16> to vector<1x16x16xbf16>
    %79 = vector.shape_cast %77 : vector<16x16xbf16> to vector<1x16x16xbf16>
    %80 = tpu.concatenate %78, %79 in 0 : vector<1x16x16xbf16>, vector<1x16x16xbf16> -> vector<2x16x16xbf16>
    %81 = vector.extract_strided_slice %64 {offsets = [0, 0], sizes = [16, 16], strides = [1, 1]} : vector<16x32xf32> to vector<16x16xf32>
    %82 = arith.truncf %81 : vector<16x16xf32> to vector<16x16xbf16>
    %83 = vector.extract_strided_slice %64 {offsets = [0, 16], sizes = [16, 16], strides = [1, 1]} : vector<16x32xf32> to vector<16x16xf32>
    %84 = arith.truncf %83 : vector<16x16xf32> to vector<16x16xbf16>
    %85 = vector.shape_cast %82 : vector<16x16xbf16> to vector<1x16x16xbf16>
    %86 = vector.shape_cast %84 : vector<16x16xbf16> to vector<1x16x16xbf16>
    %87 = tpu.concatenate %85, %86 in 0 : vector<1x16x16xbf16>, vector<1x16x16xbf16> -> vector<2x16x16xbf16>
    "tpu.trace_start"() <{level = 10 : i32, message = "hqd,hkd->hqk"}> : () -> ()
    %cst_38 = arith.constant dense<0.000000e+00> : vector<2x8x16xf32>
    %88 = tpu.matmul %73, %80, %cst_38 {dimension_numbers = #tpu.dot_dimension_numbers<[2], [2], [1], [1], [0, 0, 0, 1, 1, 1], [0], [0]>} : vector<2x8x16xbf16>, vector<2x16x16xbf16>, vector<2x8x16xf32> -> vector<2x8x16xf32>
    "tpu.trace_stop"() : () -> ()
    %c0_39 = arith.constant 0 : index
    %c0_40 = arith.constant 0 : index
    %c0_41 = arith.constant 0 : index
    %89 = vector.load %arg4[%c0_39, %c0_40, %c0_41] : memref<2x8x16xf32, #tpu.memory_space<vmem>>, vector<2x8x16xf32>
    %90 = arith.addf %88, %89 : vector<2x8x16xf32>
    %c0_42 = arith.constant 0 : index
    %c0_43 = arith.constant 0 : index
    %91 = vector.load %arg5[%c0_42, %c0_43] : memref<8x16xf32, #tpu.memory_space<vmem>>, vector<8x16xf32>
    %92 = vector.shape_cast %91 : vector<8x16xf32> to vector<1x8x16xf32>
    %93 = vector.broadcast %92 : vector<1x8x16xf32> to vector<2x8x16xf32>
    %94 = arith.addf %90, %93 : vector<2x8x16xf32>
    %cst_44 = arith.constant dense<0xFF800000> : vector<2x8xf32>
    %95 = vector.multi_reduction <maximumf>, %94, %cst_44 [2] : vector<2x8x16xf32> to vector<2x8xf32>
    %96 = vector.shape_cast %95 : vector<2x8xf32> to vector<2x8x1xf32>
    %97 = vector.broadcast %96 : vector<2x8x1xf32> to vector<2x8x16xf32>
    %98 = arith.subf %94, %97 : vector<2x8x16xf32>
    %99 = math.exp %98 : vector<2x8x16xf32>
    %cst_45 = arith.constant dense<0.000000e+00> : vector<2x8xf32>
    %100 = vector.multi_reduction <add>, %99, %cst_45 [2] : vector<2x8x16xf32> to vector<2x8xf32>
    %101 = vector.shape_cast %100 : vector<2x8xf32> to vector<2x8x1xf32>
    %102 = tpu.reciprocal %101 {approx = true} : vector<2x8x1xf32> -> vector<2x8x1xf32>
    %103 = vector.broadcast %102 : vector<2x8x1xf32> to vector<2x8x16xf32>
    %104 = arith.mulf %99, %103 : vector<2x8x16xf32>
    %105 = arith.truncf %104 : vector<2x8x16xf32> to vector<2x8x16xbf16>
    "tpu.trace_start"() <{level = 10 : i32, message = "hqk,hkd->hqd"}> : () -> ()
    %cst_46 = arith.constant dense<0.000000e+00> : vector<2x8x16xf32>
    %106 = tpu.matmul %105, %87, %cst_46 {dimension_numbers = #tpu.dot_dimension_numbers<[2], [1], [1], [2], [0, 0, 0, 1, 1, 2], [0], [0]>} : vector<2x8x16xbf16>, vector<2x16x16xbf16>, vector<2x8x16xf32> -> vector<2x8x16xf32>
    "tpu.trace_stop"() : () -> ()
    %107 = vector.extract_strided_slice %106 {offsets = [0, 0, 0], sizes = [1, 8, 16], strides = [1, 1, 1]} : vector<2x8x16xf32> to vector<1x8x16xf32>
    %108 = vector.shape_cast %107 : vector<1x8x16xf32> to vector<8x16xf32>
    %109 = vector.extract_strided_slice %106 {offsets = [1, 0, 0], sizes = [1, 8, 16], strides = [1, 1, 1]} : vector<2x8x16xf32> to vector<1x8x16xf32>
    %110 = vector.shape_cast %109 : vector<1x8x16xf32> to vector<8x16xf32>
    %111 = tpu.concatenate %108, %110 in 1 : vector<8x16xf32>, vector<8x16xf32> -> vector<8x32xf32>
    %112 = arith.truncf %111 : vector<8x32xf32> to vector<8x32xbf16>
    %c0_47 = arith.constant 0 : index
    %c0_48 = arith.constant 0 : index
    %113 = vector.load %arg14[%c0_47, %c0_48] : memref<32x32xbf16, #tpu.memory_space<vmem>>, vector<32x32xbf16>
    %cst_49 = arith.constant dense<0.000000e+00> : vector<8x32xf32>
    %114 = tpu.matmul %112, %113, %cst_49 {dimension_numbers = #tpu.dot_dimension_numbers<[1], [0], [0], [1], [0, 0, 1, 1], [], []>} : vector<8x32xbf16>, vector<32x32xbf16>, vector<8x32xf32> -> vector<8x32xf32>
    %c0_50 = arith.constant 0 : index
    %c0_51 = arith.constant 0 : index
    %115 = vector.load %arg15[%c0_50, %c0_51] : memref<1x32xf32, #tpu.memory_space<vmem>>, vector<1x32xf32>
    %116 = vector.broadcast %115 : vector<1x32xf32> to vector<8x32xf32>
    %117 = arith.addf %114, %116 : vector<8x32xf32>
    %118 = arith.addf %1, %117 : vector<8x32xf32>
    %c0_52 = arith.constant 0 : index
    %c0_53 = arith.constant 0 : index
    %119 = vector.load %arg16[%c0_52, %c0_53] : memref<1x32xf32, #tpu.memory_space<vmem>>, vector<1x32xf32>
    %c0_54 = arith.constant 0 : index
    %c0_55 = arith.constant 0 : index
    %120 = vector.load %arg17[%c0_54, %c0_55] : memref<1x32xf32, #tpu.memory_space<vmem>>, vector<1x32xf32>
    %cst_56 = arith.constant dense<0.000000e+00> : vector<8xf32>
    %121 = vector.multi_reduction <add>, %118, %cst_56 [1] : vector<8x32xf32> to vector<8xf32>
    %122 = vector.shape_cast %121 : vector<8xf32> to vector<8x1xf32>
    %cst_57 = arith.constant 3.200000e+01 : f32
    %123 = vector.broadcast %cst_57 : f32 to vector<8x1xf32>
    %124 = arith.divf %122, %123 : vector<8x1xf32>
    %125 = vector.broadcast %124 : vector<8x1xf32> to vector<8x32xf32>
    %126 = arith.subf %118, %125 : vector<8x32xf32>
    %127 = arith.mulf %126, %126 : vector<8x32xf32>
    %cst_58 = arith.constant dense<0.000000e+00> : vector<8xf32>
    %128 = vector.multi_reduction <add>, %127, %cst_58 [1] : vector<8x32xf32> to vector<8xf32>
    %129 = vector.shape_cast %128 : vector<8xf32> to vector<8x1xf32>
    %cst_59 = arith.constant 3.200000e+01 : f32
    %130 = vector.broadcast %cst_59 : f32 to vector<8x1xf32>
    %131 = arith.divf %129, %130 : vector<8x1xf32>
    %cst_60 = arith.constant 9.99999974E-6 : f32
    %132 = vector.broadcast %cst_60 : f32 to vector<8x1xf32>
    %133 = arith.addf %131, %132 : vector<8x1xf32>
    %134 = math.rsqrt %133 : vector<8x1xf32>
    %135 = vector.broadcast %134 : vector<8x1xf32> to vector<8x32xf32>
    %136 = arith.mulf %126, %135 : vector<8x32xf32>
    %137 = vector.broadcast %119 : vector<1x32xf32> to vector<8x32xf32>
    %138 = arith.mulf %136, %137 : vector<8x32xf32>
    %139 = vector.broadcast %120 : vector<1x32xf32> to vector<8x32xf32>
    %140 = arith.addf %138, %139 : vector<8x32xf32>
    %141 = arith.truncf %140 : vector<8x32xf32> to vector<8x32xbf16>
    %c0_61 = arith.constant 0 : index
    %c0_62 = arith.constant 0 : index
    %142 = vector.load %arg18[%c0_61, %c0_62] : memref<32x128xbf16, #tpu.memory_space<vmem>>, vector<32x128xbf16>
    %cst_63 = arith.constant dense<0.000000e+00> : vector<8x128xf32>
    %143 = tpu.matmul %141, %142, %cst_63 {dimension_numbers = #tpu.dot_dimension_numbers<[1], [0], [0], [1], [0, 0, 1, 1], [], []>} : vector<8x32xbf16>, vector<32x128xbf16>, vector<8x128xf32> -> vector<8x128xf32>
    %c0_64 = arith.constant 0 : index
    %c0_65 = arith.constant 0 : index
    %144 = vector.load %arg19[%c0_64, %c0_65] : memref<1x128xf32, #tpu.memory_space<vmem>>, vector<1x128xf32>
    %145 = vector.broadcast %144 : vector<1x128xf32> to vector<8x128xf32>
    %146 = arith.addf %143, %145 : vector<8x128xf32>
    %cst_66 = arith.constant 5.000000e-01 : f32
    %147 = vector.broadcast %cst_66 : f32 to vector<8x128xf32>
    %148 = arith.mulf %147, %146 : vector<8x128xf32>
    %cst_67 = arith.constant 0.707106769 : f32
    %149 = vector.broadcast %cst_67 : f32 to vector<8x128xf32>
    %150 = arith.mulf %146, %149 : vector<8x128xf32>
    %151 = math.absf %150 : vector<8x128xf32>
    %cst_68 = arith.constant 0.327591091 : f32
    %152 = vector.broadcast %cst_68 : f32 to vector<8x128xf32>
    %153 = arith.mulf %152, %151 : vector<8x128xf32>
    %cst_69 = arith.constant 1.000000e+00 : f32
    %154 = vector.broadcast %cst_69 : f32 to vector<8x128xf32>
    %155 = arith.addf %154, %153 : vector<8x128xf32>
    %cst_70 = arith.constant 1.000000e+00 : f32
    %156 = vector.broadcast %cst_70 : f32 to vector<8x128xf32>
    %157 = arith.divf %156, %155 : vector<8x128xf32>
    %cst_71 = arith.constant 1.06140542 : f32
    %158 = vector.broadcast %cst_71 : f32 to vector<8x128xf32>
    %159 = arith.mulf %158, %157 : vector<8x128xf32>
    %cst_72 = arith.constant -1.45315206 : f32
    %160 = vector.broadcast %cst_72 : f32 to vector<8x128xf32>
    %161 = arith.addf %159, %160 : vector<8x128xf32>
    %162 = arith.mulf %161, %157 : vector<8x128xf32>
    %cst_73 = arith.constant 1.42141378 : f32
    %163 = vector.broadcast %cst_73 : f32 to vector<8x128xf32>
    %164 = arith.addf %162, %163 : vector<8x128xf32>
    %165 = arith.mulf %164, %157 : vector<8x128xf32>
    %cst_74 = arith.constant -0.284496725 : f32
    %166 = vector.broadcast %cst_74 : f32 to vector<8x128xf32>
    %167 = arith.addf %165, %166 : vector<8x128xf32>
    %168 = arith.mulf %167, %157 : vector<8x128xf32>
    %cst_75 = arith.constant 0.254829586 : f32
    %169 = vector.broadcast %cst_75 : f32 to vector<8x128xf32>
    %170 = arith.addf %168, %169 : vector<8x128xf32>
    %171 = arith.mulf %170, %157 : vector<8x128xf32>
    %cst_76 = arith.constant 0.000000e+00 : f32
    %172 = vector.broadcast %cst_76 : f32 to vector<8x128xf32>
    %173 = arith.subf %172, %151 : vector<8x128xf32>
    %174 = arith.mulf %173, %151 : vector<8x128xf32>
    %175 = math.exp %174 : vector<8x128xf32>
    %176 = arith.mulf %171, %175 : vector<8x128xf32>
    %cst_77 = arith.constant 1.000000e+00 : f32
    %177 = vector.broadcast %cst_77 : f32 to vector<8x128xf32>
    %178 = arith.subf %177, %176 : vector<8x128xf32>
    %cst_78 = arith.constant 0.000000e+00 : f32
    %179 = vector.broadcast %cst_78 : f32 to vector<8x128xf32>
    %180 = arith.cmpf oge, %150, %179 : vector<8x128xf32>
    %cst_79 = arith.constant 0.000000e+00 : f32
    %181 = vector.broadcast %cst_79 : f32 to vector<8x128xf32>
    %182 = arith.subf %181, %178 : vector<8x128xf32>
    %183 = arith.select %180, %178, %182 : vector<8x128xi1>, vector<8x128xf32>
    %cst_80 = arith.constant 1.000000e+00 : f32
    %184 = vector.broadcast %cst_80 : f32 to vector<8x128xf32>
    %185 = arith.addf %184, %183 : vector<8x128xf32>
    %186 = arith.mulf %148, %185 : vector<8x128xf32>
    %187 = arith.truncf %186 : vector<8x128xf32> to vector<8x128xbf16>
    %c0_81 = arith.constant 0 : index
    %c0_82 = arith.constant 0 : index
    %188 = vector.load %arg20[%c0_81, %c0_82] : memref<128x32xbf16, #tpu.memory_space<vmem>>, vector<128x32xbf16>
    %cst_83 = arith.constant dense<0.000000e+00> : vector<8x32xf32>
    %189 = tpu.matmul %187, %188, %cst_83 {dimension_numbers = #tpu.dot_dimension_numbers<[1], [0], [0], [1], [0, 0, 1, 1], [], []>} : vector<8x128xbf16>, vector<128x32xbf16>, vector<8x32xf32> -> vector<8x32xf32>
    %c0_84 = arith.constant 0 : index
    %c0_85 = arith.constant 0 : index
    %190 = vector.load %arg21[%c0_84, %c0_85] : memref<1x32xf32, #tpu.memory_space<vmem>>, vector<1x32xf32>
    %191 = vector.broadcast %190 : vector<1x32xf32> to vector<8x32xf32>
    %192 = arith.addf %189, %191 : vector<8x32xf32>
    %193 = arith.addf %118, %192 : vector<8x32xf32>
    %c0_86 = arith.constant 0 : index
    %c0_87 = arith.constant 0 : index
    %c0_88 = arith.constant 0 : index
    %194 = vector.load %arg22[%c0_86, %c0_87, %c0_88] : memref<1x8x32xf32, #tpu.memory_space<vmem>>, vector<1x8x32xf32>
    %195 = vector.shape_cast %194 : vector<1x8x32xf32> to vector<8x32xf32>
    %196 = vector.shape_cast %193 : vector<8x32xf32> to vector<1x8x32xf32>
    tpu.vector_store %arg22[%c0_86, %c0_87, %c0_88], %196 {strides = array<i32>} : memref<1x8x32xf32, #tpu.memory_space<vmem>>, vector<1x8x32xf32>,
    return
  }
  func.func @transform_0(%arg0: i32, %arg1: i32) -> (i32, i32, i32) {
    %c0_i32 = arith.constant 0 : i32
    %c0_i32_0 = arith.constant 0 : i32
    return %arg0, %arg1, %c0_i32 : i32, i32, i32
  }
  func.func @transform_1(%arg0: i32, %arg1: i32) -> (i32, i32, i32) {
    %c0_i32 = arith.constant 0 : i32
    %c0_i32_0 = arith.constant 0 : i32
    %c0_i32_1 = arith.constant 0 : i32
    return %arg0, %c0_i32, %c0_i32_0 : i32, i32, i32
  }
  func.func @transform_2(%arg0: i32, %arg1: i32) -> (i32, i32, i32) {
    %c0_i32 = arith.constant 0 : i32
    %c0_i32_0 = arith.constant 0 : i32
    %c0_i32_1 = arith.constant 0 : i32
    return %c0_i32, %arg1, %c0_i32_0 : i32, i32, i32
  }
  func.func @transform_3(%arg0: i32, %arg1: i32) -> (i32, i32) {
    %c0_i32 = arith.constant 0 : i32
    %c0_i32_0 = arith.constant 0 : i32
    return %arg1, %c0_i32 : i32, i32
  }
  func.func @transform_4(%arg0: i32, %arg1: i32) -> (i32, i32) {
    %c0_i32 = arith.constant 0 : i32
    %c0_i32_0 = arith.constant 0 : i32
    %c0_i32_1 = arith.constant 0 : i32
    return %c0_i32, %c0_i32_0 : i32, i32
  }
  func.func @transform_5(%arg0: i32, %arg1: i32) -> (i32, i32) {
    %c0_i32 = arith.constant 0 : i32
    %c0_i32_0 = arith.constant 0 : i32
    %c0_i32_1 = arith.constant 0 : i32
    return %c0_i32, %c0_i32_0 : i32, i32
  }
  func.func @transform_6(%arg0: i32, %arg1: i32) -> (i32, i32) {
    %c0_i32 = arith.constant 0 : i32
    %c0_i32_0 = arith.constant 0 : i32
    %c0_i32_1 = arith.constant 0 : i32
    return %c0_i32, %c0_i32_0 : i32, i32
  }
  func.func @transform_7(%arg0: i32, %arg1: i32) -> (i32, i32) {
    %c0_i32 = arith.constant 0 : i32
    %c0_i32_0 = arith.constant 0 : i32
    %c0_i32_1 = arith.constant 0 : i32
    return %c0_i32, %c0_i32_0 : i32, i32
  }
  func.func @transform_8(%arg0: i32, %arg1: i32) -> (i32, i32) {
    %c0_i32 = arith.constant 0 : i32
    %c0_i32_0 = arith.constant 0 : i32
    %c0_i32_1 = arith.constant 0 : i32
    return %c0_i32, %c0_i32_0 : i32, i32
  }
  func.func @transform_9(%arg0: i32, %arg1: i32) -> (i32, i32) {
    %c0_i32 = arith.constant 0 : i32
    %c0_i32_0 = arith.constant 0 : i32
    %c0_i32_1 = arith.constant 0 : i32
    return %c0_i32, %c0_i32_0 : i32, i32
  }
  func.func @transform_10(%arg0: i32, %arg1: i32) -> (i32, i32) {
    %c0_i32 = arith.constant 0 : i32
    %c0_i32_0 = arith.constant 0 : i32
    %c0_i32_1 = arith.constant 0 : i32
    return %c0_i32, %c0_i32_0 : i32, i32
  }
  func.func @transform_11(%arg0: i32, %arg1: i32) -> (i32, i32) {
    %c0_i32 = arith.constant 0 : i32
    %c0_i32_0 = arith.constant 0 : i32
    %c0_i32_1 = arith.constant 0 : i32
    return %c0_i32, %c0_i32_0 : i32, i32
  }
  func.func @transform_12(%arg0: i32, %arg1: i32) -> (i32, i32) {
    %c0_i32 = arith.constant 0 : i32
    %c0_i32_0 = arith.constant 0 : i32
    %c0_i32_1 = arith.constant 0 : i32
    return %c0_i32, %c0_i32_0 : i32, i32
  }
  func.func @transform_13(%arg0: i32, %arg1: i32) -> (i32, i32) {
    %c0_i32 = arith.constant 0 : i32
    %c0_i32_0 = arith.constant 0 : i32
    %c0_i32_1 = arith.constant 0 : i32
    return %c0_i32, %c0_i32_0 : i32, i32
  }
  func.func @transform_14(%arg0: i32, %arg1: i32) -> (i32, i32) {
    %c0_i32 = arith.constant 0 : i32
    %c0_i32_0 = arith.constant 0 : i32
    %c0_i32_1 = arith.constant 0 : i32
    return %c0_i32, %c0_i32_0 : i32, i32
  }
  func.func @transform_15(%arg0: i32, %arg1: i32) -> (i32, i32) {
    %c0_i32 = arith.constant 0 : i32
    %c0_i32_0 = arith.constant 0 : i32
    %c0_i32_1 = arith.constant 0 : i32
    return %c0_i32, %c0_i32_0 : i32, i32
  }
  func.func @transform_16(%arg0: i32, %arg1: i32) -> (i32, i32) {
    %c0_i32 = arith.constant 0 : i32
    %c0_i32_0 = arith.constant 0 : i32
    %c0_i32_1 = arith.constant 0 : i32
    return %c0_i32, %c0_i32_0 : i32, i32
  }
  func.func @transform_17(%arg0: i32, %arg1: i32) -> (i32, i32) {
    %c0_i32 = arith.constant 0 : i32
    %c0_i32_0 = arith.constant 0 : i32
    %c0_i32_1 = arith.constant 0 : i32
    return %c0_i32, %c0_i32_0 : i32, i32
  }
  func.func @transform_18(%arg0: i32, %arg1: i32) -> (i32, i32) {
    %c0_i32 = arith.constant 0 : i32
    %c0_i32_0 = arith.constant 0 : i32
    %c0_i32_1 = arith.constant 0 : i32
    return %c0_i32, %c0_i32_0 : i32, i32
  }
  func.func @transform_19(%arg0: i32, %arg1: i32) -> (i32, i32) {
    %c0_i32 = arith.constant 0 : i32
    %c0_i32_0 = arith.constant 0 : i32
    %c0_i32_1 = arith.constant 0 : i32
    return %c0_i32, %c0_i32_0 : i32, i32
  }
  func.func @transform_20(%arg0: i32, %arg1: i32) -> (i32, i32, i32) {
    %c0_i32 = arith.constant 0 : i32
    %c0_i32_0 = arith.constant 0 : i32
    return %arg0, %arg1, %c0_i32 : i32, i32, i32
  }
}

module attributes {stable_mosaic.version = 11 : i64} {
  func.func @_patch_merge_kernel(%arg0: i32, %arg1: memref<1x4x128xf32, #tpu.memory_space<vmem>>, %arg2: memref<1x128xf32, #tpu.memory_space<vmem>>, %arg3: memref<1x128xf32, #tpu.memory_space<vmem>>, %arg4: memref<128x64xbf16, #tpu.memory_space<vmem>>, %arg5: memref<1x4x64xf32, #tpu.memory_space<vmem>>) attributes {dimension_semantics = [#tpu.dimension_semantics<parallel>], iteration_bounds = array<i64: 2>, scalar_prefetch = 0 : i64, scratch_operands = 0 : i64, tpu.core_type = #tpu.core_type<tc>, window_params = [{transform_indices = @transform_0, window_bounds = array<i64: 1, 4, 128>}, {pipeline_mode = #tpu.pipeline_mode<synchronous>, transform_indices = @transform_1, window_bounds = array<i64: 1, 128>}, {pipeline_mode = #tpu.pipeline_mode<synchronous>, transform_indices = @transform_2, window_bounds = array<i64: 1, 128>}, {pipeline_mode = #tpu.pipeline_mode<synchronous>, transform_indices = @transform_3, window_bounds = array<i64: 128, 64>}, {transform_indices = @transform_4, window_bounds = array<i64: 1, 4, 64>}]} {
    %c0 = arith.constant 0 : index
    %c0_0 = arith.constant 0 : index
    %c0_1 = arith.constant 0 : index
    %0 = vector.load %arg1[%c0, %c0_0, %c0_1] : memref<1x4x128xf32, #tpu.memory_space<vmem>>, vector<1x4x128xf32>
    %1 = vector.shape_cast %0 : vector<1x4x128xf32> to vector<4x128xf32>
    %c0_2 = arith.constant 0 : index
    %c0_3 = arith.constant 0 : index
    %2 = vector.load %arg2[%c0_2, %c0_3] : memref<1x128xf32, #tpu.memory_space<vmem>>, vector<1x128xf32>
    %c0_4 = arith.constant 0 : index
    %c0_5 = arith.constant 0 : index
    %3 = vector.load %arg3[%c0_4, %c0_5] : memref<1x128xf32, #tpu.memory_space<vmem>>, vector<1x128xf32>
    %cst = arith.constant dense<0.000000e+00> : vector<4xf32>
    %4 = vector.multi_reduction <add>, %1, %cst [1] : vector<4x128xf32> to vector<4xf32>
    %5 = vector.shape_cast %4 : vector<4xf32> to vector<4x1xf32>
    %cst_6 = arith.constant 1.280000e+02 : f32
    %6 = vector.broadcast %cst_6 : f32 to vector<4x1xf32>
    %7 = arith.divf %5, %6 : vector<4x1xf32>
    %8 = vector.broadcast %7 : vector<4x1xf32> to vector<4x128xf32>
    %9 = arith.subf %1, %8 : vector<4x128xf32>
    %10 = arith.mulf %9, %9 : vector<4x128xf32>
    %cst_7 = arith.constant dense<0.000000e+00> : vector<4xf32>
    %11 = vector.multi_reduction <add>, %10, %cst_7 [1] : vector<4x128xf32> to vector<4xf32>
    %12 = vector.shape_cast %11 : vector<4xf32> to vector<4x1xf32>
    %cst_8 = arith.constant 1.280000e+02 : f32
    %13 = vector.broadcast %cst_8 : f32 to vector<4x1xf32>
    %14 = arith.divf %12, %13 : vector<4x1xf32>
    %cst_9 = arith.constant 9.99999974E-6 : f32
    %15 = vector.broadcast %cst_9 : f32 to vector<4x1xf32>
    %16 = arith.addf %14, %15 : vector<4x1xf32>
    %17 = math.rsqrt %16 : vector<4x1xf32>
    %18 = vector.broadcast %17 : vector<4x1xf32> to vector<4x128xf32>
    %19 = arith.mulf %9, %18 : vector<4x128xf32>
    %20 = vector.broadcast %2 : vector<1x128xf32> to vector<4x128xf32>
    %21 = arith.mulf %19, %20 : vector<4x128xf32>
    %22 = vector.broadcast %3 : vector<1x128xf32> to vector<4x128xf32>
    %23 = arith.addf %21, %22 : vector<4x128xf32>
    %24 = arith.truncf %23 : vector<4x128xf32> to vector<4x128xbf16>
    %c0_10 = arith.constant 0 : index
    %c0_11 = arith.constant 0 : index
    %25 = vector.load %arg4[%c0_10, %c0_11] : memref<128x64xbf16, #tpu.memory_space<vmem>>, vector<128x64xbf16>
    %cst_12 = arith.constant dense<0.000000e+00> : vector<4x64xf32>
    %26 = tpu.matmul %24, %25, %cst_12 {dimension_numbers = #tpu.dot_dimension_numbers<[1], [0], [0], [1], [0, 0, 1, 1], [], []>} : vector<4x128xbf16>, vector<128x64xbf16>, vector<4x64xf32> -> vector<4x64xf32>
    %c0_13 = arith.constant 0 : index
    %c0_14 = arith.constant 0 : index
    %c0_15 = arith.constant 0 : index
    %27 = vector.load %arg5[%c0_13, %c0_14, %c0_15] : memref<1x4x64xf32, #tpu.memory_space<vmem>>, vector<1x4x64xf32>
    %28 = vector.shape_cast %27 : vector<1x4x64xf32> to vector<4x64xf32>
    %29 = vector.shape_cast %26 : vector<4x64xf32> to vector<1x4x64xf32>
    tpu.vector_store %arg5[%c0_13, %c0_14, %c0_15], %29 {strides = array<i32>} : memref<1x4x64xf32, #tpu.memory_space<vmem>>, vector<1x4x64xf32>,
    return
  }
  func.func @transform_0(%arg0: i32) -> (i32, i32, i32) {
    %c0_i32 = arith.constant 0 : i32
    %c0_i32_0 = arith.constant 0 : i32
    %c0_i32_1 = arith.constant 0 : i32
    return %arg0, %c0_i32, %c0_i32_0 : i32, i32, i32
  }
  func.func @transform_1(%arg0: i32) -> (i32, i32) {
    %c0_i32 = arith.constant 0 : i32
    %c0_i32_0 = arith.constant 0 : i32
    %c0_i32_1 = arith.constant 0 : i32
    return %c0_i32, %c0_i32_0 : i32, i32
  }
  func.func @transform_2(%arg0: i32) -> (i32, i32) {
    %c0_i32 = arith.constant 0 : i32
    %c0_i32_0 = arith.constant 0 : i32
    %c0_i32_1 = arith.constant 0 : i32
    return %c0_i32, %c0_i32_0 : i32, i32
  }
  func.func @transform_3(%arg0: i32) -> (i32, i32) {
    %c0_i32 = arith.constant 0 : i32
    %c0_i32_0 = arith.constant 0 : i32
    %c0_i32_1 = arith.constant 0 : i32
    return %c0_i32, %c0_i32_0 : i32, i32
  }
  func.func @transform_4(%arg0: i32) -> (i32, i32, i32) {
    %c0_i32 = arith.constant 0 : i32
    %c0_i32_0 = arith.constant 0 : i32
    %c0_i32_1 = arith.constant 0 : i32
    return %arg0, %c0_i32, %c0_i32_0 : i32, i32, i32
  }
}

module attributes {stable_mosaic.version = 11 : i64} {
  func.func @_ln_kernel(%arg0: i32, %arg1: memref<1x4x64xf32, #tpu.memory_space<vmem>>, %arg2: memref<1x64xf32, #tpu.memory_space<vmem>>, %arg3: memref<1x64xf32, #tpu.memory_space<vmem>>, %arg4: memref<1x4x64xf32, #tpu.memory_space<vmem>>) attributes {dimension_semantics = [#tpu.dimension_semantics<parallel>], iteration_bounds = array<i64: 2>, scalar_prefetch = 0 : i64, scratch_operands = 0 : i64, tpu.core_type = #tpu.core_type<tc>, window_params = [{transform_indices = @transform_0, window_bounds = array<i64: 1, 4, 64>}, {pipeline_mode = #tpu.pipeline_mode<synchronous>, transform_indices = @transform_1, window_bounds = array<i64: 1, 64>}, {pipeline_mode = #tpu.pipeline_mode<synchronous>, transform_indices = @transform_2, window_bounds = array<i64: 1, 64>}, {transform_indices = @transform_3, window_bounds = array<i64: 1, 4, 64>}]} {
    %c0 = arith.constant 0 : index
    %c0_0 = arith.constant 0 : index
    %c0_1 = arith.constant 0 : index
    %0 = vector.load %arg1[%c0, %c0_0, %c0_1] : memref<1x4x64xf32, #tpu.memory_space<vmem>>, vector<1x4x64xf32>
    %1 = vector.shape_cast %0 : vector<1x4x64xf32> to vector<4x64xf32>
    %c0_2 = arith.constant 0 : index
    %c0_3 = arith.constant 0 : index
    %2 = vector.load %arg2[%c0_2, %c0_3] : memref<1x64xf32, #tpu.memory_space<vmem>>, vector<1x64xf32>
    %c0_4 = arith.constant 0 : index
    %c0_5 = arith.constant 0 : index
    %3 = vector.load %arg3[%c0_4, %c0_5] : memref<1x64xf32, #tpu.memory_space<vmem>>, vector<1x64xf32>
    %cst = arith.constant dense<0.000000e+00> : vector<4xf32>
    %4 = vector.multi_reduction <add>, %1, %cst [1] : vector<4x64xf32> to vector<4xf32>
    %5 = vector.shape_cast %4 : vector<4xf32> to vector<4x1xf32>
    %cst_6 = arith.constant 6.400000e+01 : f32
    %6 = vector.broadcast %cst_6 : f32 to vector<4x1xf32>
    %7 = arith.divf %5, %6 : vector<4x1xf32>
    %8 = vector.broadcast %7 : vector<4x1xf32> to vector<4x64xf32>
    %9 = arith.subf %1, %8 : vector<4x64xf32>
    %10 = arith.mulf %9, %9 : vector<4x64xf32>
    %cst_7 = arith.constant dense<0.000000e+00> : vector<4xf32>
    %11 = vector.multi_reduction <add>, %10, %cst_7 [1] : vector<4x64xf32> to vector<4xf32>
    %12 = vector.shape_cast %11 : vector<4xf32> to vector<4x1xf32>
    %cst_8 = arith.constant 6.400000e+01 : f32
    %13 = vector.broadcast %cst_8 : f32 to vector<4x1xf32>
    %14 = arith.divf %12, %13 : vector<4x1xf32>
    %cst_9 = arith.constant 9.99999974E-6 : f32
    %15 = vector.broadcast %cst_9 : f32 to vector<4x1xf32>
    %16 = arith.addf %14, %15 : vector<4x1xf32>
    %17 = math.rsqrt %16 : vector<4x1xf32>
    %18 = vector.broadcast %17 : vector<4x1xf32> to vector<4x64xf32>
    %19 = arith.mulf %9, %18 : vector<4x64xf32>
    %20 = vector.broadcast %2 : vector<1x64xf32> to vector<4x64xf32>
    %21 = arith.mulf %19, %20 : vector<4x64xf32>
    %22 = vector.broadcast %3 : vector<1x64xf32> to vector<4x64xf32>
    %23 = arith.addf %21, %22 : vector<4x64xf32>
    %c0_10 = arith.constant 0 : index
    %c0_11 = arith.constant 0 : index
    %c0_12 = arith.constant 0 : index
    %24 = vector.load %arg4[%c0_10, %c0_11, %c0_12] : memref<1x4x64xf32, #tpu.memory_space<vmem>>, vector<1x4x64xf32>
    %25 = vector.shape_cast %24 : vector<1x4x64xf32> to vector<4x64xf32>
    %26 = vector.shape_cast %23 : vector<4x64xf32> to vector<1x4x64xf32>
    tpu.vector_store %arg4[%c0_10, %c0_11, %c0_12], %26 {strides = array<i32>} : memref<1x4x64xf32, #tpu.memory_space<vmem>>, vector<1x4x64xf32>,
    return
  }
  func.func @transform_0(%arg0: i32) -> (i32, i32, i32) {
    %c0_i32 = arith.constant 0 : i32
    %c0_i32_0 = arith.constant 0 : i32
    %c0_i32_1 = arith.constant 0 : i32
    return %arg0, %c0_i32, %c0_i32_0 : i32, i32, i32
  }
  func.func @transform_1(%arg0: i32) -> (i32, i32) {
    %c0_i32 = arith.constant 0 : i32
    %c0_i32_0 = arith.constant 0 : i32
    %c0_i32_1 = arith.constant 0 : i32
    return %c0_i32, %c0_i32_0 : i32, i32
  }
  func.func @transform_2(%arg0: i32) -> (i32, i32) {
    %c0_i32 = arith.constant 0 : i32
    %c0_i32_0 = arith.constant 0 : i32
    %c0_i32_1 = arith.constant 0 : i32
    return %c0_i32, %c0_i32_0 : i32, i32
  }
  func.func @transform_3(%arg0: i32) -> (i32, i32, i32) {
    %c0_i32 = arith.constant 0 : i32
    %c0_i32_0 = arith.constant 0 : i32
    %c0_i32_1 = arith.constant 0 : i32
    return %arg0, %c0_i32, %c0_i32_0 : i32, i32, i32
  }
}

module attributes {stable_mosaic.version = 11 : i64} {
  func.func @_swin_block_kernel(%arg0: i32, %arg1: i32, %arg2: memref<1x4x64xf32, #tpu.memory_space<vmem>>, %arg3: memref<1x4x64xf32, #tpu.memory_space<vmem>>, %arg4: memref<4x4x4xf32, #tpu.memory_space<vmem>>, %arg5: memref<4x4xf32, #tpu.memory_space<vmem>>, %arg6: memref<1x64xf32, #tpu.memory_space<vmem>>, %arg7: memref<1x64xf32, #tpu.memory_space<vmem>>, %arg8: memref<64x64xbf16, #tpu.memory_space<vmem>>, %arg9: memref<1x64xf32, #tpu.memory_space<vmem>>, %arg10: memref<64x64xbf16, #tpu.memory_space<vmem>>, %arg11: memref<1x64xf32, #tpu.memory_space<vmem>>, %arg12: memref<64x64xbf16, #tpu.memory_space<vmem>>, %arg13: memref<1x64xf32, #tpu.memory_space<vmem>>, %arg14: memref<64x64xbf16, #tpu.memory_space<vmem>>, %arg15: memref<1x64xf32, #tpu.memory_space<vmem>>, %arg16: memref<1x64xf32, #tpu.memory_space<vmem>>, %arg17: memref<1x64xf32, #tpu.memory_space<vmem>>, %arg18: memref<64x256xbf16, #tpu.memory_space<vmem>>, %arg19: memref<1x256xf32, #tpu.memory_space<vmem>>, %arg20: memref<256x64xbf16, #tpu.memory_space<vmem>>, %arg21: memref<1x64xf32, #tpu.memory_space<vmem>>, %arg22: memref<1x4x64xf32, #tpu.memory_space<vmem>>) attributes {dimension_semantics = [#tpu.dimension_semantics<parallel>, #tpu.dimension_semantics<parallel>], iteration_bounds = array<i64: 2, 1>, scalar_prefetch = 0 : i64, scratch_operands = 0 : i64, tpu.core_type = #tpu.core_type<tc>, window_params = [{transform_indices = @transform_0, window_bounds = array<i64: 1, 4, 64>}, {transform_indices = @transform_1, window_bounds = array<i64: 1, 4, 64>}, {transform_indices = @transform_2, window_bounds = array<i64: 4, 4, 4>}, {transform_indices = @transform_3, window_bounds = array<i64: 4, 4>}, {pipeline_mode = #tpu.pipeline_mode<synchronous>, transform_indices = @transform_4, window_bounds = array<i64: 1, 64>}, {pipeline_mode = #tpu.pipeline_mode<synchronous>, transform_indices = @transform_5, window_bounds = array<i64: 1, 64>}, {pipeline_mode = #tpu.pipeline_mode<synchronous>, transform_indices = @transform_6, window_bounds = array<i64: 64, 64>}, {pipeline_mode = #tpu.pipeline_mode<synchronous>, transform_indices = @transform_7, window_bounds = array<i64: 1, 64>}, {pipeline_mode = #tpu.pipeline_mode<synchronous>, transform_indices = @transform_8, window_bounds = array<i64: 64, 64>}, {pipeline_mode = #tpu.pipeline_mode<synchronous>, transform_indices = @transform_9, window_bounds = array<i64: 1, 64>}, {pipeline_mode = #tpu.pipeline_mode<synchronous>, transform_indices = @transform_10, window_bounds = array<i64: 64, 64>}, {pipeline_mode = #tpu.pipeline_mode<synchronous>, transform_indices = @transform_11, window_bounds = array<i64: 1, 64>}, {pipeline_mode = #tpu.pipeline_mode<synchronous>, transform_indices = @transform_12, window_bounds = array<i64: 64, 64>}, {pipeline_mode = #tpu.pipeline_mode<synchronous>, transform_indices = @transform_13, window_bounds = array<i64: 1, 64>}, {pipeline_mode = #tpu.pipeline_mode<synchronous>, transform_indices = @transform_14, window_bounds = array<i64: 1, 64>}, {pipeline_mode = #tpu.pipeline_mode<synchronous>, transform_indices = @transform_15, window_bounds = array<i64: 1, 64>}, {pipeline_mode = #tpu.pipeline_mode<synchronous>, transform_indices = @transform_16, window_bounds = array<i64: 64, 256>}, {pipeline_mode = #tpu.pipeline_mode<synchronous>, transform_indices = @transform_17, window_bounds = array<i64: 1, 256>}, {pipeline_mode = #tpu.pipeline_mode<synchronous>, transform_indices = @transform_18, window_bounds = array<i64: 256, 64>}, {pipeline_mode = #tpu.pipeline_mode<synchronous>, transform_indices = @transform_19, window_bounds = array<i64: 1, 64>}, {transform_indices = @transform_20, window_bounds = array<i64: 1, 4, 64>}]} {
    %c0 = arith.constant 0 : index
    %c0_0 = arith.constant 0 : index
    %c0_1 = arith.constant 0 : index
    %0 = vector.load %arg2[%c0, %c0_0, %c0_1] : memref<1x4x64xf32, #tpu.memory_space<vmem>>, vector<1x4x64xf32>
    %1 = vector.shape_cast %0 : vector<1x4x64xf32> to vector<4x64xf32>
    %c0_2 = arith.constant 0 : index
    %c0_3 = arith.constant 0 : index
    %c0_4 = arith.constant 0 : index
    %2 = vector.load %arg3[%c0_2, %c0_3, %c0_4] : memref<1x4x64xf32, #tpu.memory_space<vmem>>, vector<1x4x64xf32>
    %3 = vector.shape_cast %2 : vector<1x4x64xf32> to vector<4x64xf32>
    %c0_5 = arith.constant 0 : index
    %c0_6 = arith.constant 0 : index
    %4 = vector.load %arg6[%c0_5, %c0_6] : memref<1x64xf32, #tpu.memory_space<vmem>>, vector<1x64xf32>
    %c0_7 = arith.constant 0 : index
    %c0_8 = arith.constant 0 : index
    %5 = vector.load %arg7[%c0_7, %c0_8] : memref<1x64xf32, #tpu.memory_space<vmem>>, vector<1x64xf32>
    %cst = arith.constant dense<0.000000e+00> : vector<4xf32>
    %6 = vector.multi_reduction <add>, %1, %cst [1] : vector<4x64xf32> to vector<4xf32>
    %7 = vector.shape_cast %6 : vector<4xf32> to vector<4x1xf32>
    %cst_9 = arith.constant 6.400000e+01 : f32
    %8 = vector.broadcast %cst_9 : f32 to vector<4x1xf32>
    %9 = arith.divf %7, %8 : vector<4x1xf32>
    %10 = vector.broadcast %9 : vector<4x1xf32> to vector<4x64xf32>
    %11 = arith.subf %1, %10 : vector<4x64xf32>
    %12 = arith.mulf %11, %11 : vector<4x64xf32>
    %cst_10 = arith.constant dense<0.000000e+00> : vector<4xf32>
    %13 = vector.multi_reduction <add>, %12, %cst_10 [1] : vector<4x64xf32> to vector<4xf32>
    %14 = vector.shape_cast %13 : vector<4xf32> to vector<4x1xf32>
    %cst_11 = arith.constant 6.400000e+01 : f32
    %15 = vector.broadcast %cst_11 : f32 to vector<4x1xf32>
    %16 = arith.divf %14, %15 : vector<4x1xf32>
    %cst_12 = arith.constant 9.99999974E-6 : f32
    %17 = vector.broadcast %cst_12 : f32 to vector<4x1xf32>
    %18 = arith.addf %16, %17 : vector<4x1xf32>
    %19 = math.rsqrt %18 : vector<4x1xf32>
    %20 = vector.broadcast %19 : vector<4x1xf32> to vector<4x64xf32>
    %21 = arith.mulf %11, %20 : vector<4x64xf32>
    %22 = vector.broadcast %4 : vector<1x64xf32> to vector<4x64xf32>
    %23 = arith.mulf %21, %22 : vector<4x64xf32>
    %24 = vector.broadcast %5 : vector<1x64xf32> to vector<4x64xf32>
    %25 = arith.addf %23, %24 : vector<4x64xf32>
    %26 = arith.truncf %25 : vector<4x64xf32> to vector<4x64xbf16>
    %c0_13 = arith.constant 0 : index
    %c0_14 = arith.constant 0 : index
    %27 = vector.load %arg6[%c0_13, %c0_14] : memref<1x64xf32, #tpu.memory_space<vmem>>, vector<1x64xf32>
    %c0_15 = arith.constant 0 : index
    %c0_16 = arith.constant 0 : index
    %28 = vector.load %arg7[%c0_15, %c0_16] : memref<1x64xf32, #tpu.memory_space<vmem>>, vector<1x64xf32>
    %cst_17 = arith.constant dense<0.000000e+00> : vector<4xf32>
    %29 = vector.multi_reduction <add>, %3, %cst_17 [1] : vector<4x64xf32> to vector<4xf32>
    %30 = vector.shape_cast %29 : vector<4xf32> to vector<4x1xf32>
    %cst_18 = arith.constant 6.400000e+01 : f32
    %31 = vector.broadcast %cst_18 : f32 to vector<4x1xf32>
    %32 = arith.divf %30, %31 : vector<4x1xf32>
    %33 = vector.broadcast %32 : vector<4x1xf32> to vector<4x64xf32>
    %34 = arith.subf %3, %33 : vector<4x64xf32>
    %35 = arith.mulf %34, %34 : vector<4x64xf32>
    %cst_19 = arith.constant dense<0.000000e+00> : vector<4xf32>
    %36 = vector.multi_reduction <add>, %35, %cst_19 [1] : vector<4x64xf32> to vector<4xf32>
    %37 = vector.shape_cast %36 : vector<4xf32> to vector<4x1xf32>
    %cst_20 = arith.constant 6.400000e+01 : f32
    %38 = vector.broadcast %cst_20 : f32 to vector<4x1xf32>
    %39 = arith.divf %37, %38 : vector<4x1xf32>
    %cst_21 = arith.constant 9.99999974E-6 : f32
    %40 = vector.broadcast %cst_21 : f32 to vector<4x1xf32>
    %41 = arith.addf %39, %40 : vector<4x1xf32>
    %42 = math.rsqrt %41 : vector<4x1xf32>
    %43 = vector.broadcast %42 : vector<4x1xf32> to vector<4x64xf32>
    %44 = arith.mulf %34, %43 : vector<4x64xf32>
    %45 = vector.broadcast %27 : vector<1x64xf32> to vector<4x64xf32>
    %46 = arith.mulf %44, %45 : vector<4x64xf32>
    %47 = vector.broadcast %28 : vector<1x64xf32> to vector<4x64xf32>
    %48 = arith.addf %46, %47 : vector<4x64xf32>
    %49 = arith.truncf %48 : vector<4x64xf32> to vector<4x64xbf16>
    %c0_22 = arith.constant 0 : index
    %c0_23 = arith.constant 0 : index
    %50 = vector.load %arg8[%c0_22, %c0_23] : memref<64x64xbf16, #tpu.memory_space<vmem>>, vector<64x64xbf16>
    %cst_24 = arith.constant dense<0.000000e+00> : vector<4x64xf32>
    %51 = tpu.matmul %26, %50, %cst_24 {dimension_numbers = #tpu.dot_dimension_numbers<[1], [0], [0], [1], [0, 0, 1, 1], [], []>} : vector<4x64xbf16>, vector<64x64xbf16>, vector<4x64xf32> -> vector<4x64xf32>
    %c0_25 = arith.constant 0 : index
    %c0_26 = arith.constant 0 : index
    %52 = vector.load %arg9[%c0_25, %c0_26] : memref<1x64xf32, #tpu.memory_space<vmem>>, vector<1x64xf32>
    %53 = vector.broadcast %52 : vector<1x64xf32> to vector<4x64xf32>
    %54 = arith.addf %51, %53 : vector<4x64xf32>
    %c0_27 = arith.constant 0 : index
    %c0_28 = arith.constant 0 : index
    %55 = vector.load %arg10[%c0_27, %c0_28] : memref<64x64xbf16, #tpu.memory_space<vmem>>, vector<64x64xbf16>
    %cst_29 = arith.constant dense<0.000000e+00> : vector<4x64xf32>
    %56 = tpu.matmul %49, %55, %cst_29 {dimension_numbers = #tpu.dot_dimension_numbers<[1], [0], [0], [1], [0, 0, 1, 1], [], []>} : vector<4x64xbf16>, vector<64x64xbf16>, vector<4x64xf32> -> vector<4x64xf32>
    %c0_30 = arith.constant 0 : index
    %c0_31 = arith.constant 0 : index
    %57 = vector.load %arg11[%c0_30, %c0_31] : memref<1x64xf32, #tpu.memory_space<vmem>>, vector<1x64xf32>
    %58 = vector.broadcast %57 : vector<1x64xf32> to vector<4x64xf32>
    %59 = arith.addf %56, %58 : vector<4x64xf32>
    %c0_32 = arith.constant 0 : index
    %c0_33 = arith.constant 0 : index
    %60 = vector.load %arg12[%c0_32, %c0_33] : memref<64x64xbf16, #tpu.memory_space<vmem>>, vector<64x64xbf16>
    %cst_34 = arith.constant dense<0.000000e+00> : vector<4x64xf32>
    %61 = tpu.matmul %49, %60, %cst_34 {dimension_numbers = #tpu.dot_dimension_numbers<[1], [0], [0], [1], [0, 0, 1, 1], [], []>} : vector<4x64xbf16>, vector<64x64xbf16>, vector<4x64xf32> -> vector<4x64xf32>
    %c0_35 = arith.constant 0 : index
    %c0_36 = arith.constant 0 : index
    %62 = vector.load %arg13[%c0_35, %c0_36] : memref<1x64xf32, #tpu.memory_space<vmem>>, vector<1x64xf32>
    %63 = vector.broadcast %62 : vector<1x64xf32> to vector<4x64xf32>
    %64 = arith.addf %61, %63 : vector<4x64xf32>
    %cst_37 = arith.constant 2.500000e-01 : f32
    %65 = vector.broadcast %cst_37 : f32 to vector<4x64xf32>
    %66 = arith.mulf %54, %65 : vector<4x64xf32>
    %67 = vector.extract_strided_slice %66 {offsets = [0, 0], sizes = [4, 16], strides = [1, 1]} : vector<4x64xf32> to vector<4x16xf32>
    %68 = arith.truncf %67 : vector<4x16xf32> to vector<4x16xbf16>
    %69 = vector.extract_strided_slice %66 {offsets = [0, 16], sizes = [4, 16], strides = [1, 1]} : vector<4x64xf32> to vector<4x16xf32>
    %70 = arith.truncf %69 : vector<4x16xf32> to vector<4x16xbf16>
    %71 = vector.extract_strided_slice %66 {offsets = [0, 32], sizes = [4, 16], strides = [1, 1]} : vector<4x64xf32> to vector<4x16xf32>
    %72 = arith.truncf %71 : vector<4x16xf32> to vector<4x16xbf16>
    %73 = vector.extract_strided_slice %66 {offsets = [0, 48], sizes = [4, 16], strides = [1, 1]} : vector<4x64xf32> to vector<4x16xf32>
    %74 = arith.truncf %73 : vector<4x16xf32> to vector<4x16xbf16>
    %75 = vector.shape_cast %68 : vector<4x16xbf16> to vector<1x4x16xbf16>
    %76 = vector.shape_cast %70 : vector<4x16xbf16> to vector<1x4x16xbf16>
    %77 = vector.shape_cast %72 : vector<4x16xbf16> to vector<1x4x16xbf16>
    %78 = vector.shape_cast %74 : vector<4x16xbf16> to vector<1x4x16xbf16>
    %79 = tpu.concatenate %75, %76, %77, %78 in 0 : vector<1x4x16xbf16>, vector<1x4x16xbf16>, vector<1x4x16xbf16>, vector<1x4x16xbf16> -> vector<4x4x16xbf16>
    %80 = vector.extract_strided_slice %59 {offsets = [0, 0], sizes = [4, 16], strides = [1, 1]} : vector<4x64xf32> to vector<4x16xf32>
    %81 = arith.truncf %80 : vector<4x16xf32> to vector<4x16xbf16>
    %82 = vector.extract_strided_slice %59 {offsets = [0, 16], sizes = [4, 16], strides = [1, 1]} : vector<4x64xf32> to vector<4x16xf32>
    %83 = arith.truncf %82 : vector<4x16xf32> to vector<4x16xbf16>
    %84 = vector.extract_strided_slice %59 {offsets = [0, 32], sizes = [4, 16], strides = [1, 1]} : vector<4x64xf32> to vector<4x16xf32>
    %85 = arith.truncf %84 : vector<4x16xf32> to vector<4x16xbf16>
    %86 = vector.extract_strided_slice %59 {offsets = [0, 48], sizes = [4, 16], strides = [1, 1]} : vector<4x64xf32> to vector<4x16xf32>
    %87 = arith.truncf %86 : vector<4x16xf32> to vector<4x16xbf16>
    %88 = vector.shape_cast %81 : vector<4x16xbf16> to vector<1x4x16xbf16>
    %89 = vector.shape_cast %83 : vector<4x16xbf16> to vector<1x4x16xbf16>
    %90 = vector.shape_cast %85 : vector<4x16xbf16> to vector<1x4x16xbf16>
    %91 = vector.shape_cast %87 : vector<4x16xbf16> to vector<1x4x16xbf16>
    %92 = tpu.concatenate %88, %89, %90, %91 in 0 : vector<1x4x16xbf16>, vector<1x4x16xbf16>, vector<1x4x16xbf16>, vector<1x4x16xbf16> -> vector<4x4x16xbf16>
    %93 = vector.extract_strided_slice %64 {offsets = [0, 0], sizes = [4, 16], strides = [1, 1]} : vector<4x64xf32> to vector<4x16xf32>
    %94 = arith.truncf %93 : vector<4x16xf32> to vector<4x16xbf16>
    %95 = vector.extract_strided_slice %64 {offsets = [0, 16], sizes = [4, 16], strides = [1, 1]} : vector<4x64xf32> to vector<4x16xf32>
    %96 = arith.truncf %95 : vector<4x16xf32> to vector<4x16xbf16>
    %97 = vector.extract_strided_slice %64 {offsets = [0, 32], sizes = [4, 16], strides = [1, 1]} : vector<4x64xf32> to vector<4x16xf32>
    %98 = arith.truncf %97 : vector<4x16xf32> to vector<4x16xbf16>
    %99 = vector.extract_strided_slice %64 {offsets = [0, 48], sizes = [4, 16], strides = [1, 1]} : vector<4x64xf32> to vector<4x16xf32>
    %100 = arith.truncf %99 : vector<4x16xf32> to vector<4x16xbf16>
    %101 = vector.shape_cast %94 : vector<4x16xbf16> to vector<1x4x16xbf16>
    %102 = vector.shape_cast %96 : vector<4x16xbf16> to vector<1x4x16xbf16>
    %103 = vector.shape_cast %98 : vector<4x16xbf16> to vector<1x4x16xbf16>
    %104 = vector.shape_cast %100 : vector<4x16xbf16> to vector<1x4x16xbf16>
    %105 = tpu.concatenate %101, %102, %103, %104 in 0 : vector<1x4x16xbf16>, vector<1x4x16xbf16>, vector<1x4x16xbf16>, vector<1x4x16xbf16> -> vector<4x4x16xbf16>
    "tpu.trace_start"() <{level = 10 : i32, message = "hqd,hkd->hqk"}> : () -> ()
    %cst_38 = arith.constant dense<0.000000e+00> : vector<4x4x4xf32>
    %106 = tpu.matmul %79, %92, %cst_38 {dimension_numbers = #tpu.dot_dimension_numbers<[2], [2], [1], [1], [0, 0, 0, 1, 1, 1], [0], [0]>} : vector<4x4x16xbf16>, vector<4x4x16xbf16>, vector<4x4x4xf32> -> vector<4x4x4xf32>
    "tpu.trace_stop"() : () -> ()
    %c0_39 = arith.constant 0 : index
    %c0_40 = arith.constant 0 : index
    %c0_41 = arith.constant 0 : index
    %107 = vector.load %arg4[%c0_39, %c0_40, %c0_41] : memref<4x4x4xf32, #tpu.memory_space<vmem>>, vector<4x4x4xf32>
    %108 = arith.addf %106, %107 : vector<4x4x4xf32>
    %c0_42 = arith.constant 0 : index
    %c0_43 = arith.constant 0 : index
    %109 = vector.load %arg5[%c0_42, %c0_43] : memref<4x4xf32, #tpu.memory_space<vmem>>, vector<4x4xf32>
    %110 = vector.shape_cast %109 : vector<4x4xf32> to vector<1x4x4xf32>
    %111 = vector.broadcast %110 : vector<1x4x4xf32> to vector<4x4x4xf32>
    %112 = arith.addf %108, %111 : vector<4x4x4xf32>
    %cst_44 = arith.constant dense<0xFF800000> : vector<4x4xf32>
    %113 = vector.multi_reduction <maximumf>, %112, %cst_44 [2] : vector<4x4x4xf32> to vector<4x4xf32>
    %114 = vector.shape_cast %113 : vector<4x4xf32> to vector<4x4x1xf32>
    %115 = vector.broadcast %114 : vector<4x4x1xf32> to vector<4x4x4xf32>
    %116 = arith.subf %112, %115 : vector<4x4x4xf32>
    %117 = math.exp %116 : vector<4x4x4xf32>
    %cst_45 = arith.constant dense<0.000000e+00> : vector<4x4xf32>
    %118 = vector.multi_reduction <add>, %117, %cst_45 [2] : vector<4x4x4xf32> to vector<4x4xf32>
    %119 = vector.shape_cast %118 : vector<4x4xf32> to vector<4x4x1xf32>
    %120 = tpu.reciprocal %119 {approx = true} : vector<4x4x1xf32> -> vector<4x4x1xf32>
    %121 = vector.broadcast %120 : vector<4x4x1xf32> to vector<4x4x4xf32>
    %122 = arith.mulf %117, %121 : vector<4x4x4xf32>
    %123 = arith.truncf %122 : vector<4x4x4xf32> to vector<4x4x4xbf16>
    "tpu.trace_start"() <{level = 10 : i32, message = "hqk,hkd->hqd"}> : () -> ()
    %cst_46 = arith.constant dense<0.000000e+00> : vector<4x4x16xf32>
    %124 = tpu.matmul %123, %105, %cst_46 {dimension_numbers = #tpu.dot_dimension_numbers<[2], [1], [1], [2], [0, 0, 0, 1, 1, 2], [0], [0]>} : vector<4x4x4xbf16>, vector<4x4x16xbf16>, vector<4x4x16xf32> -> vector<4x4x16xf32>
    "tpu.trace_stop"() : () -> ()
    %125 = vector.extract_strided_slice %124 {offsets = [0, 0, 0], sizes = [1, 4, 16], strides = [1, 1, 1]} : vector<4x4x16xf32> to vector<1x4x16xf32>
    %126 = vector.shape_cast %125 : vector<1x4x16xf32> to vector<4x16xf32>
    %127 = vector.extract_strided_slice %124 {offsets = [1, 0, 0], sizes = [1, 4, 16], strides = [1, 1, 1]} : vector<4x4x16xf32> to vector<1x4x16xf32>
    %128 = vector.shape_cast %127 : vector<1x4x16xf32> to vector<4x16xf32>
    %129 = vector.extract_strided_slice %124 {offsets = [2, 0, 0], sizes = [1, 4, 16], strides = [1, 1, 1]} : vector<4x4x16xf32> to vector<1x4x16xf32>
    %130 = vector.shape_cast %129 : vector<1x4x16xf32> to vector<4x16xf32>
    %131 = vector.extract_strided_slice %124 {offsets = [3, 0, 0], sizes = [1, 4, 16], strides = [1, 1, 1]} : vector<4x4x16xf32> to vector<1x4x16xf32>
    %132 = vector.shape_cast %131 : vector<1x4x16xf32> to vector<4x16xf32>
    %133 = tpu.concatenate %126, %128, %130, %132 in 1 : vector<4x16xf32>, vector<4x16xf32>, vector<4x16xf32>, vector<4x16xf32> -> vector<4x64xf32>
    %134 = arith.truncf %133 : vector<4x64xf32> to vector<4x64xbf16>
    %c0_47 = arith.constant 0 : index
    %c0_48 = arith.constant 0 : index
    %135 = vector.load %arg14[%c0_47, %c0_48] : memref<64x64xbf16, #tpu.memory_space<vmem>>, vector<64x64xbf16>
    %cst_49 = arith.constant dense<0.000000e+00> : vector<4x64xf32>
    %136 = tpu.matmul %134, %135, %cst_49 {dimension_numbers = #tpu.dot_dimension_numbers<[1], [0], [0], [1], [0, 0, 1, 1], [], []>} : vector<4x64xbf16>, vector<64x64xbf16>, vector<4x64xf32> -> vector<4x64xf32>
    %c0_50 = arith.constant 0 : index
    %c0_51 = arith.constant 0 : index
    %137 = vector.load %arg15[%c0_50, %c0_51] : memref<1x64xf32, #tpu.memory_space<vmem>>, vector<1x64xf32>
    %138 = vector.broadcast %137 : vector<1x64xf32> to vector<4x64xf32>
    %139 = arith.addf %136, %138 : vector<4x64xf32>
    %140 = arith.addf %1, %139 : vector<4x64xf32>
    %c0_52 = arith.constant 0 : index
    %c0_53 = arith.constant 0 : index
    %141 = vector.load %arg16[%c0_52, %c0_53] : memref<1x64xf32, #tpu.memory_space<vmem>>, vector<1x64xf32>
    %c0_54 = arith.constant 0 : index
    %c0_55 = arith.constant 0 : index
    %142 = vector.load %arg17[%c0_54, %c0_55] : memref<1x64xf32, #tpu.memory_space<vmem>>, vector<1x64xf32>
    %cst_56 = arith.constant dense<0.000000e+00> : vector<4xf32>
    %143 = vector.multi_reduction <add>, %140, %cst_56 [1] : vector<4x64xf32> to vector<4xf32>
    %144 = vector.shape_cast %143 : vector<4xf32> to vector<4x1xf32>
    %cst_57 = arith.constant 6.400000e+01 : f32
    %145 = vector.broadcast %cst_57 : f32 to vector<4x1xf32>
    %146 = arith.divf %144, %145 : vector<4x1xf32>
    %147 = vector.broadcast %146 : vector<4x1xf32> to vector<4x64xf32>
    %148 = arith.subf %140, %147 : vector<4x64xf32>
    %149 = arith.mulf %148, %148 : vector<4x64xf32>
    %cst_58 = arith.constant dense<0.000000e+00> : vector<4xf32>
    %150 = vector.multi_reduction <add>, %149, %cst_58 [1] : vector<4x64xf32> to vector<4xf32>
    %151 = vector.shape_cast %150 : vector<4xf32> to vector<4x1xf32>
    %cst_59 = arith.constant 6.400000e+01 : f32
    %152 = vector.broadcast %cst_59 : f32 to vector<4x1xf32>
    %153 = arith.divf %151, %152 : vector<4x1xf32>
    %cst_60 = arith.constant 9.99999974E-6 : f32
    %154 = vector.broadcast %cst_60 : f32 to vector<4x1xf32>
    %155 = arith.addf %153, %154 : vector<4x1xf32>
    %156 = math.rsqrt %155 : vector<4x1xf32>
    %157 = vector.broadcast %156 : vector<4x1xf32> to vector<4x64xf32>
    %158 = arith.mulf %148, %157 : vector<4x64xf32>
    %159 = vector.broadcast %141 : vector<1x64xf32> to vector<4x64xf32>
    %160 = arith.mulf %158, %159 : vector<4x64xf32>
    %161 = vector.broadcast %142 : vector<1x64xf32> to vector<4x64xf32>
    %162 = arith.addf %160, %161 : vector<4x64xf32>
    %163 = arith.truncf %162 : vector<4x64xf32> to vector<4x64xbf16>
    %c0_61 = arith.constant 0 : index
    %c0_62 = arith.constant 0 : index
    %164 = vector.load %arg18[%c0_61, %c0_62] : memref<64x256xbf16, #tpu.memory_space<vmem>>, vector<64x256xbf16>
    %cst_63 = arith.constant dense<0.000000e+00> : vector<4x256xf32>
    %165 = tpu.matmul %163, %164, %cst_63 {dimension_numbers = #tpu.dot_dimension_numbers<[1], [0], [0], [1], [0, 0, 1, 1], [], []>} : vector<4x64xbf16>, vector<64x256xbf16>, vector<4x256xf32> -> vector<4x256xf32>
    %c0_64 = arith.constant 0 : index
    %c0_65 = arith.constant 0 : index
    %166 = vector.load %arg19[%c0_64, %c0_65] : memref<1x256xf32, #tpu.memory_space<vmem>>, vector<1x256xf32>
    %167 = vector.broadcast %166 : vector<1x256xf32> to vector<4x256xf32>
    %168 = arith.addf %165, %167 : vector<4x256xf32>
    %cst_66 = arith.constant 5.000000e-01 : f32
    %169 = vector.broadcast %cst_66 : f32 to vector<4x256xf32>
    %170 = arith.mulf %169, %168 : vector<4x256xf32>
    %cst_67 = arith.constant 0.707106769 : f32
    %171 = vector.broadcast %cst_67 : f32 to vector<4x256xf32>
    %172 = arith.mulf %168, %171 : vector<4x256xf32>
    %173 = math.absf %172 : vector<4x256xf32>
    %cst_68 = arith.constant 0.327591091 : f32
    %174 = vector.broadcast %cst_68 : f32 to vector<4x256xf32>
    %175 = arith.mulf %174, %173 : vector<4x256xf32>
    %cst_69 = arith.constant 1.000000e+00 : f32
    %176 = vector.broadcast %cst_69 : f32 to vector<4x256xf32>
    %177 = arith.addf %176, %175 : vector<4x256xf32>
    %cst_70 = arith.constant 1.000000e+00 : f32
    %178 = vector.broadcast %cst_70 : f32 to vector<4x256xf32>
    %179 = arith.divf %178, %177 : vector<4x256xf32>
    %cst_71 = arith.constant 1.06140542 : f32
    %180 = vector.broadcast %cst_71 : f32 to vector<4x256xf32>
    %181 = arith.mulf %180, %179 : vector<4x256xf32>
    %cst_72 = arith.constant -1.45315206 : f32
    %182 = vector.broadcast %cst_72 : f32 to vector<4x256xf32>
    %183 = arith.addf %181, %182 : vector<4x256xf32>
    %184 = arith.mulf %183, %179 : vector<4x256xf32>
    %cst_73 = arith.constant 1.42141378 : f32
    %185 = vector.broadcast %cst_73 : f32 to vector<4x256xf32>
    %186 = arith.addf %184, %185 : vector<4x256xf32>
    %187 = arith.mulf %186, %179 : vector<4x256xf32>
    %cst_74 = arith.constant -0.284496725 : f32
    %188 = vector.broadcast %cst_74 : f32 to vector<4x256xf32>
    %189 = arith.addf %187, %188 : vector<4x256xf32>
    %190 = arith.mulf %189, %179 : vector<4x256xf32>
    %cst_75 = arith.constant 0.254829586 : f32
    %191 = vector.broadcast %cst_75 : f32 to vector<4x256xf32>
    %192 = arith.addf %190, %191 : vector<4x256xf32>
    %193 = arith.mulf %192, %179 : vector<4x256xf32>
    %cst_76 = arith.constant 0.000000e+00 : f32
    %194 = vector.broadcast %cst_76 : f32 to vector<4x256xf32>
    %195 = arith.subf %194, %173 : vector<4x256xf32>
    %196 = arith.mulf %195, %173 : vector<4x256xf32>
    %197 = math.exp %196 : vector<4x256xf32>
    %198 = arith.mulf %193, %197 : vector<4x256xf32>
    %cst_77 = arith.constant 1.000000e+00 : f32
    %199 = vector.broadcast %cst_77 : f32 to vector<4x256xf32>
    %200 = arith.subf %199, %198 : vector<4x256xf32>
    %cst_78 = arith.constant 0.000000e+00 : f32
    %201 = vector.broadcast %cst_78 : f32 to vector<4x256xf32>
    %202 = arith.cmpf oge, %172, %201 : vector<4x256xf32>
    %cst_79 = arith.constant 0.000000e+00 : f32
    %203 = vector.broadcast %cst_79 : f32 to vector<4x256xf32>
    %204 = arith.subf %203, %200 : vector<4x256xf32>
    %205 = arith.select %202, %200, %204 : vector<4x256xi1>, vector<4x256xf32>
    %cst_80 = arith.constant 1.000000e+00 : f32
    %206 = vector.broadcast %cst_80 : f32 to vector<4x256xf32>
    %207 = arith.addf %206, %205 : vector<4x256xf32>
    %208 = arith.mulf %170, %207 : vector<4x256xf32>
    %209 = arith.truncf %208 : vector<4x256xf32> to vector<4x256xbf16>
    %c0_81 = arith.constant 0 : index
    %c0_82 = arith.constant 0 : index
    %210 = vector.load %arg20[%c0_81, %c0_82] : memref<256x64xbf16, #tpu.memory_space<vmem>>, vector<256x64xbf16>
    %cst_83 = arith.constant dense<0.000000e+00> : vector<4x64xf32>
    %211 = tpu.matmul %209, %210, %cst_83 {dimension_numbers = #tpu.dot_dimension_numbers<[1], [0], [0], [1], [0, 0, 1, 1], [], []>} : vector<4x256xbf16>, vector<256x64xbf16>, vector<4x64xf32> -> vector<4x64xf32>
    %c0_84 = arith.constant 0 : index
    %c0_85 = arith.constant 0 : index
    %212 = vector.load %arg21[%c0_84, %c0_85] : memref<1x64xf32, #tpu.memory_space<vmem>>, vector<1x64xf32>
    %213 = vector.broadcast %212 : vector<1x64xf32> to vector<4x64xf32>
    %214 = arith.addf %211, %213 : vector<4x64xf32>
    %215 = arith.addf %140, %214 : vector<4x64xf32>
    %c0_86 = arith.constant 0 : index
    %c0_87 = arith.constant 0 : index
    %c0_88 = arith.constant 0 : index
    %216 = vector.load %arg22[%c0_86, %c0_87, %c0_88] : memref<1x4x64xf32, #tpu.memory_space<vmem>>, vector<1x4x64xf32>
    %217 = vector.shape_cast %216 : vector<1x4x64xf32> to vector<4x64xf32>
    %218 = vector.shape_cast %215 : vector<4x64xf32> to vector<1x4x64xf32>
    tpu.vector_store %arg22[%c0_86, %c0_87, %c0_88], %218 {strides = array<i32>} : memref<1x4x64xf32, #tpu.memory_space<vmem>>, vector<1x4x64xf32>,
    return
  }
  func.func @transform_0(%arg0: i32, %arg1: i32) -> (i32, i32, i32) {
    %c0_i32 = arith.constant 0 : i32
    %c0_i32_0 = arith.constant 0 : i32
    return %arg0, %arg1, %c0_i32 : i32, i32, i32
  }
  func.func @transform_1(%arg0: i32, %arg1: i32) -> (i32, i32, i32) {
    %c0_i32 = arith.constant 0 : i32
    %c0_i32_0 = arith.constant 0 : i32
    %c0_i32_1 = arith.constant 0 : i32
    return %arg0, %c0_i32, %c0_i32_0 : i32, i32, i32
  }
  func.func @transform_2(%arg0: i32, %arg1: i32) -> (i32, i32, i32) {
    %c0_i32 = arith.constant 0 : i32
    %c0_i32_0 = arith.constant 0 : i32
    %c0_i32_1 = arith.constant 0 : i32
    return %c0_i32, %arg1, %c0_i32_0 : i32, i32, i32
  }
  func.func @transform_3(%arg0: i32, %arg1: i32) -> (i32, i32) {
    %c0_i32 = arith.constant 0 : i32
    %c0_i32_0 = arith.constant 0 : i32
    return %arg1, %c0_i32 : i32, i32
  }
  func.func @transform_4(%arg0: i32, %arg1: i32) -> (i32, i32) {
    %c0_i32 = arith.constant 0 : i32
    %c0_i32_0 = arith.constant 0 : i32
    %c0_i32_1 = arith.constant 0 : i32
    return %c0_i32, %c0_i32_0 : i32, i32
  }
  func.func @transform_5(%arg0: i32, %arg1: i32) -> (i32, i32) {
    %c0_i32 = arith.constant 0 : i32
    %c0_i32_0 = arith.constant 0 : i32
    %c0_i32_1 = arith.constant 0 : i32
    return %c0_i32, %c0_i32_0 : i32, i32
  }
  func.func @transform_6(%arg0: i32, %arg1: i32) -> (i32, i32) {
    %c0_i32 = arith.constant 0 : i32
    %c0_i32_0 = arith.constant 0 : i32
    %c0_i32_1 = arith.constant 0 : i32
    return %c0_i32, %c0_i32_0 : i32, i32
  }
  func.func @transform_7(%arg0: i32, %arg1: i32) -> (i32, i32) {
    %c0_i32 = arith.constant 0 : i32
    %c0_i32_0 = arith.constant 0 : i32
    %c0_i32_1 = arith.constant 0 : i32
    return %c0_i32, %c0_i32_0 : i32, i32
  }
  func.func @transform_8(%arg0: i32, %arg1: i32) -> (i32, i32) {
    %c0_i32 = arith.constant 0 : i32
    %c0_i32_0 = arith.constant 0 : i32
    %c0_i32_1 = arith.constant 0 : i32
    return %c0_i32, %c0_i32_0 : i32, i32
  }
  func.func @transform_9(%arg0: i32, %arg1: i32) -> (i32, i32) {
    %c0_i32 = arith.constant 0 : i32
    %c0_i32_0 = arith.constant 0 : i32
    %c0_i32_1 = arith.constant 0 : i32
    return %c0_i32, %c0_i32_0 : i32, i32
  }
  func.func @transform_10(%arg0: i32, %arg1: i32) -> (i32, i32) {
    %c0_i32 = arith.constant 0 : i32
    %c0_i32_0 = arith.constant 0 : i32
    %c0_i32_1 = arith.constant 0 : i32
    return %c0_i32, %c0_i32_0 : i32, i32
  }
  func.func @transform_11(%arg0: i32, %arg1: i32) -> (i32, i32) {
    %c0_i32 = arith.constant 0 : i32
    %c0_i32_0 = arith.constant 0 : i32
    %c0_i32_1 = arith.constant 0 : i32
    return %c0_i32, %c0_i32_0 : i32, i32
  }
  func.func @transform_12(%arg0: i32, %arg1: i32) -> (i32, i32) {
    %c0_i32 = arith.constant 0 : i32
    %c0_i32_0 = arith.constant 0 : i32
    %c0_i32_1 = arith.constant 0 : i32
    return %c0_i32, %c0_i32_0 : i32, i32
  }
  func.func @transform_13(%arg0: i32, %arg1: i32) -> (i32, i32) {
    %c0_i32 = arith.constant 0 : i32
    %c0_i32_0 = arith.constant 0 : i32
    %c0_i32_1 = arith.constant 0 : i32
    return %c0_i32, %c0_i32_0 : i32, i32
  }
  func.func @transform_14(%arg0: i32, %arg1: i32) -> (i32, i32) {
    %c0_i32 = arith.constant 0 : i32
    %c0_i32_0 = arith.constant 0 : i32
    %c0_i32_1 = arith.constant 0 : i32
    return %c0_i32, %c0_i32_0 : i32, i32
  }
  func.func @transform_15(%arg0: i32, %arg1: i32) -> (i32, i32) {
    %c0_i32 = arith.constant 0 : i32
    %c0_i32_0 = arith.constant 0 : i32
    %c0_i32_1 = arith.constant 0 : i32
    return %c0_i32, %c0_i32_0 : i32, i32
  }
  func.func @transform_16(%arg0: i32, %arg1: i32) -> (i32, i32) {
    %c0_i32 = arith.constant 0 : i32
    %c0_i32_0 = arith.constant 0 : i32
    %c0_i32_1 = arith.constant 0 : i32
    return %c0_i32, %c0_i32_0 : i32, i32
  }
  func.func @transform_17(%arg0: i32, %arg1: i32) -> (i32, i32) {
    %c0_i32 = arith.constant 0 : i32
    %c0_i32_0 = arith.constant 0 : i32
    %c0_i32_1 = arith.constant 0 : i32
    return %c0_i32, %c0_i32_0 : i32, i32
  }
  func.func @transform_18(%arg0: i32, %arg1: i32) -> (i32, i32) {
    %c0_i32 = arith.constant 0 : i32
    %c0_i32_0 = arith.constant 0 : i32
    %c0_i32_1 = arith.constant 0 : i32
    return %c0_i32, %c0_i32_0 : i32, i32
  }
  func.func @transform_19(%arg0: i32, %arg1: i32) -> (i32, i32) {
    %c0_i32 = arith.constant 0 : i32
    %c0_i32_0 = arith.constant 0 : i32
    %c0_i32_1 = arith.constant 0 : i32
    return %c0_i32, %c0_i32_0 : i32, i32
  }
  func.func @transform_20(%arg0: i32, %arg1: i32) -> (i32, i32, i32) {
    %c0_i32 = arith.constant 0 : i32
    %c0_i32_0 = arith.constant 0 : i32
    return %arg0, %arg1, %c0_i32 : i32, i32, i32
  }
}

</mosaic_0001>

<llo_original>
// kernel: encoder_forward.7
$region0: #{encoder_forward.7}
  #allocation0 [shape = 'u32[]', space=smem, size = 0x4, offset = 0x4, fixed_abs, tag = 'smem constant byte address 0x4 - core index']
  #allocation1 [shape = 'u32[144,128]{1,0:T(1,128)}', space=vmem, size = 0x12000, scoped, tag = 'internal scratch']
  %s0 = inlined_call_operand.vmem [shape: f32[2,16,64], index: 0, kind: input, shape index: {}]
  %s1 = inlined_call_operand.vmem [shape: bf16[64,32], index: 1, kind: input, shape index: {}]
  %s2 = inlined_call_operand.vmem [shape: f32[1,32], index: 2, kind: input, shape index: {}]
  %s3 = inlined_call_operand.vmem [shape: f32[1,32], index: 3, kind: input, shape index: {}]
  %s4 = inlined_call_operand.vmem [shape: f32[1,32], index: 4, kind: input, shape index: {}]
  %s5 = inlined_call_operand.vmem [shape: f32[16,32], index: 5, kind: input, shape index: {}]
  %s6 = inlined_call_operand.vmem [shape: f32[2,16,32], index: 6, kind: output, shape index: {}]
  %s7 = sld [smem:[#allocation0]]
  $region57: #{encoder_forward.7} parent=0
    _
  %s9 = ssub.s32 1, %s7
  %s10 = scalar_select 0, %s9, %s7
  loop: start=0, step=1, limit=6
  $region2: #{encoder_forward.7} parent=0 // loop_pre_header
    _
  $region3: #{encoder_forward.7} parent=0 // loop_header
    %s12 = sphi 0, %s16
    %p13 = scmp.ge.s32.totalorder %s12, 6
    %s19 = sphi 0, %s31
    %s20 = sphi 0, %s27
    %s21 = sphi 0, %s19
    %s22 = sphi 0, %s20
    %s23 = sphi 0, %s21
    %s24 = sphi 0, %s22
    %s36 = sphi 0, %s38
    %s39 = sphi 0, %s36
    %s40 = sphi 0, %s39
    %s56 = sphi 0, %s40
    %s60 = sphi 0, %s60
    %s62 = sphi 0, %s60
    %s63 = sphi 0, %s62
    %s77 = sphi 0, %s63
    %s81 = sphi 0, %s81
    %s83 = sphi 0, %s81
    %s84 = sphi 0, %s83
    %s98 = sphi 0, %s84
    %s102 = sphi 0, %s102
    %s104 = sphi 0, %s102
    %s105 = sphi 0, %s104
    %s119 = sphi 0, %s105
    %s123 = sphi 0, %s123
    %s125 = sphi 0, %s123
    %s126 = sphi 0, %s125
    %s140 = sphi 0, %s126
    %s146 = sphi 0, %s148
    %s149 = sphi 0, %s146
    %s150 = sphi 0, %s149
    %s166 = sphi 0, %s150
    %s174 = sphi 0, %s176
    %s177 = sphi 0, %s174
    %s178 = sphi 0, %s177
    %s194 = sphi 0, %s178
  $region4: #{encoder_forward.7} parent=0 // loop_header_branch
    %15 = sbr.rel (%p13) target = $region8
  $region5: #{encoder_forward.7} parent=0 // loop_body
    %s17 = ssub.s32 %s12, 1
    %s18 = ssub.s32 %s12, 2
    %s25 = sadd.s32 1, %s20
    %p26 = scmp.ge.s32.totalorder %s25, 2
    %s27 = scalar_select %p26, 0, %s25
    %s28 = sadd.s32 1, %s19
    %s29 = scalar_select %p26, %s28, %s19
    %p30 = scmp.ge.s32.totalorder %s29, 2
    %s31 = scalar_select %p30, 0, %s29
    %s32 = ssub.s32 %s19, %s31
    %s33 = ssub.s32 %s20, %s27
    %s34 = sor.u32 %s32, %s33
    %p35 = scmp.eq.s32.totalorder %s34, 0
    %s37 = sadd.s32 %s36, 1
    %s38 = scalar_select %p35, %s36, %s37
    %p41 = pneg %p35
    %p42 = scmp.eq.s32.totalorder %s12, 3
    %p43 = por %p41, %p42
    %p44 = scmp.ne.s32.totalorder %s36, %s39
    %p45 = scmp.eq.s32.totalorder %s12, 0
    %p46 = por %p44, %p45
    %p47 = scmp.ne.s32.totalorder %s36, %s39
    %p48 = scmp.eq.s32.totalorder %s17, 3
    %p49 = por %p47, %p48
    %p50 = scmp.ne.s32.totalorder %s39, %s40
    %p51 = scmp.eq.s32.totalorder %s17, 0
    %p52 = por %p50, %p51
    %p53 = scmp.ne.s32.totalorder %s39, %s40
    %p54 = scmp.eq.s32.totalorder %s18, 3
    %p55 = por %p53, %p54
    %p57 = scmp.ne.s32.totalorder %s40, %s56
    %p58 = scmp.eq.s32.totalorder %s18, 0
    %p59 = por %p57, %p58
    %s61 = sadd.s32 %s60, 1
    %p64 = scmp.eq.s32.totalorder %s12, 3
    %p65 = scmp.ne.s32.totalorder %s60, %s62
    %p66 = scmp.eq.s32.totalorder %s12, 0
    %p67 = por %p65, %p66
    %p68 = scmp.ne.s32.totalorder %s60, %s62
    %p69 = scmp.eq.s32.totalorder %s17, 3
    %p70 = por %p68, %p69
    %p71 = scmp.ne.s32.totalorder %s62, %s63
    %p72 = scmp.eq.s32.totalorder %s17, 0
    %p73 = por %p71, %p72
    %p74 = scmp.ne.s32.totalorder %s62, %s63
    %p75 = scmp.eq.s32.totalorder %s18, 3
    %p76 = por %p74, %p75
    %p78 = scmp.ne.s32.totalorder %s63, %s77
    %p79 = scmp.eq.s32.totalorder %s18, 0
    %p80 = por %p78, %p79
    %s82 = sadd.s32 %s81, 1
    %p85 = scmp.eq.s32.totalorder %s12, 3
    %p86 = scmp.ne.s32.totalorder %s81, %s83
    %p87 = scmp.eq.s32.totalorder %s12, 0
    %p88 = por %p86, %p87
    %p89 = scmp.ne.s32.totalorder %s81, %s83
    %p90 = scmp.eq.s32.totalorder %s17, 3
    %p91 = por %p89, %p90
    %p92 = scmp.ne.s32.totalorder %s83, %s84
    %p93 = scmp.eq.s32.totalorder %s17, 0
    %p94 = por %p92, %p93
    %p95 = scmp.ne.s32.totalorder %s83, %s84
    %p96 = scmp.eq.s32.totalorder %s18, 3
    %p97 = por %p95, %p96
    %p99 = scmp.ne.s32.totalorder %s84, %s98
    %p100 = scmp.eq.s32.totalorder %s18, 0
    %p101 = por %p99, %p100
    %s103 = sadd.s32 %s102, 1
    %p106 = scmp.eq.s32.totalorder %s12, 3
    %p107 = scmp.ne.s32.totalorder %s102, %s104
    %p108 = scmp.eq.s32.totalorder %s12, 0
    %p109 = por %p107, %p108
    %p110 = scmp.ne.s32.totalorder %s102, %s104
    %p111 = scmp.eq.s32.totalorder %s17, 3
    %p112 = por %p110, %p111
    %p113 = scmp.ne.s32.totalorder %s104, %s105
    %p114 = scmp.eq.s32.totalorder %s17, 0
    %p115 = por %p113, %p114
    %p116 = scmp.ne.s32.totalorder %s104, %s105
    %p117 = scmp.eq.s32.totalorder %s18, 3
    %p118 = por %p116, %p117
    %p120 = scmp.ne.s32.totalorder %s105, %s119
    %p121 = scmp.eq.s32.totalorder %s18, 0
    %p122 = por %p120, %p121
    %s124 = sadd.s32 %s123, 1
    %p127 = scmp.eq.s32.totalorder %s12, 3
    %p128 = scmp.ne.s32.totalorder %s123, %s125
    %p129 = scmp.eq.s32.totalorder %s12, 0
    %p130 = por %p128, %p129
    %p131 = scmp.ne.s32.totalorder %s123, %s125
    %p132 = scmp.eq.s32.totalorder %s17, 3
    %p133 = por %p131, %p132
    %p134 = scmp.ne.s32.totalorder %s125, %s126
    %p135 = scmp.eq.s32.totalorder %s17, 0
    %p136 = por %p134, %p135
    %p137 = scmp.ne.s32.totalorder %s125, %s126
    %p138 = scmp.eq.s32.totalorder %s18, 3
    %p139 = por %p137, %p138
    %p141 = scmp.ne.s32.totalorder %s126, %s140
    %p142 = scmp.eq.s32.totalorder %s18, 0
    %p143 = por %p141, %p142
    %s144 = ssub.s32 %s20, %s27
    %p145 = scmp.eq.s32.totalorder %s144, 0
    %s147 = sadd.s32 %s146, 1
    %s148 = scalar_select %p145, %s146, %s147
    %p151 = pneg %p145
    %p152 = scmp.eq.s32.totalorder %s12, 3
    %p153 = por %p151, %p152
    %p154 = scmp.ne.s32.totalorder %s146, %s149
    %p155 = scmp.eq.s32.totalorder %s12, 0
    %p156 = por %p154, %p155
    %p157 = scmp.ne.s32.totalorder %s146, %s149
    %p158 = scmp.eq.s32.totalorder %s17, 3
    %p159 = por %p157, %p158
    %p160 = scmp.ne.s32.totalorder %s149, %s150
    %p161 = scmp.eq.s32.totalorder %s17, 0
    %p162 = por %p160, %p161
    %p163 = scmp.ne.s32.totalorder %s149, %s150
    %p164 = scmp.eq.s32.totalorder %s18, 3
    %p165 = por %p163, %p164
    %p167 = scmp.ne.s32.totalorder %s150, %s166
    %p168 = scmp.eq.s32.totalorder %s18, 0
    %p169 = por %p167, %p168
    %s170 = ssub.s32 %s19, %s31
    %s171 = ssub.s32 %s20, %s27
    %s172 = sor.u32 %s170, %s171
    %p173 = scmp.eq.s32.totalorder %s172, 0
    %s175 = sadd.s32 %s174, 1
    %s176 = scalar_select %p173, %s174, %s175
    %p179 = pneg %p173
    %p180 = scmp.eq.s32.totalorder %s12, 3
    %p181 = por %p179, %p180
    %p182 = scmp.ne.s32.totalorder %s174, %s177
    %p183 = scmp.eq.s32.totalorder %s12, 0
    %p184 = por %p182, %p183
    %p185 = scmp.ne.s32.totalorder %s174, %s177
    %p186 = scmp.eq.s32.totalorder %s17, 3
    %p187 = por %p185, %p186
    %p188 = scmp.ne.s32.totalorder %s177, %s178
    %p189 = scmp.eq.s32.totalorder %s17, 0
    %p190 = por %p188, %p189
    %p191 = scmp.ne.s32.totalorder %s177, %s178
    %p192 = scmp.eq.s32.totalorder %s18, 3
    %p193 = por %p191, %p192
    %p195 = scmp.ne.s32.totalorder %s178, %s194
    %p196 = scmp.eq.s32.totalorder %s18, 0
    %p197 = por %p195, %p196
    %p198 = scmp.le.s32.totalorder 1, %s12
    %p199 = scmp.lt.s32.totalorder %s12, 5
    %p200 = pnand %p198, %p199
    %p201 = pneg %p200
    // Predicated region
    $region9: #{encoder_forward.7} parent=5 // pred_check
      _
    $region10: #{encoder_forward.7} parent=5 // pred_check_branch
      %203 = sbr.rel (%p200) target = $region12
    $region11: #{encoder_forward.7} parent=5 // pred_region
      %s204 = ssub.s32 %s12, 1
      // Predicated region
      $region13: #{encoder_forward.7} parent=11 // pred_check
        %p205 = pneg %p73
      $region14: #{encoder_forward.7} parent=11 // pred_check_branch
        %207 = sbr.rel (%p205) target = $region16
      $region15: #{encoder_forward.7} parent=11 // pred_region
        _
      $region16: #{encoder_forward.7} parent=11 // pred_fallthru
        _
      // Predicated region
      $region17: #{encoder_forward.7} parent=11 // pred_check
        %p208 = pneg %p94
      $region18: #{encoder_forward.7} parent=11 // pred_check_branch
        %210 = sbr.rel (%p208) target = $region20
      $region19: #{encoder_forward.7} parent=11 // pred_region
        _
      $region20: #{encoder_forward.7} parent=11 // pred_fallthru
        _
      // Predicated region
      $region21: #{encoder_forward.7} parent=11 // pred_check
        %p211 = pneg %p115
      $region22: #{encoder_forward.7} parent=11 // pred_check_branch
        %213 = sbr.rel (%p211) target = $region24
      $region23: #{encoder_forward.7} parent=11 // pred_region
        _
      $region24: #{encoder_forward.7} parent=11 // pred_fallthru
        _
      // Predicated region
      $region25: #{encoder_forward.7} parent=11 // pred_check
        %p214 = pneg %p136
      $region26: #{encoder_forward.7} parent=11 // pred_check_branch
        %216 = sbr.rel (%p214) target = $region28
      $region27: #{encoder_forward.7} parent=11 // pred_region
        _
      $region28: #{encoder_forward.7} parent=11 // pred_fallthru
        _
    $region12: #{encoder_forward.7} parent=5 // pred_fallthru
      _
    %p217 = scmp.lt.s32.totalorder %s12, 4
    // Predicated region
    $region29: #{encoder_forward.7} parent=5 // pred_check
      %p218 = pneg %p217
    $region30: #{encoder_forward.7} parent=5 // pred_check_branch
      %220 = sbr.rel (%p218) target = $region32
    $region31: #{encoder_forward.7} parent=5 // pred_region
      // Predicated region
      $region33: #{encoder_forward.7} parent=31 // pred_check
        %p221 = pneg %p46
      $region34: #{encoder_forward.7} parent=31 // pred_check_branch
        %223 = sbr.rel (%p221) target = $region36
      $region35: #{encoder_forward.7} parent=31 // pred_region
        %p224 = scmp.lt.s32.totalorder %s19, 1
        %s225 = scalar_select %p224, %s19, 1
        %p226 = scmp.lt.s32.totalorder %s20, 1
        %s227 = scalar_select %p226, %s20, 1
        %s228 = smul.addr %s225, 2
        %s229 = sadd.s32 %s227, %s228
        %s230 = smul.addr %s229, 8
        %s231 = scalar_lea.vmem %s0, %s230
      $region36: #{encoder_forward.7} parent=31 // pred_fallthru
        _
      // Predicated region
      $region37: #{encoder_forward.7} parent=31 // pred_check
        %p232 = pneg %p156
      $region38: #{encoder_forward.7} parent=31 // pred_check_branch
        %234 = sbr.rel (%p232) target = $region40
      $region39: #{encoder_forward.7} parent=31 // pred_region
        %p235 = scmp.lt.s32.totalorder %s20, 1
        %s236 = scalar_select %p235, %s20, 1
        %s237 = smul.addr %s236, 8
        %s238 = scalar_lea.vmem %s5, %s237
      $region40: #{encoder_forward.7} parent=31 // pred_fallthru
        _
    $region32: #{encoder_forward.7} parent=5 // pred_fallthru
      _
    %p239 = scmp.le.s32.totalorder 1, %s12
    %p240 = scmp.lt.s32.totalorder %s12, 5
    %p241 = pnand %p239, %p240
    %p242 = pneg %p241
    // Predicated region
    $region41: #{encoder_forward.7} parent=5 // pred_check
      _
    $region42: #{encoder_forward.7} parent=5 // pred_check_branch
      %244 = sbr.rel (%p241) target = $region44
    $region43: #{encoder_forward.7} parent=5 // pred_region
      %s245 = ssub.s32 %s12, 1
      %p246 = scmp.lt.s32.totalorder %s21, 1
      %s247 = scalar_select %p246, %s21, 1
      %p248 = scmp.lt.s32.totalorder %s22, 1
      %s249 = scalar_select %p248, %s22, 1
      %s250 = smul.addr %s247, 2
      %s251 = sadd.s32 %s249, %s250
      %s252 = smul.addr %s251, 8
      %s253 = scalar_lea.vmem %s0, %s252
      %p254 = pneg %p52
      %p255 = pneg %p49
      %p256 = pneg %p73
      %p257 = pneg %p70
      %p258 = pneg %p94
      %p259 = pneg %p91
      %p260 = pneg %p115
      %p261 = pneg %p112
      %p262 = pneg %p136
      %p263 = pneg %p133
      %p264 = scmp.lt.s32.totalorder %s22, 1
      %s265 = scalar_select %p264, %s22, 1
      %s266 = smul.addr %s265, 8
      %s267 = scalar_lea.vmem %s5, %s266
      %p268 = pneg %p162
      %p269 = pneg %p159
      %p270 = pneg %p190
      %p271 = pneg %p187
      %p272 = scmp.lt.s32.totalorder %s21, 1
      %s273 = scalar_select %p272, %s21, 1
      %p274 = scmp.lt.s32.totalorder %s22, 1
      %s275 = scalar_select %p274, %s22, 1
      %s276 = smul.addr %s273, 2
      %s277 = sadd.s32 %s275, %s276
      %s278 = smul.addr %s277, 8
      %s279 = scalar_lea.vmem %s6, %s278
      %p280 = scmp.lt.s32.totalorder %s21, 1
      %s281 = scalar_select %p280, %s21, 1
      %p282 = scmp.lt.s32.totalorder %s22, 1
      %s283 = scalar_select %p282, %s22, 1
      %s284 = smul.addr %s281, 2
      %s285 = sadd.s32 %s283, %s284
      %s286 = smul.addr %s285, 8
      %s287 = scalar_lea.vmem %s0, %s286
      %p288 = scmp.lt.s32.totalorder %s22, 1
      %s289 = scalar_select %p288, %s22, 1
      %s290 = smul.addr %s289, 8
      %s291 = scalar_lea.vmem %s5, %s290
      %p292 = scmp.lt.s32.totalorder %s21, 1
      %s293 = scalar_select %p292, %s21, 1
      %p294 = scmp.lt.s32.totalorder %s22, 1
      %s295 = scalar_select %p294, %s22, 1
      %s296 = smul.addr %s293, 2
      %s297 = sadd.s32 %s295, %s296
      %s298 = smul.addr %s297, 8
      %s299 = scalar_lea.vmem %s6, %s298
      %v301 = vld [vmem:[%s287] sm:$0xff]
      %v302 = vpack.c.bf16 %v301, %v301
      %v303 = vld [vmem:[%s1] sm:$0xf]
      %v304 = vld [vmem:[%s1 + $0x4] sm:$0xf]
      %v305 = vld [vmem:[%s1 + $0x8] sm:$0xf]
      %v306 = vld [vmem:[%s1 + $0xc] sm:$0xf]
      %v307 = vld [vmem:[%s1 + $0x10] sm:$0xf]
      %v308 = vld [vmem:[%s1 + $0x14] sm:$0xf]
      %v309 = vld [vmem:[%s1 + $0x18] sm:$0xf]
      %v310 = vld [vmem:[%s1 + $0x1c] sm:$0xf]
      %v311 = vld [vmem:[%s2] sm:$0x1]
      %v313 = vlaneseq
      %v314 = vshrl.u32 %v313, 7
      %v315 = vsub.s32 0, %v314
      %v316 = vrot.slane %v311, %v315
      %v326 = vunpack.c.l.b16 %v303
      %v327 = vunpack.c.l.b16 %v304
      %v328 = vunpack.c.l.b16 %v305
      %v329 = vunpack.c.l.b16 %v306
      %v330 = vunpack.c.l.b16 %v307
      %v331 = vunpack.c.l.b16 %v308
      %v332 = vunpack.c.l.b16 %v309
      %v333 = vunpack.c.l.b16 %v310
      %v334 = vpack.c.b16 %v327, %v326
      %v335 = vpack.c.b16 %v329, %v328
      %v336 = vpack.c.b16 %v331, %v330
      %v337 = vpack.c.b16 %v333, %v332
      %vm342 = vcmask 523264
      %v344 = vsel %vm342, %v302, 0
      %346 = vmatprep.subr.bf16.mxu0 0
      %347 = vmatpush1.bf16.msra.mxu0 %v334
      %348 = vmatprep.subr.bf16.mxu0 0
      %349 = vmatpush1.bf16.msra.mxu0 %v335
      %350 = vmatprep.subr.bf16.mxu0 0
      %351 = vmatpush1.bf16.msra.mxu0 %v336
      %352 = vmatprep.subr.bf16.mxu0 0
      %353 = vmatpush1.bf16.msra.mxu0 %v337
      %354 = vmatprep.subr.bf16.mxu0 0
      %355 = vmatpush1.bf16.msra.mxu0 0
      %356 = vmatprep.subr.bf16.mxu0 0
      %357 = vmatpush1.bf16.msra.mxu0 0
      %358 = vmatprep.subr.bf16.mxu0 0
      %359 = vmatpush1.bf16.msra.mxu0 0
      %360 = vmatprep.subr.bf16.mxu0 0
      %361 = vmatpush1.bf16.msra.mxu0 0
      %362 = vmatprep.subr.bf16.mxu0 0
      %363 = vmatpush1.bf16.msra.mxu0 0
      %364 = vmatprep.subr.bf16.mxu0 0
      %365 = vmatpush1.bf16.msra.mxu0 0
      %366 = vmatprep.subr.bf16.mxu0 0
      %367 = vmatpush1.bf16.msra.mxu0 0
      %368 = vmatprep.subr.bf16.mxu0 0
      %369 = vmatpush1.bf16.msra.mxu0 0
      %370 = vmatprep.subr.bf16.mxu0 0
      %371 = vmatpush1.bf16.msra.mxu0 0
      %372 = vmatprep.subr.bf16.mxu0 0
      %373 = vmatpush1.bf16.msra.mxu0 0
      %374 = vmatprep.subr.bf16.mxu0 0
      %375 = vmatpush1.bf16.msra.mxu0 0
      %376 = vmatprep.subr.bf16.mxu0 0
      %377 = vmatpush1.bf16.msra.mxu0 0
      %378 = vmatprep.mubr.bf16.mxu0 0
      %379 = vmatmul.mubr.bf16.gmra.mrb[0].mxu0 %v344
      %v380 = vpop.f32.mrb[0].mxu0
      %v381 = vadd.f32 %v316, %v380
      %v382 = vpop.f32.mrb[0].mxu0
      %v383 = vpop.f32.mrb[0].mxu0
      %v384 = vpop.f32.mrb[0].mxu0
      %385 = vdwg.mxu0
      %v386 = vld [vmem:[%s3] sm:$0x1]
      %v387 = vld [vmem:[%s4] sm:$0x1]
      %vm388 = vcmask 261120
      %v389 = vsel %vm388, %v381, 0.0
      %390 = vadd.xlane.f32.xlu0 %v389
      %v391 = vpop.xlane.xlu0 %390
      %v392 = vrcp.pop 32.0
      %v393 = vmul.f32 %v391, %v392
      %v394 = vsub.f32 %v381, %v393
      %v395 = vmul.f32 %v394, %v394
      %v396 = vsel %vm388, %v395, 0.0
      %397 = vadd.xlane.f32.xlu0 %v396
      %v398 = vpop.xlane.xlu0 %397
      %v399 = vmul.f32 %v398, %v392
      %v400 = vadd.f32 %v399, 1e-05
      %v401 = vrsqrt.pop %v400
      %v402 = vmul.f32 %v394, %v401
      %v404 = vlaneseq
      %v405 = vshrl.u32 %v404, 7
      %v406 = vsub.s32 0, %v405
      %v407 = vrot.slane %v386, %v406
      %v409 = vmul.f32 %v402, %v407
      %v411 = vlaneseq
      %v412 = vshrl.u32 %v411, 7
      %v413 = vsub.s32 0, %v412
      %v414 = vrot.slane %v387, %v413
      %v416 = vadd.f32 %v409, %v414
      %v417 = vld [vmem:[%s291] sm:$0xff]
      %v418 = vadd.f32 %v416, %v417
      %419 = vst.msk [vmem:[%s299] sm:$0xff] %vm388, %v418
      %p420 = scmp.lt.s32.totalorder %s21, 1
      %s421 = scalar_select %p420, %s21, 1
      %p422 = scmp.lt.s32.totalorder %s22, 1
      %s423 = scalar_select %p422, %s22, 1
      %s424 = smul.addr %s421, 2
      %s425 = sadd.s32 %s423, %s424
      %s426 = smul.addr %s425, 8
      %s427 = scalar_lea.vmem %s6, %s426
      // Predicated region
      $region45: #{encoder_forward.7} parent=43 // pred_check
        %p428 = pneg %p187
      $region46: #{encoder_forward.7} parent=43 // pred_check_branch
        %430 = sbr.rel (%p428) target = $region48
      $region47: #{encoder_forward.7} parent=43 // pred_region
        _
      $region48: #{encoder_forward.7} parent=43 // pred_fallthru
        _
    $region44: #{encoder_forward.7} parent=5 // pred_fallthru
      _
    %p431 = scmp.le.s32.totalorder 2, %s12
    // Predicated region
    $region49: #{encoder_forward.7} parent=5 // pred_check
      %p432 = pneg %p431
    $region50: #{encoder_forward.7} parent=5 // pred_check_branch
      %434 = sbr.rel (%p432) target = $region52
    $region51: #{encoder_forward.7} parent=5 // pred_region
      %s435 = ssub.s32 %s12, 2
      // Predicated region
      $region53: #{encoder_forward.7} parent=51 // pred_check
        %p436 = pneg %p193
      $region54: #{encoder_forward.7} parent=51 // pred_check_branch
        %438 = sbr.rel (%p436) target = $region56
      $region55: #{encoder_forward.7} parent=51 // pred_region
        %p439 = scmp.lt.s32.totalorder %s23, 1
        %s440 = scalar_select %p439, %s23, 1
        %p441 = scmp.lt.s32.totalorder %s24, 1
        %s442 = scalar_select %p441, %s24, 1
        %s443 = smul.addr %s440, 2
        %s444 = sadd.s32 %s442, %s443
        %s445 = smul.addr %s444, 8
        %s446 = scalar_lea.vmem %s6, %s445
      $region56: #{encoder_forward.7} parent=51 // pred_fallthru
        _
    $region52: #{encoder_forward.7} parent=5 // pred_fallthru
      _
  $region6: #{encoder_forward.7} parent=0 // loop_footer
    %s16 = sadd.s32 1, %s12
  $region7: #{encoder_forward.7} parent=0 // loop_footer_branch
    %11 = sbr.rel target = $region3
  $region8: #{encoder_forward.7} parent=0 // loop_exit
    _

// kernel: encoder_forward.8
$region0: #{encoder_forward.8}
  #allocation0 [shape = 'u32[]', space=smem, size = 0x4, offset = 0x4, fixed_abs, tag = 'smem constant byte address 0x4 - core index']
  #allocation1 [shape = 'u32[144,128]{1,0:T(1,128)}', space=vmem, size = 0x12000, scoped, tag = 'internal scratch']
  %s0 = inlined_call_operand.vmem [shape: f32[2,16,32], index: 0, kind: input, shape index: {}, may-alias: {0,1}]
  %s1 = inlined_call_operand.vmem [shape: f32[2,16,32], index: 1, kind: input, shape index: {}, may-alias: {0,1}]
  %s2 = inlined_call_operand.vmem [shape: f32[2,16,16], index: 2, kind: input, shape index: {}]
  %s3 = inlined_call_operand.vmem [shape: f32[16,16], index: 3, kind: input, shape index: {}]
  %s4 = inlined_call_operand.vmem [shape: f32[1,32], index: 4, kind: input, shape index: {}]
  %s5 = inlined_call_operand.vmem [shape: f32[1,32], index: 5, kind: input, shape index: {}]
  %s6 = inlined_call_operand.vmem [shape: bf16[32,32], index: 6, kind: input, shape index: {}]
  %s7 = inlined_call_operand.vmem [shape: f32[1,32], index: 7, kind: input, shape index: {}]
  %s8 = inlined_call_operand.vmem [shape: bf16[32,32], index: 8, kind: input, shape index: {}]
  %s9 = inlined_call_operand.vmem [shape: f32[1,32], index: 9, kind: input, shape index: {}]
  %s10 = inlined_call_operand.vmem [shape: bf16[32,32], index: 10, kind: input, shape index: {}]
  %s11 = inlined_call_operand.vmem [shape: f32[1,32], index: 11, kind: input, shape index: {}]
  %s12 = inlined_call_operand.vmem [shape: bf16[32,32], index: 12, kind: input, shape index: {}]
  %s13 = inlined_call_operand.vmem [shape: f32[1,32], index: 13, kind: input, shape index: {}]
  %s14 = inlined_call_operand.vmem [shape: f32[1,32], index: 14, kind: input, shape index: {}]
  %s15 = inlined_call_operand.vmem [shape: f32[1,32], index: 15, kind: input, shape index: {}]
  %s16 = inlined_call_operand.vmem [shape: bf16[32,128], index: 16, kind: input, shape index: {}]
  %s17 = inlined_call_operand.vmem [shape: f32[1,128], index: 17, kind: input, shape index: {}]
  %s18 = inlined_call_operand.vmem [shape: bf16[128,32], index: 18, kind: input, shape index: {}]
  %s19 = inlined_call_operand.vmem [shape: f32[1,32], index: 19, kind: input, shape index: {}]
  %s20 = inlined_call_operand.vmem [shape: f32[2,16,32], index: 20, kind: output, shape index: {}]
  %s21 = sld [smem:[#allocation0]]
  $region151: #{encoder_forward.8} parent=0
    _
  %s23 = ssub.s32 1, %s21
  %s24 = scalar_select 0, %s23, %s21
  $region1: #{encoder_forward.8} parent=0
    #allocation2 [shape = 'u8[16384]{0}', space=vmem, size = 0x4000, scoped, tag = 'input window, operand 2']
    loop: start=0, step=1, limit=6
    $region2: #{encoder_forward.8} parent=1 // loop_pre_header
      _
    $region3: #{encoder_forward.8} parent=1 // loop_header
      %s26 = sphi 0, %s30
      %p27 = scmp.ge.s32.totalorder %s26, 6
      %s33 = sphi 0, %s45
      %s34 = sphi 0, %s41
      %s35 = sphi 0, %s33
      %s36 = sphi 0, %s34
      %s37 = sphi 0, %s35
      %s38 = sphi 0, %s36
      %s50 = sphi 0, %s52
      %s53 = sphi 0, %s50
      %s54 = sphi 0, %s53
      %s70 = sphi 0, %s54
      %s76 = sphi 0, %s78
      %s79 = sphi 0, %s76
      %s80 = sphi 0, %s79
      %s96 = sphi 0, %s80
      %s102 = sphi 0, %s104
      %s105 = sphi 0, %s102
      %s106 = sphi 0, %s105
      %s122 = sphi 0, %s106
      %s128 = sphi 0, %s130
      %s131 = sphi 0, %s128
      %s132 = sphi 0, %s131
      %s148 = sphi 0, %s132
      %s152 = sphi 0, %s152
      %s154 = sphi 0, %s152
      %s155 = sphi 0, %s154
      %s169 = sphi 0, %s155
      %s173 = sphi 0, %s173
      %s175 = sphi 0, %s173
      %s176 = sphi 0, %s175
      %s190 = sphi 0, %s176
      %s194 = sphi 0, %s194
      %s196 = sphi 0, %s194
      %s197 = sphi 0, %s196
      %s211 = sphi 0, %s197
      %s215 = sphi 0, %s215
      %s217 = sphi 0, %s215
      %s218 = sphi 0, %s217
      %s232 = sphi 0, %s218
      %s236 = sphi 0, %s236
      %s238 = sphi 0, %s236
      %s239 = sphi 0, %s238
      %s253 = sphi 0, %s239
      %s257 = sphi 0, %s257
      %s259 = sphi 0, %s257
      %s260 = sphi 0, %s259
      %s274 = sphi 0, %s260
      %s278 = sphi 0, %s278
      %s280 = sphi 0, %s278
      %s281 = sphi 0, %s280
      %s295 = sphi 0, %s281
      %s299 = sphi 0, %s299
      %s301 = sphi 0, %s299
      %s302 = sphi 0, %s301
      %s316 = sphi 0, %s302
      %s320 = sphi 0, %s320
      %s322 = sphi 0, %s320
      %s323 = sphi 0, %s322
      %s337 = sphi 0, %s323
      %s341 = sphi 0, %s341
      %s343 = sphi 0, %s341
      %s344 = sphi 0, %s343
      %s358 = sphi 0, %s344
      %s362 = sphi 0, %s362
      %s364 = sphi 0, %s362
      %s365 = sphi 0, %s364
      %s379 = sphi 0, %s365
      %s383 = sphi 0, %s383
      %s385 = sphi 0, %s383
      %s386 = sphi 0, %s385
      %s400 = sphi 0, %s386
      %s404 = sphi 0, %s404
      %s406 = sphi 0, %s404
      %s407 = sphi 0, %s406
      %s421 = sphi 0, %s407
      %s425 = sphi 0, %s425
      %s427 = sphi 0, %s425
      %s428 = sphi 0, %s427
      %s442 = sphi 0, %s428
      %s446 = sphi 0, %s446
      %s448 = sphi 0, %s446
      %s449 = sphi 0, %s448
      %s463 = sphi 0, %s449
      %s467 = sphi 0, %s467
      %s469 = sphi 0, %s467
      %s470 = sphi 0, %s469
      %s484 = sphi 0, %s470
      %s492 = sphi 0, %s494
      %s495 = sphi 0, %s492
      %s496 = sphi 0, %s495
      %s512 = sphi 0, %s496
    $region4: #{encoder_forward.8} parent=1 // loop_header_branch
      %29 = sbr.rel (%p27) target = $region8
    $region5: #{encoder_forward.8} parent=1 // loop_body
      %s31 = ssub.s32 %s26, 1
      %s32 = ssub.s32 %s26, 2
      %s39 = sadd.s32 1, %s34
      %p40 = scmp.ge.s32.totalorder %s39, 2
      %s41 = scalar_select %p40, 0, %s39
      %s42 = sadd.s32 1, %s33
      %s43 = scalar_select %p40, %s42, %s33
      %p44 = scmp.ge.s32.totalorder %s43, 2
      %s45 = scalar_select %p44, 0, %s43
      %s46 = ssub.s32 %s33, %s45
      %s47 = ssub.s32 %s34, %s41
      %s48 = sor.u32 %s46, %s47
      %p49 = scmp.eq.s32.totalorder %s48, 0
      %s51 = sadd.s32 %s50, 1
      %s52 = scalar_select %p49, %s50, %s51
      %p55 = pneg %p49
      %p56 = scmp.eq.s32.totalorder %s26, 3
      %p57 = por %p55, %p56
      %p58 = scmp.ne.s32.totalorder %s50, %s53
      %p59 = scmp.eq.s32.totalorder %s26, 0
      %p60 = por %p58, %p59
      %p61 = scmp.ne.s32.totalorder %s50, %s53
      %p62 = scmp.eq.s32.totalorder %s31, 3
      %p63 = por %p61, %p62
      %p64 = scmp.ne.s32.totalorder %s53, %s54
      %p65 = scmp.eq.s32.totalorder %s31, 0
      %p66 = por %p64, %p65
      %p67 = scmp.ne.s32.totalorder %s53, %s54
      %p68 = scmp.eq.s32.totalorder %s32, 3
      %p69 = por %p67, %p68
      %p71 = scmp.ne.s32.totalorder %s54, %s70
      %p72 = scmp.eq.s32.totalorder %s32, 0
      %p73 = por %p71, %p72
      %s74 = ssub.s32 %s33, %s45
      %p75 = scmp.eq.s32.totalorder %s74, 0
      %s77 = sadd.s32 %s76, 1
      %s78 = scalar_select %p75, %s76, %s77
      %p81 = pneg %p75
      %p82 = scmp.eq.s32.totalorder %s26, 3
      %p83 = por %p81, %p82
      %p84 = scmp.ne.s32.totalorder %s76, %s79
      %p85 = scmp.eq.s32.totalorder %s26, 0
      %p86 = por %p84, %p85
      %p87 = scmp.ne.s32.totalorder %s76, %s79
      %p88 = scmp.eq.s32.totalorder %s31, 3
      %p89 = por %p87, %p88
      %p90 = scmp.ne.s32.totalorder %s79, %s80
      %p91 = scmp.eq.s32.totalorder %s31, 0
      %p92 = por %p90, %p91
      %p93 = scmp.ne.s32.totalorder %s79, %s80
      %p94 = scmp.eq.s32.totalorder %s32, 3
      %p95 = por %p93, %p94
      %p97 = scmp.ne.s32.totalorder %s80, %s96
      %p98 = scmp.eq.s32.totalorder %s32, 0
      %p99 = por %p97, %p98
      %s100 = ssub.s32 %s34, %s41
      %p101 = scmp.eq.s32.totalorder %s100, 0
      %s103 = sadd.s32 %s102, 1
      %s104 = scalar_select %p101, %s102, %s103
      %p107 = pneg %p101
      %p108 = scmp.eq.s32.totalorder %s26, 3
      %p109 = por %p107, %p108
      %p110 = scmp.ne.s32.totalorder %s102, %s105
      %p111 = scmp.eq.s32.totalorder %s26, 0
      %p112 = por %p110, %p111
      %p113 = scmp.ne.s32.totalorder %s102, %s105
      %p114 = scmp.eq.s32.totalorder %s31, 3
      %p115 = por %p113, %p114
      %p116 = scmp.ne.s32.totalorder %s105, %s106
      %p117 = scmp.eq.s32.totalorder %s31, 0
      %p118 = por %p116, %p117
      %p119 = scmp.ne.s32.totalorder %s105, %s106
      %p120 = scmp.eq.s32.totalorder %s32, 3
      %p121 = por %p119, %p120
      %p123 = scmp.ne.s32.totalorder %s106, %s122
      %p124 = scmp.eq.s32.totalorder %s32, 0
      %p125 = por %p123, %p124
      %s126 = ssub.s32 %s34, %s41
      %p127 = scmp.eq.s32.totalorder %s126, 0
      %s129 = sadd.s32 %s128, 1
      %s130 = scalar_select %p127, %s128, %s129
      %p133 = pneg %p127
      %p134 = scmp.eq.s32.totalorder %s26, 3
      %p135 = por %p133, %p134
      %p136 = scmp.ne.s32.totalorder %s128, %s131
      %p137 = scmp.eq.s32.totalorder %s26, 0
      %p138 = por %p136, %p137
      %p139 = scmp.ne.s32.totalorder %s128, %s131
      %p140 = scmp.eq.s32.totalorder %s31, 3
      %p141 = por %p139, %p140
      %p142 = scmp.ne.s32.totalorder %s131, %s132
      %p143 = scmp.eq.s32.totalorder %s31, 0
      %p144 = por %p142, %p143
      %p145 = scmp.ne.s32.totalorder %s131, %s132
      %p146 = scmp.eq.s32.totalorder %s32, 3
      %p147 = por %p145, %p146
      %p149 = scmp.ne.s32.totalorder %s132, %s148
      %p150 = scmp.eq.s32.totalorder %s32, 0
      %p151 = por %p149, %p150
      %s153 = sadd.s32 %s152, 1
      %p156 = scmp.eq.s32.totalorder %s26, 3
      %p157 = scmp.ne.s32.totalorder %s152, %s154
      %p158 = scmp.eq.s32.totalorder %s26, 0
      %p159 = por %p157, %p158
      %p160 = scmp.ne.s32.totalorder %s152, %s154
      %p161 = scmp.eq.s32.totalorder %s31, 3
      %p162 = por %p160, %p161
      %p163 = scmp.ne.s32.totalorder %s154, %s155
      %p164 = scmp.eq.s32.totalorder %s31, 0
      %p165 = por %p163, %p164
      %p166 = scmp.ne.s32.totalorder %s154, %s155
      %p167 = scmp.eq.s32.totalorder %s32, 3
      %p168 = por %p166, %p167
      %p170 = scmp.ne.s32.totalorder %s155, %s169
      %p171 = scmp.eq.s32.totalorder %s32, 0
      %p172 = por %p170, %p171
      %s174 = sadd.s32 %s173, 1
      %p177 = scmp.eq.s32.totalorder %s26, 3
      %p178 = scmp.ne.s32.totalorder %s173, %s175
      %p179 = scmp.eq.s32.totalorder %s26, 0
      %p180 = por %p178, %p179
      %p181 = scmp.ne.s32.totalorder %s173, %s175
      %p182 = scmp.eq.s32.totalorder %s31, 3
      %p183 = por %p181, %p182
      %p184 = scmp.ne.s32.totalorder %s175, %s176
      %p185 = scmp.eq.s32.totalorder %s31, 0
      %p186 = por %p184, %p185
      %p187 = scmp.ne.s32.totalorder %s175, %s176
      %p188 = scmp.eq.s32.totalorder %s32, 3
      %p189 = por %p187, %p188
      %p191 = scmp.ne.s32.totalorder %s176, %s190
      %p192 = scmp.eq.s32.totalorder %s32, 0
      %p193 = por %p191, %p192
      %s195 = sadd.s32 %s194, 1
      %p198 = scmp.eq.s32.totalorder %s26, 3
      %p199 = scmp.ne.s32.totalorder %s194, %s196
      %p200 = scmp.eq.s32.totalorder %s26, 0
      %p201 = por %p199, %p200
      %p202 = scmp.ne.s32.totalorder %s194, %s196
      %p203 = scmp.eq.s32.totalorder %s31, 3
      %p204 = por %p202, %p203
      %p205 = scmp.ne.s32.totalorder %s196, %s197
      %p206 = scmp.eq.s32.totalorder %s31, 0
      %p207 = por %p205, %p206
      %p208 = scmp.ne.s32.totalorder %s196, %s197
      %p209 = scmp.eq.s32.totalorder %s32, 3
      %p210 = por %p208, %p209
      %p212 = scmp.ne.s32.totalorder %s197, %s211
      %p213 = scmp.eq.s32.totalorder %s32, 0
      %p214 = por %p212, %p213
      %s216 = sadd.s32 %s215, 1
      %p219 = scmp.eq.s32.totalorder %s26, 3
      %p220 = scmp.ne.s32.totalorder %s215, %s217
      %p221 = scmp.eq.s32.totalorder %s26, 0
      %p222 = por %p220, %p221
      %p223 = scmp.ne.s32.totalorder %s215, %s217
      %p224 = scmp.eq.s32.totalorder %s31, 3
      %p225 = por %p223, %p224
      %p226 = scmp.ne.s32.totalorder %s217, %s218
      %p227 = scmp.eq.s32.totalorder %s31, 0
      %p228 = por %p226, %p227
      %p229 = scmp.ne.s32.totalorder %s217, %s218
      %p230 = scmp.eq.s32.totalorder %s32, 3
      %p231 = por %p229, %p230
      %p233 = scmp.ne.s32.totalorder %s218, %s232
      %p234 = scmp.eq.s32.totalorder %s32, 0
      %p235 = por %p233, %p234
      %s237 = sadd.s32 %s236, 1
      %p240 = scmp.eq.s32.totalorder %s26, 3
      %p241 = scmp.ne.s32.totalorder %s236, %s238
      %p242 = scmp.eq.s32.totalorder %s26, 0
      %p243 = por %p241, %p242
      %p244 = scmp.ne.s32.totalorder %s236, %s238
      %p245 = scmp.eq.s32.totalorder %s31, 3
      %p246 = por %p244, %p245
      %p247 = scmp.ne.s32.totalorder %s238, %s239
      %p248 = scmp.eq.s32.totalorder %s31, 0
      %p249 = por %p247, %p248
      %p250 = scmp.ne.s32.totalorder %s238, %s239
      %p251 = scmp.eq.s32.totalorder %s32, 3
      %p252 = por %p250, %p251
      %p254 = scmp.ne.s32.totalorder %s239, %s253
      %p255 = scmp.eq.s32.totalorder %s32, 0
      %p256 = por %p254, %p255
      %s258 = sadd.s32 %s257, 1
      %p261 = scmp.eq.s32.totalorder %s26, 3
      %p262 = scmp.ne.s32.totalorder %s257, %s259
      %p263 = scmp.eq.s32.totalorder %s26, 0
      %p264 = por %p262, %p263
      %p265 = scmp.ne.s32.totalorder %s257, %s259
      %p266 = scmp.eq.s32.totalorder %s31, 3
      %p267 = por %p265, %p266
      %p268 = scmp.ne.s32.totalorder %s259, %s260
      %p269 = scmp.eq.s32.totalorder %s31, 0
      %p270 = por %p268, %p269
      %p271 = scmp.ne.s32.totalorder %s259, %s260
      %p272 = scmp.eq.s32.totalorder %s32, 3
      %p273 = por %p271, %p272
      %p275 = scmp.ne.s32.totalorder %s260, %s274
      %p276 = scmp.eq.s32.totalorder %s32, 0
      %p277 = por %p275, %p276
      %s279 = sadd.s32 %s278, 1
      %p282 = scmp.eq.s32.totalorder %s26, 3
      %p283 = scmp.ne.s32.totalorder %s278, %s280
      %p284 = scmp.eq.s32.totalorder %s26, 0
      %p285 = por %p283, %p284
      %p286 = scmp.ne.s32.totalorder %s278, %s280
      %p287 = scmp.eq.s32.totalorder %s31, 3
      %p288 = por %p286, %p287
      %p289 = scmp.ne.s32.totalorder %s280, %s281
      %p290 = scmp.eq.s32.totalorder %s31, 0
      %p291 = por %p289, %p290
      %p292 = scmp.ne.s32.totalorder %s280, %s281
      %p293 = scmp.eq.s32.totalorder %s32, 3
      %p294 = por %p292, %p293
      %p296 = scmp.ne.s32.totalorder %s281, %s295
      %p297 = scmp.eq.s32.totalorder %s32, 0
      %p298 = por %p296, %p297
      %s300 = sadd.s32 %s299, 1
      %p303 = scmp.eq.s32.totalorder %s26, 3
      %p304 = scmp.ne.s32.totalorder %s299, %s301
      %p305 = scmp.eq.s32.totalorder %s26, 0
      %p306 = por %p304, %p305
      %p307 = scmp.ne.s32.totalorder %s299, %s301
      %p308 = scmp.eq.s32.totalorder %s31, 3
      %p309 = por %p307, %p308
      %p310 = scmp.ne.s32.totalorder %s301, %s302
      %p311 = scmp.eq.s32.totalorder %s31, 0
      %p312 = por %p310, %p311
      %p313 = scmp.ne.s32.totalorder %s301, %s302
      %p314 = scmp.eq.s32.totalorder %s32, 3
      %p315 = por %p313, %p314
      %p317 = scmp.ne.s32.totalorder %s302, %s316
      %p318 = scmp.eq.s32.totalorder %s32, 0
      %p319 = por %p317, %p318
      %s321 = sadd.s32 %s320, 1
      %p324 = scmp.eq.s32.totalorder %s26, 3
      %p325 = scmp.ne.s32.totalorder %s320, %s322
      %p326 = scmp.eq.s32.totalorder %s26, 0
      %p327 = por %p325, %p326
      %p328 = scmp.ne.s32.totalorder %s320, %s322
      %p329 = scmp.eq.s32.totalorder %s31, 3
      %p330 = por %p328, %p329
      %p331 = scmp.ne.s32.totalorder %s322, %s323
      %p332 = scmp.eq.s32.totalorder %s31, 0
      %p333 = por %p331, %p332
      %p334 = scmp.ne.s32.totalorder %s322, %s323
      %p335 = scmp.eq.s32.totalorder %s32, 3
      %p336 = por %p334, %p335
      %p338 = scmp.ne.s32.totalorder %s323, %s337
      %p339 = scmp.eq.s32.totalorder %s32, 0
      %p340 = por %p338, %p339
      %s342 = sadd.s32 %s341, 1
      %p345 = scmp.eq.s32.totalorder %s26, 3
      %p346 = scmp.ne.s32.totalorder %s341, %s343
      %p347 = scmp.eq.s32.totalorder %s26, 0
      %p348 = por %p346, %p347
      %p349 = scmp.ne.s32.totalorder %s341, %s343
      %p350 = scmp.eq.s32.totalorder %s31, 3
      %p351 = por %p349, %p350
      %p352 = scmp.ne.s32.totalorder %s343, %s344
      %p353 = scmp.eq.s32.totalorder %s31, 0
      %p354 = por %p352, %p353
      %p355 = scmp.ne.s32.totalorder %s343, %s344
      %p356 = scmp.eq.s32.totalorder %s32, 3
      %p357 = por %p355, %p356
      %p359 = scmp.ne.s32.totalorder %s344, %s358
      %p360 = scmp.eq.s32.totalorder %s32, 0
      %p361 = por %p359, %p360
      %s363 = sadd.s32 %s362, 1
      %p366 = scmp.eq.s32.totalorder %s26, 3
      %p367 = scmp.ne.s32.totalorder %s362, %s364
      %p368 = scmp.eq.s32.totalorder %s26, 0
      %p369 = por %p367, %p368
      %p370 = scmp.ne.s32.totalorder %s362, %s364
      %p371 = scmp.eq.s32.totalorder %s31, 3
      %p372 = por %p370, %p371
      %p373 = scmp.ne.s32.totalorder %s364, %s365
      %p374 = scmp.eq.s32.totalorder %s31, 0
      %p375 = por %p373, %p374
      %p376 = scmp.ne.s32.totalorder %s364, %s365
      %p377 = scmp.eq.s32.totalorder %s32, 3
      %p378 = por %p376, %p377
      %p380 = scmp.ne.s32.totalorder %s365, %s379
      %p381 = scmp.eq.s32.totalorder %s32, 0
      %p382 = por %p380, %p381
      %s384 = sadd.s32 %s383, 1
      %p387 = scmp.eq.s32.totalorder %s26, 3
      %p388 = scmp.ne.s32.totalorder %s383, %s385
      %p389 = scmp.eq.s32.totalorder %s26, 0
      %p390 = por %p388, %p389
      %p391 = scmp.ne.s32.totalorder %s383, %s385
      %p392 = scmp.eq.s32.totalorder %s31, 3
      %p393 = por %p391, %p392
      %p394 = scmp.ne.s32.totalorder %s385, %s386
      %p395 = scmp.eq.s32.totalorder %s31, 0
      %p396 = por %p394, %p395
      %p397 = scmp.ne.s32.totalorder %s385, %s386
      %p398 = scmp.eq.s32.totalorder %s32, 3
      %p399 = por %p397, %p398
      %p401 = scmp.ne.s32.totalorder %s386, %s400
      %p402 = scmp.eq.s32.totalorder %s32, 0
      %p403 = por %p401, %p402
      %s405 = sadd.s32 %s404, 1
      %p408 = scmp.eq.s32.totalorder %s26, 3
      %p409 = scmp.ne.s32.totalorder %s404, %s406
      %p410 = scmp.eq.s32.totalorder %s26, 0
      %p411 = por %p409, %p410
      %p412 = scmp.ne.s32.totalorder %s404, %s406
      %p413 = scmp.eq.s32.totalorder %s31, 3
      %p414 = por %p412, %p413
      %p415 = scmp.ne.s32.totalorder %s406, %s407
      %p416 = scmp.eq.s32.totalorder %s31, 0
      %p417 = por %p415, %p416
      %p418 = scmp.ne.s32.totalorder %s406, %s407
      %p419 = scmp.eq.s32.totalorder %s32, 3
      %p420 = por %p418, %p419
      %p422 = scmp.ne.s32.totalorder %s407, %s421
      %p423 = scmp.eq.s32.totalorder %s32, 0
      %p424 = por %p422, %p423
      %s426 = sadd.s32 %s425, 1
      %p429 = scmp.eq.s32.totalorder %s26, 3
      %p430 = scmp.ne.s32.totalorder %s425, %s427
      %p431 = scmp.eq.s32.totalorder %s26, 0
      %p432 = por %p430, %p431
      %p433 = scmp.ne.s32.totalorder %s425, %s427
      %p434 = scmp.eq.s32.totalorder %s31, 3
      %p435 = por %p433, %p434
      %p436 = scmp.ne.s32.totalorder %s427, %s428
      %p437 = scmp.eq.s32.totalorder %s31, 0
      %p438 = por %p436, %p437
      %p439 = scmp.ne.s32.totalorder %s427, %s428
      %p440 = scmp.eq.s32.totalorder %s32, 3
      %p441 = por %p439, %p440
      %p443 = scmp.ne.s32.totalorder %s428, %s442
      %p444 = scmp.eq.s32.totalorder %s32, 0
      %p445 = por %p443, %p444
      %s447 = sadd.s32 %s446, 1
      %p450 = scmp.eq.s32.totalorder %s26, 3
      %p451 = scmp.ne.s32.totalorder %s446, %s448
      %p452 = scmp.eq.s32.totalorder %s26, 0
      %p453 = por %p451, %p452
      %p454 = scmp.ne.s32.totalorder %s446, %s448
      %p455 = scmp.eq.s32.totalorder %s31, 3
      %p456 = por %p454, %p455
      %p457 = scmp.ne.s32.totalorder %s448, %s449
      %p458 = scmp.eq.s32.totalorder %s31, 0
      %p459 = por %p457, %p458
      %p460 = scmp.ne.s32.totalorder %s448, %s449
      %p461 = scmp.eq.s32.totalorder %s32, 3
      %p462 = por %p460, %p461
      %p464 = scmp.ne.s32.totalorder %s449, %s463
      %p465 = scmp.eq.s32.totalorder %s32, 0
      %p466 = por %p464, %p465
      %s468 = sadd.s32 %s467, 1
      %p471 = scmp.eq.s32.totalorder %s26, 3
      %p472 = scmp.ne.s32.totalorder %s467, %s469
      %p473 = scmp.eq.s32.totalorder %s26, 0
      %p474 = por %p472, %p473
      %p475 = scmp.ne.s32.totalorder %s467, %s469
      %p476 = scmp.eq.s32.totalorder %s31, 3
      %p477 = por %p475, %p476
      %p478 = scmp.ne.s32.totalorder %s469, %s470
      %p479 = scmp.eq.s32.totalorder %s31, 0
      %p480 = por %p478, %p479
      %p481 = scmp.ne.s32.totalorder %s469, %s470
      %p482 = scmp.eq.s32.totalorder %s32, 3
      %p483 = por %p481, %p482
      %p485 = scmp.ne.s32.totalorder %s470, %s484
      %p486 = scmp.eq.s32.totalorder %s32, 0
      %p487 = por %p485, %p486
      %s488 = ssub.s32 %s33, %s45
      %s489 = ssub.s32 %s34, %s41
      %s490 = sor.u32 %s488, %s489
      %p491 = scmp.eq.s32.totalorder %s490, 0
      %s493 = sadd.s32 %s492, 1
      %s494 = scalar_select %p491, %s492, %s493
      %p497 = pneg %p491
      %p498 = scmp.eq.s32.totalorder %s26, 3
      %p499 = por %p497, %p498
      %p500 = scmp.ne.s32.totalorder %s492, %s495
      %p501 = scmp.eq.s32.totalorder %s26, 0
      %p502 = por %p500, %p501
      %p503 = scmp.ne.s32.totalorder %s492, %s495
      %p504 = scmp.eq.s32.totalorder %s31, 3
      %p505 = por %p503, %p504
      %p506 = scmp.ne.s32.totalorder %s495, %s496
      %p507 = scmp.eq.s32.totalorder %s31, 0
      %p508 = por %p506, %p507
      %p509 = scmp.ne.s32.totalorder %s495, %s496
      %p510 = scmp.eq.s32.totalorder %s32, 3
      %p511 = por %p509, %p510
      %p513 = scmp.ne.s32.totalorder %s496, %s512
      %p514 = scmp.eq.s32.totalorder %s32, 0
      %p515 = por %p513, %p514
      %p516 = scmp.le.s32.totalorder 1, %s26
      %p517 = scmp.lt.s32.totalorder %s26, 5
      %p518 = pnand %p516, %p517
      %p519 = pneg %p518
      // Predicated region
      $region9: #{encoder_forward.8} parent=5 // pred_check
        _
      $region10: #{encoder_forward.8} parent=5 // pred_check_branch
        %521 = sbr.rel (%p518) target = $region12
      $region11: #{encoder_forward.8} parent=5 // pred_region
        %s522 = ssub.s32 %s26, 1
        // Predicated region
        $region13: #{encoder_forward.8} parent=11 // pred_check
          %p523 = pneg %p165
        $region14: #{encoder_forward.8} parent=11 // pred_check_branch
          %525 = sbr.rel (%p523) target = $region16
        $region15: #{encoder_forward.8} parent=11 // pred_region
          _
        $region16: #{encoder_forward.8} parent=11 // pred_fallthru
          _
        // Predicated region
        $region17: #{encoder_forward.8} parent=11 // pred_check
          %p526 = pneg %p186
        $region18: #{encoder_forward.8} parent=11 // pred_check_branch
          %528 = sbr.rel (%p526) target = $region20
        $region19: #{encoder_forward.8} parent=11 // pred_region
          _
        $region20: #{encoder_forward.8} parent=11 // pred_fallthru
          _
        // Predicated region
        $region21: #{encoder_forward.8} parent=11 // pred_check
          %p529 = pneg %p207
        $region22: #{encoder_forward.8} parent=11 // pred_check_branch
          %531 = sbr.rel (%p529) target = $region24
        $region23: #{encoder_forward.8} parent=11 // pred_region
          _
        $region24: #{encoder_forward.8} parent=11 // pred_fallthru
          _
        // Predicated region
        $region25: #{encoder_forward.8} parent=11 // pred_check
          %p532 = pneg %p228
        $region26: #{encoder_forward.8} parent=11 // pred_check_branch
          %534 = sbr.rel (%p532) target = $region28
        $region27: #{encoder_forward.8} parent=11 // pred_region
          _
        $region28: #{encoder_forward.8} parent=11 // pred_fallthru
          _
        // Predicated region
        $region29: #{encoder_forward.8} parent=11 // pred_check
          %p535 = pneg %p249
        $region30: #{encoder_forward.8} parent=11 // pred_check_branch
          %537 = sbr.rel (%p535) target = $region32
        $region31: #{encoder_forward.8} parent=11 // pred_region
          _
        $region32: #{encoder_forward.8} parent=11 // pred_fallthru
          _
        // Predicated region
        $region33: #{encoder_forward.8} parent=11 // pred_check
          %p538 = pneg %p270
        $region34: #{encoder_forward.8} parent=11 // pred_check_branch
          %540 = sbr.rel (%p538) target = $region36
        $region35: #{encoder_forward.8} parent=11 // pred_region
          _
        $region36: #{encoder_forward.8} parent=11 // pred_fallthru
          _
        // Predicated region
        $region37: #{encoder_forward.8} parent=11 // pred_check
          %p541 = pneg %p291
        $region38: #{encoder_forward.8} parent=11 // pred_check_branch
          %543 = sbr.rel (%p541) target = $region40
        $region39: #{encoder_forward.8} parent=11 // pred_region
          _
        $region40: #{encoder_forward.8} parent=11 // pred_fallthru
          _
        // Predicated region
        $region41: #{encoder_forward.8} parent=11 // pred_check
          %p544 = pneg %p312
        $region42: #{encoder_forward.8} parent=11 // pred_check_branch
          %546 = sbr.rel (%p544) target = $region44
        $region43: #{encoder_forward.8} parent=11 // pred_region
          _
        $region44: #{encoder_forward.8} parent=11 // pred_fallthru
          _
        // Predicated region
        $region45: #{encoder_forward.8} parent=11 // pred_check
          %p547 = pneg %p333
        $region46: #{encoder_forward.8} parent=11 // pred_check_branch
          %549 = sbr.rel (%p547) target = $region48
        $region47: #{encoder_forward.8} parent=11 // pred_region
          _
        $region48: #{encoder_forward.8} parent=11 // pred_fallthru
          _
        // Predicated region
        $region49: #{encoder_forward.8} parent=11 // pred_check
          %p550 = pneg %p354
        $region50: #{encoder_forward.8} parent=11 // pred_check_branch
          %552 = sbr.rel (%p550) target = $region52
        $region51: #{encoder_forward.8} parent=11 // pred_region
          _
        $region52: #{encoder_forward.8} parent=11 // pred_fallthru
          _
        // Predicated region
        $region53: #{encoder_forward.8} parent=11 // pred_check
          %p553 = pneg %p375
        $region54: #{encoder_forward.8} parent=11 // pred_check_branch
          %555 = sbr.rel (%p553) target = $region56
        $region55: #{encoder_forward.8} parent=11 // pred_region
          _
        $region56: #{encoder_forward.8} parent=11 // pred_fallthru
          _
        // Predicated region
        $region57: #{encoder_forward.8} parent=11 // pred_check
          %p556 = pneg %p396
        $region58: #{encoder_forward.8} parent=11 // pred_check_branch
          %558 = sbr.rel (%p556) target = $region60
        $region59: #{encoder_forward.8} parent=11 // pred_region
          _
        $region60: #{encoder_forward.8} parent=11 // pred_fallthru
          _
        // Predicated region
        $region61: #{encoder_forward.8} parent=11 // pred_check
          %p559 = pneg %p417
        $region62: #{encoder_forward.8} parent=11 // pred_check_branch
          %561 = sbr.rel (%p559) target = $region64
        $region63: #{encoder_forward.8} parent=11 // pred_region
          _
        $region64: #{encoder_forward.8} parent=11 // pred_fallthru
          _
        // Predicated region
        $region65: #{encoder_forward.8} parent=11 // pred_check
          %p562 = pneg %p438
        $region66: #{encoder_forward.8} parent=11 // pred_check_branch
          %564 = sbr.rel (%p562) target = $region68
        $region67: #{encoder_forward.8} parent=11 // pred_region
          _
        $region68: #{encoder_forward.8} parent=11 // pred_fallthru
          _
        // Predicated region
        $region69: #{encoder_forward.8} parent=11 // pred_check
          %p565 = pneg %p459
        $region70: #{encoder_forward.8} parent=11 // pred_check_branch
          %567 = sbr.rel (%p565) target = $region72
        $region71: #{encoder_forward.8} parent=11 // pred_region
          _
        $region72: #{encoder_forward.8} parent=11 // pred_fallthru
          _
        // Predicated region
        $region73: #{encoder_forward.8} parent=11 // pred_check
          %p568 = pneg %p480
        $region74: #{encoder_forward.8} parent=11 // pred_check_branch
          %570 = sbr.rel (%p568) target = $region76
        $region75: #{encoder_forward.8} parent=11 // pred_region
          _
        $region76: #{encoder_forward.8} parent=11 // pred_fallthru
          _
      $region12: #{encoder_forward.8} parent=5 // pred_fallthru
        _
      %p571 = scmp.lt.s32.totalorder %s26, 4
      // Predicated region
      $region77: #{encoder_forward.8} parent=5 // pred_check
        %p572 = pneg %p571
      $region78: #{encoder_forward.8} parent=5 // pred_check_branch
        %574 = sbr.rel (%p572) target = $region80
      $region79: #{encoder_forward.8} parent=5 // pred_region
        // Predicated region
        $region81: #{encoder_forward.8} parent=79 // pred_check
          %p575 = pneg %p60
        $region82: #{encoder_forward.8} parent=79 // pred_check_branch
          %577 = sbr.rel (%p575) target = $region84
        $region83: #{encoder_forward.8} parent=79 // pred_region
          %p578 = scmp.lt.s32.totalorder %s33, 1
          %s579 = scalar_select %p578, %s33, 1
          %p580 = scmp.lt.s32.totalorder %s34, 1
          %s581 = scalar_select %p580, %s34, 1
          %s582 = smul.addr %s579, 2
          %s583 = sadd.s32 %s581, %s582
          %s584 = smul.addr %s583, 8
          %s585 = scalar_lea.vmem %s0, %s584
        $region84: #{encoder_forward.8} parent=79 // pred_fallthru
          _
        // Predicated region
        $region85: #{encoder_forward.8} parent=79 // pred_check
          %p586 = pneg %p86
        $region86: #{encoder_forward.8} parent=79 // pred_check_branch
          %588 = sbr.rel (%p586) target = $region88
        $region87: #{encoder_forward.8} parent=79 // pred_region
          %p589 = scmp.lt.s32.totalorder %s33, 1
          %s590 = scalar_select %p589, %s33, 1
          %s591 = smul.addr %s590, 2
          %s592 = smul.addr %s591, 8
          %s593 = scalar_lea.vmem %s1, %s592
        $region88: #{encoder_forward.8} parent=79 // pred_fallthru
          _
        // Predicated region
        $region89: #{encoder_forward.8} parent=79 // pred_check
          %p594 = pneg %p112
        $region90: #{encoder_forward.8} parent=79 // pred_check_branch
          %596 = sbr.rel (%p594) target = $region92
        $region91: #{encoder_forward.8} parent=79 // pred_region
          %s597 = sand.u32 %s102, 1
          %s598 = sand.u32 %s102, 1
          %s599 = smul.addr %s598, 16
          %s600 = scalar_lea.vmem [#allocation2], %s599
          %s601 = smul.addr %s34, 8
          %s602 = scalar_lea.vmem %s2, %s601
          // Predicated region
          $region93: #{encoder_forward.8} parent=91 // pred_check
            _
          $region94: #{encoder_forward.8} parent=91 // pred_check_branch
            %604 = sbr.rel (0) target = $region96
          $region95: #{encoder_forward.8} parent=91 // pred_region
            // Predicated region
            $region97: #{encoder_forward.8} parent=95 // pred_check
              _
            $region98: #{encoder_forward.8} parent=95 // pred_check_branch
              %606 = sbr.rel (0) target = $region100
            $region99: #{encoder_forward.8} parent=95 // pred_region
              // Predicated region
              $region112: #{encoder_forward.8} parent=99 // pred_check
                _
              $region113: #{encoder_forward.8} parent=99 // pred_check_branch
                %623 = sbr.rel (0) target = $region115
              $region114: #{encoder_forward.8} parent=99 // pred_region
                loop: start=0, step=1, limit=1
                $region116: #{encoder_forward.8} parent=114 // loop_pre_header
                  _
                $region117: #{encoder_forward.8} parent=114 // loop_header
                  %s625 = sphi 0, %s629
                  %p626 = scmp.ge.s32.totalorder %s625, 1
                  %s630 = sphi %s602, %s602
                  %s631 = sphi %s600, %s600
                $region118: #{encoder_forward.8} parent=114 // loop_header_branch
                  %628 = sbr.rel (%p626) target = $region122
                $region119: #{encoder_forward.8} parent=114 // loop_body
                  %v632 = vld [vmem:[%s630] sm:$0xff]
                  %633 = vst [vmem:[%s631] sm:$0xff] %v632
                  %v634 = vld [vmem:[%s630 + $0x10] sm:$0xff]
                  %635 = vst [vmem:[%s631 + $0x8] sm:$0xff] %v634
                $region120: #{encoder_forward.8} parent=114 // loop_footer
                  %s629 = sadd.s32 1, %s625
                $region121: #{encoder_forward.8} parent=114 // loop_footer_branch
                  %624 = sbr.rel target = $region117
                $region122: #{encoder_forward.8} parent=114 // loop_exit
                  _
              $region115: #{encoder_forward.8} parent=99 // pred_fallthru
                _
              // Predicated region
              $region123: #{encoder_forward.8} parent=99 // pred_check
                _
              $region124: #{encoder_forward.8} parent=99 // pred_check_branch
                %637 = sbr.rel target = $region126
              $region125: #{encoder_forward.8} parent=99 // pred_region
                _
              $region126: #{encoder_forward.8} parent=99 // pred_fallthru
                _
            $region100: #{encoder_forward.8} parent=95 // pred_fallthru
              _
            // Predicated region
            $region101: #{encoder_forward.8} parent=95 // pred_check
              _
            $region102: #{encoder_forward.8} parent=95 // pred_check_branch
              %608 = sbr.rel target = $region104
            $region103: #{encoder_forward.8} parent=95 // pred_region
              loop: start=0, step=1, limit=1
              $region105: #{encoder_forward.8} parent=103 // loop_pre_header
                _
              $region106: #{encoder_forward.8} parent=103 // loop_header
                %s611 = sphi 0, %s615
                %p612 = scmp.ge.s32.totalorder %s611, 1
                %s616 = sphi %s602, %s602
                %s617 = sphi %s600, %s600
              $region107: #{encoder_forward.8} parent=103 // loop_header_branch
                %614 = sbr.rel (%p612) target = $region111
              $region108: #{encoder_forward.8} parent=103 // loop_body
                %v618 = vld [vmem:[%s616] sm:$0xff]
                %619 = vst [vmem:[%s617] sm:$0xff] %v618
                %v620 = vld [vmem:[%s616 + $0x10] sm:$0xff]
                %621 = vst [vmem:[%s617 + $0x8] sm:$0xff] %v620
              $region109: #{encoder_forward.8} parent=103 // loop_footer
                %s615 = sadd.s32 1, %s611
              $region110: #{encoder_forward.8} parent=103 // loop_footer_branch
                %610 = sbr.rel target = $region106
              $region111: #{encoder_forward.8} parent=103 // loop_exit
                _
            $region104: #{encoder_forward.8} parent=95 // pred_fallthru
              _
          $region96: #{encoder_forward.8} parent=91 // pred_fallthru
            _
          %638 = vnop
        $region92: #{encoder_forward.8} parent=79 // pred_fallthru
          _
        // Predicated region
        $region127: #{encoder_forward.8} parent=79 // pred_check
          %p639 = pneg %p138
        $region128: #{encoder_forward.8} parent=79 // pred_check_branch
          %641 = sbr.rel (%p639) target = $region130
        $region129: #{encoder_forward.8} parent=79 // pred_region
          %p642 = scmp.lt.s32.totalorder %s34, 1
          %s643 = scalar_select %p642, %s34, 1
          %s644 = smul.addr %s643, 8
          %s645 = scalar_lea.vmem %s3, %s644
        $region130: #{encoder_forward.8} parent=79 // pred_fallthru
          _
      $region80: #{encoder_forward.8} parent=5 // pred_fallthru
        _
      %p646 = scmp.le.s32.totalorder 1, %s26
      %p647 = scmp.lt.s32.totalorder %s26, 5
      %p648 = pnand %p646, %p647
      %p649 = pneg %p648
      // Predicated region
      $region131: #{encoder_forward.8} parent=5 // pred_check
        _
      $region132: #{encoder_forward.8} parent=5 // pred_check_branch
        %651 = sbr.rel (%p648) target = $region134
      $region133: #{encoder_forward.8} parent=5 // pred_region
        %s652 = ssub.s32 %s26, 1
        %s653 = sand.u32 %s105, 1
        %s654 = sand.u32 %s105, 1
        %s655 = smul.addr %s654, 16
        %s656 = scalar_lea.vmem [#allocation2], %s655
        // Predicated region
        $region135: #{encoder_forward.8} parent=133 // pred_check
          %p657 = pneg %p118
        $region136: #{encoder_forward.8} parent=133 // pred_check_branch
          %659 = sbr.rel (%p657) target = $region138
        $region137: #{encoder_forward.8} parent=133 // pred_region
          _
        $region138: #{encoder_forward.8} parent=133 // pred_fallthru
          _
        %p660 = scmp.lt.s32.totalorder %s35, 1
        %s661 = scalar_select %p660, %s35, 1
        %p662 = scmp.lt.s32.totalorder %s36, 1
        %s663 = scalar_select %p662, %s36, 1
        %s664 = smul.addr %s661, 2
        %s665 = sadd.s32 %s663, %s664
        %s666 = smul.addr %s665, 8
        %s667 = scalar_lea.vmem %s0, %s666
        %p668 = pneg %p66
        %p669 = pneg %p63
        %p670 = scmp.lt.s32.totalorder %s35, 1
        %s671 = scalar_select %p670, %s35, 1
        %s672 = smul.addr %s671, 2
        %s673 = smul.addr %s672, 8
        %s674 = scalar_lea.vmem %s1, %s673
        %p675 = pneg %p92
        %p676 = pneg %p89
        %s677 = sand.u32 %s105, 1
        %s678 = sand.u32 %s105, 1
        %s679 = smul.addr %s678, 16
        %s680 = scalar_lea.vmem [#allocation2], %s679
        %p681 = pneg %p118
        %p682 = pneg %p115
        %p683 = scmp.lt.s32.totalorder %s36, 1
        %s684 = scalar_select %p683, %s36, 1
        %s685 = smul.addr %s684, 8
        %s686 = scalar_lea.vmem %s3, %s685
        %p687 = pneg %p144
        %p688 = pneg %p141
        %p689 = pneg %p165
        %p690 = pneg %p162
        %p691 = pneg %p186
        %p692 = pneg %p183
        %p693 = pneg %p207
        %p694 = pneg %p204
        %p695 = pneg %p228
        %p696 = pneg %p225
        %p697 = pneg %p249
        %p698 = pneg %p246
        %p699 = pneg %p270
        %p700 = pneg %p267
        %p701 = pneg %p291
        %p702 = pneg %p288
        %p703 = pneg %p312
        %p704 = pneg %p309
        %p705 = pneg %p333
        %p706 = pneg %p330
        %p707 = pneg %p354
        %p708 = pneg %p351
        %p709 = pneg %p375
        %p710 = pneg %p372
        %p711 = pneg %p396
        %p712 = pneg %p393
        %p713 = pneg %p417
        %p714 = pneg %p414
        %p715 = pneg %p438
        %p716 = pneg %p435
        %p717 = pneg %p459
        %p718 = pneg %p456
        %p719 = pneg %p480
        %p720 = pneg %p477
        %p721 = pneg %p508
        %p722 = pneg %p505
        %p723 = scmp.lt.s32.totalorder %s35, 1
        %s724 = scalar_select %p723, %s35, 1
        %p725 = scmp.lt.s32.totalorder %s36, 1
        %s726 = scalar_select %p725, %s36, 1
        %s727 = smul.addr %s724, 2
        %s728 = sadd.s32 %s726, %s727
        %s729 = smul.addr %s728, 8
        %s730 = scalar_lea.vmem %s20, %s729
        %p731 = scmp.lt.s32.totalorder %s35, 1
        %s732 = scalar_select %p731, %s35, 1
        %p733 = scmp.lt.s32.totalorder %s36, 1
        %s734 = scalar_select %p733, %s36, 1
        %s735 = smul.addr %s732, 2
        %s736 = sadd.s32 %s734, %s735
        %s737 = smul.addr %s736, 8
        %s738 = scalar_lea.vmem %s0, %s737
        %p739 = scmp.lt.s32.totalorder %s35, 1
        %s740 = scalar_select %p739, %s35, 1
        %s741 = smul.addr %s740, 2
        %s742 = smul.addr %s741, 8
        %s743 = scalar_lea.vmem %s1, %s742
        %p744 = scmp.lt.s32.totalorder %s36, 1
        %s745 = scalar_select %p744, %s36, 1
        %s746 = smul.addr %s745, 8
        %s747 = scalar_lea.vmem %s3, %s746
        %p748 = scmp.lt.s32.totalorder %s35, 1
        %s749 = scalar_select %p748, %s35, 1
        %p750 = scmp.lt.s32.totalorder %s36, 1
        %s751 = scalar_select %p750, %s36, 1
        %s752 = smul.addr %s749, 2
        %s753 = sadd.s32 %s751, %s752
        %s754 = smul.addr %s753, 8
        %s755 = scalar_lea.vmem %s20, %s754
        %v757 = vld [vmem:[%s738] sm:$0xff]
        %v758 = vld [vmem:[%s743] sm:$0xff]
        %v759 = vld [vmem:[%s743 + $0x8] sm:$0xff]
        %v760 = vld [vmem:[%s4] sm:$0x1]
        %v761 = vld [vmem:[%s5] sm:$0x1]
        %vm762 = vcmask 261120
        %v763 = vsel %vm762, %v757, 0.0
        %764 = vadd.xlane.f32.xlu0 %v763
        %v765 = vpop.xlane.xlu0 %764
        %v766 = vrcp.pop 32.0
        %v767 = vmul.f32 %v765, %v766
        %v768 = vsub.f32 %v757, %v767
        %v769 = vmul.f32 %v768, %v768
        %v770 = vsel %vm762, %v769, 0.0
        %771 = vadd.xlane.f32.xlu0 %v770
        %v772 = vpop.xlane.xlu0 %771
        %v773 = vmul.f32 %v772, %v766
        %v774 = vadd.f32 %v773, 1e-05
        %v775 = vrsqrt.pop %v774
        %v776 = vmul.f32 %v768, %v775
        %v778 = vlaneseq
        %v779 = vshrl.u32 %v778, 7
        %v780 = vsub.s32 0, %v779
        %v781 = vrot.slane %v760, %v780
        %v783 = vmul.f32 %v776, %v781
        %v785 = vlaneseq
        %v786 = vshrl.u32 %v785, 7
        %v787 = vsub.s32 0, %v786
        %v788 = vrot.slane %v761, %v787
        %v790 = vadd.f32 %v783, %v788
        %v791 = vpack.c.bf16 %v790, %v790
        %v792 = vsel %vm762, %v758, 0.0
        %793 = vadd.xlane.f32.xlu0 %v792
        %v794 = vpop.xlane.xlu0 %793
        %v795 = vsel %vm762, %v759, 0.0
        %796 = vadd.xlane.f32.xlu0 %v795
        %v797 = vpop.xlane.xlu0 %796
        %v798 = vmul.f32 %v794, %v766
        %v799 = vmul.f32 %v797, %v766
        %v800 = vsub.f32 %v758, %v798
        %v801 = vsub.f32 %v759, %v799
        %v802 = vmul.f32 %v800, %v800
        %v803 = vmul.f32 %v801, %v801
        %v804 = vsel %vm762, %v802, 0.0
        %805 = vadd.xlane.f32.xlu0 %v804
        %v806 = vpop.xlane.xlu0 %805
        %v807 = vsel %vm762, %v803, 0.0
        %808 = vadd.xlane.f32.xlu0 %v807
        %v809 = vpop.xlane.xlu0 %808
        %v810 = vmul.f32 %v806, %v766
        %v811 = vmul.f32 %v809, %v766
        %v812 = vadd.f32 %v810, 1e-05
        %v813 = vadd.f32 %v811, 1e-05
        %v814 = vrsqrt.pop %v812
        %v815 = vrsqrt.pop %v813
        %v816 = vmul.f32 %v800, %v814
        %v817 = vmul.f32 %v801, %v815
        %v818 = vmul.f32 %v816, %v781
        %v819 = vmul.f32 %v817, %v781
        %v820 = vadd.f32 %v818, %v788
        %v821 = vadd.f32 %v819, %v788
        %v822 = vpack.c.bf16 %v821, %v820
        %v823 = vld [vmem:[%s6] sm:$0xf]
        %v824 = vld [vmem:[%s6 + $0x4] sm:$0xf]
        %v825 = vld [vmem:[%s6 + $0x8] sm:$0xf]
        %v826 = vld [vmem:[%s6 + $0xc] sm:$0xf]
        %v827 = vld [vmem:[%s7] sm:$0x1]
        %v829 = vlaneseq
        %v830 = vshrl.u32 %v829, 7
        %v831 = vsub.s32 0, %v830
        %v832 = vrot.slane %v827, %v831
        %v838 = vunpack.c.l.b16 %v823
        %v839 = vunpack.c.l.b16 %v824
        %v840 = vunpack.c.l.b16 %v825
        %v841 = vunpack.c.l.b16 %v826
        %v842 = vpack.c.b16 %v839, %v838
        %v843 = vpack.c.b16 %v841, %v840
        %v847 = vsel %vm762, %v791, 0
        %849 = vmatprep.subr.bf16.mxu0 0
        %850 = vmatpush1.bf16.msra.mxu0 %v842
        %851 = vmatprep.subr.bf16.mxu0 0
        %852 = vmatpush1.bf16.msra.mxu0 %v843
        %853 = vmatprep.subr.bf16.mxu0 0
        %854 = vmatpush1.bf16.msra.mxu0 0
        %855 = vmatprep.subr.bf16.mxu0 0
        %856 = vmatpush1.bf16.msra.mxu0 0
        %857 = vmatprep.subr.bf16.mxu0 0
        %858 = vmatpush1.bf16.msra.mxu0 0
        %859 = vmatprep.subr.bf16.mxu0 0
        %860 = vmatpush1.bf16.msra.mxu0 0
        %861 = vmatprep.subr.bf16.mxu0 0
        %862 = vmatpush1.bf16.msra.mxu0 0
        %863 = vmatprep.subr.bf16.mxu0 0
        %864 = vmatpush1.bf16.msra.mxu0 0
        %865 = vmatprep.subr.bf16.mxu0 0
        %866 = vmatpush1.bf16.msra.mxu0 0
        %867 = vmatprep.subr.bf16.mxu0 0
        %868 = vmatpush1.bf16.msra.mxu0 0
        %869 = vmatprep.subr.bf16.mxu0 0
        %870 = vmatpush1.bf16.msra.mxu0 0
        %871 = vmatprep.subr.bf16.mxu0 0
        %872 = vmatpush1.bf16.msra.mxu0 0
        %873 = vmatprep.subr.bf16.mxu0 0
        %874 = vmatpush1.bf16.msra.mxu0 0
        %875 = vmatprep.subr.bf16.mxu0 0
        %876 = vmatpush1.bf16.msra.mxu0 0
        %877 = vmatprep.subr.bf16.mxu0 0
        %878 = vmatpush1.bf16.msra.mxu0 0
        %879 = vmatprep.subr.bf16.mxu0 0
        %880 = vmatpush1.bf16.msra.mxu0 0
        %881 = vmatprep.mubr.bf16.mxu0 0
        %882 = vmatmul.mubr.bf16.gmra.mrb[0].mxu0 %v847
        %v883 = vpop.f32.mrb[0].mxu0
        %v884 = vadd.f32 %v832, %v883
        %v885 = vpop.f32.mrb[0].mxu0
        %v886 = vpop.f32.mrb[0].mxu0
        %v887 = vpop.f32.mrb[0].mxu0
        %888 = vdwg.mxu0
        %v889 = vld [vmem:[%s8] sm:$0xf]
        %v890 = vld [vmem:[%s8 + $0x4] sm:$0xf]
        %v891 = vld [vmem:[%s8 + $0x8] sm:$0xf]
        %v892 = vld [vmem:[%s8 + $0xc] sm:$0xf]
        %v893 = vld [vmem:[%s9] sm:$0x1]
        %v895 = vlaneseq
        %v896 = vshrl.u32 %v895, 7
        %v897 = vsub.s32 0, %v896
        %v898 = vrot.slane %v893, %v897
        %v904 = vunpack.c.l.b16 %v889
        %v905 = vunpack.c.l.b16 %v890
        %v906 = vunpack.c.l.b16 %v891
        %v907 = vunpack.c.l.b16 %v892
        %v908 = vpack.c.b16 %v905, %v904
        %v909 = vpack.c.b16 %v907, %v906
        %v913 = vsel %vm762, %v822, 0
        %915 = vmatprep.subr.bf16.mxu0 0
        %916 = vmatpush1.bf16.msra.mxu0 %v908
        %917 = vmatprep.subr.bf16.mxu0 0
        %918 = vmatpush1.bf16.msra.mxu0 %v909
        %919 = vmatprep.subr.bf16.mxu0 0
        %920 = vmatpush1.bf16.msra.mxu0 0
        %921 = vmatprep.subr.bf16.mxu0 0
        %922 = vmatpush1.bf16.msra.mxu0 0
        %923 = vmatprep.subr.bf16.mxu0 0
        %924 = vmatpush1.bf16.msra.mxu0 0
        %925 = vmatprep.subr.bf16.mxu0 0
        %926 = vmatpush1.bf16.msra.mxu0 0
        %927 = vmatprep.subr.bf16.mxu0 0
        %928 = vmatpush1.bf16.msra.mxu0 0
        %929 = vmatprep.subr.bf16.mxu0 0
        %930 = vmatpush1.bf16.msra.mxu0 0
        %931 = vmatprep.subr.bf16.mxu0 0
        %932 = vmatpush1.bf16.msra.mxu0 0
        %933 = vmatprep.subr.bf16.mxu0 0
        %934 = vmatpush1.bf16.msra.mxu0 0
        %935 = vmatprep.subr.bf16.mxu0 0
        %936 = vmatpush1.bf16.msra.mxu0 0
        %937 = vmatprep.subr.bf16.mxu0 0
        %938 = vmatpush1.bf16.msra.mxu0 0
        %939 = vmatprep.subr.bf16.mxu0 0
        %940 = vmatpush1.bf16.msra.mxu0 0
        %941 = vmatprep.subr.bf16.mxu0 0
        %942 = vmatpush1.bf16.msra.mxu0 0
        %943 = vmatprep.subr.bf16.mxu0 0
        %944 = vmatpush1.bf16.msra.mxu0 0
        %945 = vmatprep.subr.bf16.mxu0 0
        %946 = vmatpush1.bf16.msra.mxu0 0
        %947 = vmatprep.mubr.bf16.mxu0 0
        %948 = vmatmul.mubr.bf16.gmra.mrb[0].mxu0 %v913
        %v949 = vpop.f32.mrb[0].mxu0
        %v950 = vadd.f32 %v898, %v949
        %v951 = vpop.f32.mrb[0].mxu0
        %v952 = vpop.f32.mrb[0].mxu0
        %v953 = vadd.f32 %v898, %v952
        %v954 = vpop.f32.mrb[0].mxu0
        %955 = vdwg.mxu0
        %v956 = vld [vmem:[%s10] sm:$0xf]
        %v957 = vld [vmem:[%s10 + $0x4] sm:$0xf]
        %v958 = vld [vmem:[%s10 + $0x8] sm:$0xf]
        %v959 = vld [vmem:[%s10 + $0xc] sm:$0xf]
        %v960 = vld [vmem:[%s11] sm:$0x1]
        %v962 = vlaneseq
        %v963 = vshrl.u32 %v962, 7
        %v964 = vsub.s32 0, %v963
        %v965 = vrot.slane %v960, %v964
        %v971 = vunpack.c.l.b16 %v956
        %v972 = vunpack.c.l.b16 %v957
        %v973 = vunpack.c.l.b16 %v958
        %v974 = vunpack.c.l.b16 %v959
        %v975 = vpack.c.b16 %v972, %v971
        %v976 = vpack.c.b16 %v974, %v973
        %979 = vmatprep.subr.bf16.mxu0 0
        %980 = vmatpush1.bf16.msra.mxu0 %v975
        %981 = vmatprep.subr.bf16.mxu0 0
        %982 = vmatpush1.bf16.msra.mxu0 %v976
        %983 = vmatprep.subr.bf16.mxu0 0
        %984 = vmatpush1.bf16.msra.mxu0 0
        %985 = vmatprep.subr.bf16.mxu0 0
        %986 = vmatpush1.bf16.msra.mxu0 0
        %987 = vmatprep.subr.bf16.mxu0 0
        %988 = vmatpush1.bf16.msra.mxu0 0
        %989 = vmatprep.subr.bf16.mxu0 0
        %990 = vmatpush1.bf16.msra.mxu0 0
        %991 = vmatprep.subr.bf16.mxu0 0
        %992 = vmatpush1.bf16.msra.mxu0 0
        %993 = vmatprep.subr.bf16.mxu0 0
        %994 = vmatpush1.bf16.msra.mxu0 0
        %995 = vmatprep.subr.bf16.mxu0 0
        %996 = vmatpush1.bf16.msra.mxu0 0
        %997 = vmatprep.subr.bf16.mxu0 0
        %998 = vmatpush1.bf16.msra.mxu0 0
        %999 = vmatprep.subr.bf16.mxu0 0
        %1000 = vmatpush1.bf16.msra.mxu0 0
        %1001 = vmatprep.subr.bf16.mxu0 0
        %1002 = vmatpush1.bf16.msra.mxu0 0
        %1003 = vmatprep.subr.bf16.mxu0 0
        %1004 = vmatpush1.bf16.msra.mxu0 0
        %1005 = vmatprep.subr.bf16.mxu0 0
        %1006 = vmatpush1.bf16.msra.mxu0 0
        %1007 = vmatprep.subr.bf16.mxu0 0
        %1008 = vmatpush1.bf16.msra.mxu0 0
        %1009 = vmatprep.subr.bf16.mxu0 0
        %1010 = vmatpush1.bf16.msra.mxu0 0
        %1011 = vmatprep.mubr.bf16.mxu0 0
        %1012 = vmatmul.mubr.bf16.gmra.mrb[0].mxu0 %v913
        %v1013 = vpop.f32.mrb[0].mxu0
        %v1014 = vadd.f32 %v965, %v1013
        %v1015 = vpop.f32.mrb[0].mxu0
        %v1016 = vpop.f32.mrb[0].mxu0
        %v1017 = vadd.f32 %v965, %v1016
        %v1018 = vpop.f32.mrb[0].mxu0
        %1019 = vdwg.mxu0
        %v1020 = vmul.f32 %v884, 0.25
        %v1021 = vpack.c.bf16 %v1020, %v1020
        %1023 = vrot.lane.b32.xlu0 %v1021, 112
        %v1024 = vpop.permute.xlu0 %1023
        %v1025 = vpack.c.bf16 %v953, %v950
        %1027 = vrot.lane.b32.xlu0 %v1025, 112
        %v1028 = vpop.permute.xlu0 %1027
        %v1029 = vpack.c.bf16 %v1017, %v1014
        %1031 = vrot.lane.b32.xlu0 %v1029, 112
        %v1032 = vpop.permute.xlu0 %1031
        %v1034 = vld [vmem:[%s656] sm:$0xff]
        %v1035 = vld [vmem:[%s656 + $0x8] sm:$0xff]
        %vm1036 = vcmask 130048
        %v1038 = vsel %vm1036, %v1021, 0
        %v1041 = vsel %vm1036, %v1025, 0
        %1043 = vmatprep.subr.bf16.mxu0 0
        %1044 = vmatpush1.bf16.xpose.msra.mxu0 %v1041
        %1045 = vmatprep.subr.bf16.mxu0 0
        %1046 = vmatpush1.bf16.xpose.msra.mxu0 0
        %1047 = vmatprep.subr.bf16.mxu0 0
        %1048 = vmatpush1.bf16.xpose.msra.mxu0 0
        %1049 = vmatprep.subr.bf16.mxu0 0
        %1050 = vmatpush1.bf16.xpose.msra.mxu0 0
        %1051 = vmatprep.subr.bf16.mxu0 0
        %1052 = vmatpush1.bf16.xpose.msra.mxu0 0
        %1053 = vmatprep.subr.bf16.mxu0 0
        %1054 = vmatpush1.bf16.xpose.msra.mxu0 0
        %1055 = vmatprep.subr.bf16.mxu0 0
        %1056 = vmatpush1.bf16.xpose.msra.mxu0 0
        %1057 = vmatprep.subr.bf16.mxu0 0
        %1058 = vmatpush1.bf16.xpose.msra.mxu0 0
        %1059 = vmatprep.subr.bf16.mxu0 0
        %1060 = vmatpush1.bf16.xpose.msra.mxu0 0
        %1061 = vmatprep.subr.bf16.mxu0 0
        %1062 = vmatpush1.bf16.xpose.msra.mxu0 0
        %1063 = vmatprep.subr.bf16.mxu0 0
        %1064 = vmatpush1.bf16.xpose.msra.mxu0 0
        %1065 = vmatprep.subr.bf16.mxu0 0
        %1066 = vmatpush1.bf16.xpose.msra.mxu0 0
        %1067 = vmatprep.subr.bf16.mxu0 0
        %1068 = vmatpush1.bf16.xpose.msra.mxu0 0
        %1069 = vmatprep.subr.bf16.mxu0 0
        %1070 = vmatpush1.bf16.xpose.msra.mxu0 0
        %1071 = vmatprep.subr.bf16.mxu0 0
        %1072 = vmatpush1.bf16.xpose.msra.mxu0 0
        %1073 = vmatprep.subr.bf16.mxu0 0
        %1074 = vmatpush1.bf16.xpose.msra.mxu0 0
        %1075 = vmatprep.mubr.bf16.mxu0 0
        %1076 = vmatmul.mubr.bf16.gmra.mrb[0].mxu0 %v1038
        %v1077 = vpop.f32.mrb[0].mxu0
        %v1078 = vadd.f32 %v1034, %v1077
        %v1079 = vpop.f32.mrb[0].mxu0
        %v1080 = vpop.f32.mrb[0].mxu0
        %v1081 = vpop.f32.mrb[0].mxu0
        %1082 = vdwg.mxu0
        %v1084 = vsel %vm1036, %v1024, 0
        %v1087 = vsel %vm1036, %v1028, 0
        %1089 = vmatprep.subr.bf16.mxu0 0
        %1090 = vmatpush1.bf16.xpose.msra.mxu0 %v1087
        %1091 = vmatprep.subr.bf16.mxu0 0
        %1092 = vmatpush1.bf16.xpose.msra.mxu0 0
        %1093 = vmatprep.subr.bf16.mxu0 0
        %1094 = vmatpush1.bf16.xpose.msra.mxu0 0
        %1095 = vmatprep.subr.bf16.mxu0 0
        %1096 = vmatpush1.bf16.xpose.msra.mxu0 0
        %1097 = vmatprep.subr.bf16.mxu0 0
        %1098 = vmatpush1.bf16.xpose.msra.mxu0 0
        %1099 = vmatprep.subr.bf16.mxu0 0
        %1100 = vmatpush1.bf16.xpose.msra.mxu0 0
        %1101 = vmatprep.subr.bf16.mxu0 0
        %1102 = vmatpush1.bf16.xpose.msra.mxu0 0
        %1103 = vmatprep.subr.bf16.mxu0 0
        %1104 = vmatpush1.bf16.xpose.msra.mxu0 0
        %1105 = vmatprep.subr.bf16.mxu0 0
        %1106 = vmatpush1.bf16.xpose.msra.mxu0 0
        %1107 = vmatprep.subr.bf16.mxu0 0
        %1108 = vmatpush1.bf16.xpose.msra.mxu0 0
        %1109 = vmatprep.subr.bf16.mxu0 0
        %1110 = vmatpush1.bf16.xpose.msra.mxu0 0
        %1111 = vmatprep.subr.bf16.mxu0 0
        %1112 = vmatpush1.bf16.xpose.msra.mxu0 0
        %1113 = vmatprep.subr.bf16.mxu0 0
        %1114 = vmatpush1.bf16.xpose.msra.mxu0 0
        %1115 = vmatprep.subr.bf16.mxu0 0
        %1116 = vmatpush1.bf16.xpose.msra.mxu0 0
        %1117 = vmatprep.subr.bf16.mxu0 0
        %1118 = vmatpush1.bf16.xpose.msra.mxu0 0
        %1119 = vmatprep.subr.bf16.mxu0 0
        %1120 = vmatpush1.bf16.xpose.msra.mxu0 0
        %1121 = vmatprep.mubr.bf16.mxu0 0
        %1122 = vmatmul.mubr.bf16.gmra.mrb[0].mxu0 %v1084
        %v1123 = vpop.f32.mrb[0].mxu0
        %v1124 = vadd.f32 %v1035, %v1123
        %v1125 = vpop.f32.mrb[0].mxu0
        %v1126 = vpop.f32.mrb[0].mxu0
        %v1127 = vpop.f32.mrb[0].mxu0
        %1128 = vdwg.mxu0
        %v1129 = vld [vmem:[%s747] sm:$0xff]
        %v1130 = vadd.f32 %v1078, %v1129
        %v1131 = vadd.f32 %v1124, %v1129
        %v1132 = vsel %vm1036, %v1130, -inf
        %1133 = vmax.xlane.f32.xlu0 %v1132
        %v1134 = vpop.xlane.xlu0 %1133
        %v1135 = vsel %vm1036, %v1131, -inf
        %1136 = vmax.xlane.f32.xlu0 %v1135
        %v1137 = vpop.xlane.xlu0 %1136
        %v1138 = vsub.f32 %v1130, %v1134
        %v1139 = vsub.f32 %v1131, %v1137
        %v1140 = vmul.f32 %v1138, 1.442695
        %v1141 = vpow.pop %v1140
        %v1142 = vmul.f32 %v1139, 1.442695
        %v1143 = vpow.pop %v1142
        %v1144 = vsel %vm1036, %v1141, 0.0
        %1145 = vadd.xlane.f32.xlu0 %v1144
        %v1146 = vpop.xlane.xlu0 %1145
        %v1147 = vsel %vm1036, %v1143, 0.0
        %1148 = vadd.xlane.f32.xlu0 %v1147
        %v1149 = vpop.xlane.xlu0 %1148
        %v1150 = vrcp.pop %v1146
        %v1151 = vrcp.pop %v1149
        %v1152 = vmul.f32 %v1141, %v1150
        %v1153 = vmul.f32 %v1143, %v1151
        %v1154 = vpack.c.bf16 %v1152, %v1152
        %v1155 = vpack.c.bf16 %v1153, %v1153
        %v1157 = vsel %vm1036, %v1154, 0
        %1159 = vmatprep.subr.bf16.mxu0 0
        %1160 = vmatpush1.bf16.msra.mxu0 %v1029
        %1161 = vmatprep.subr.bf16.mxu0 0
        %1162 = vmatpush1.bf16.msra.mxu0 0
        %1163 = vmatprep.subr.bf16.mxu0 0
        %1164 = vmatpush1.bf16.msra.mxu0 0
        %1165 = vmatprep.subr.bf16.mxu0 0
        %1166 = vmatpush1.bf16.msra.mxu0 0
        %1167 = vmatprep.subr.bf16.mxu0 0
        %1168 = vmatpush1.bf16.msra.mxu0 0
        %1169 = vmatprep.subr.bf16.mxu0 0
        %1170 = vmatpush1.bf16.msra.mxu0 0
        %1171 = vmatprep.subr.bf16.mxu0 0
        %1172 = vmatpush1.bf16.msra.mxu0 0
        %1173 = vmatprep.subr.bf16.mxu0 0
        %1174 = vmatpush1.bf16.msra.mxu0 0
        %1175 = vmatprep.subr.bf16.mxu0 0
        %1176 = vmatpush1.bf16.msra.mxu0 0
        %1177 = vmatprep.subr.bf16.mxu0 0
        %1178 = vmatpush1.bf16.msra.mxu0 0
        %1179 = vmatprep.subr.bf16.mxu0 0
        %1180 = vmatpush1.bf16.msra.mxu0 0
        %1181 = vmatprep.subr.bf16.mxu0 0
        %1182 = vmatpush1.bf16.msra.mxu0 0
        %1183 = vmatprep.subr.bf16.mxu0 0
        %1184 = vmatpush1.bf16.msra.mxu0 0
        %1185 = vmatprep.subr.bf16.mxu0 0
        %1186 = vmatpush1.bf16.msra.mxu0 0
        %1187 = vmatprep.subr.bf16.mxu0 0
        %1188 = vmatpush1.bf16.msra.mxu0 0
        %1189 = vmatprep.subr.bf16.mxu0 0
        %1190 = vmatpush1.bf16.msra.mxu0 0
        %1191 = vmatprep.mubr.bf16.mxu0 0
        %1192 = vmatmul.mubr.bf16.gmra.mrb[0].mxu0 %v1157
        %v1193 = vpop.f32.mrb[0].mxu0
        %v1194 = vadd.f32 0.0, %v1193
        %v1195 = vpop.f32.mrb[0].mxu0
        %v1196 = vpop.f32.mrb[0].mxu0
        %v1197 = vpop.f32.mrb[0].mxu0
        %1198 = vdwg.mxu0
        %v1200 = vsel %vm1036, %v1155, 0
        %1202 = vmatprep.subr.bf16.mxu0 0
        %1203 = vmatpush1.bf16.msra.mxu0 %v1032
        %1204 = vmatprep.subr.bf16.mxu0 0
        %1205 = vmatpush1.bf16.msra.mxu0 0
        %1206 = vmatprep.subr.bf16.mxu0 0
        %1207 = vmatpush1.bf16.msra.mxu0 0
        %1208 = vmatprep.subr.bf16.mxu0 0
        %1209 = vmatpush1.bf16.msra.mxu0 0
        %1210 = vmatprep.subr.bf16.mxu0 0
        %1211 = vmatpush1.bf16.msra.mxu0 0
        %1212 = vmatprep.subr.bf16.mxu0 0
        %1213 = vmatpush1.bf16.msra.mxu0 0
        %1214 = vmatprep.subr.bf16.mxu0 0
        %1215 = vmatpush1.bf16.msra.mxu0 0
        %1216 = vmatprep.subr.bf16.mxu0 0
        %1217 = vmatpush1.bf16.msra.mxu0 0
        %1218 = vmatprep.subr.bf16.mxu0 0
        %1219 = vmatpush1.bf16.msra.mxu0 0
        %1220 = vmatprep.subr.bf16.mxu0 0
        %1221 = vmatpush1.bf16.msra.mxu0 0
        %1222 = vmatprep.subr.bf16.mxu0 0
        %1223 = vmatpush1.bf16.msra.mxu0 0
        %1224 = vmatprep.subr.bf16.mxu0 0
        %1225 = vmatpush1.bf16.msra.mxu0 0
        %1226 = vmatprep.subr.bf16.mxu0 0
        %1227 = vmatpush1.bf16.msra.mxu0 0
        %1228 = vmatprep.subr.bf16.mxu0 0
        %1229 = vmatpush1.bf16.msra.mxu0 0
        %1230 = vmatprep.subr.bf16.mxu0 0
        %1231 = vmatpush1.bf16.msra.mxu0 0
        %1232 = vmatprep.subr.bf16.mxu0 0
        %1233 = vmatpush1.bf16.msra.mxu0 0
        %1234 = vmatprep.mubr.bf16.mxu0 0
        %1235 = vmatmul.mubr.bf16.gmra.mrb[0].mxu0 %v1200
        %v1236 = vpop.f32.mrb[0].mxu0
        %v1237 = vadd.f32 0.0, %v1236
        %v1238 = vpop.f32.mrb[0].mxu0
        %v1239 = vpop.f32.mrb[0].mxu0
        %v1240 = vpop.f32.mrb[0].mxu0
        %1241 = vdwg.mxu0
        %1243 = vrot.lane.b32.xlu0 %v1237, 16
        %v1244 = vpop.permute.xlu0 %1243
        %v1246 = vsel %vm1036, %v1194, %v1244
        %v1247 = vpack.c.bf16 %v1246, %v1246
        %v1248 = vld [vmem:[%s12] sm:$0xf]
        %v1249 = vld [vmem:[%s12 + $0x4] sm:$0xf]
        %v1250 = vld [vmem:[%s12 + $0x8] sm:$0xf]
        %v1251 = vld [vmem:[%s12 + $0xc] sm:$0xf]
        %v1252 = vld [vmem:[%s13] sm:$0x1]
        %v1254 = vlaneseq
        %v1255 = vshrl.u32 %v1254, 7
        %v1256 = vsub.s32 0, %v1255
        %v1257 = vrot.slane %v1252, %v1256
        %v1263 = vunpack.c.l.b16 %v1248
        %v1264 = vunpack.c.l.b16 %v1249
        %v1265 = vunpack.c.l.b16 %v1250
        %v1266 = vunpack.c.l.b16 %v1251
        %v1267 = vpack.c.b16 %v1264, %v1263
        %v1268 = vpack.c.b16 %v1266, %v1265
        %v1272 = vsel %vm762, %v1247, 0
        %1274 = vmatprep.subr.bf16.mxu0 0
        %1275 = vmatpush1.bf16.msra.mxu0 %v1267
        %1276 = vmatprep.subr.bf16.mxu0 0
        %1277 = vmatpush1.bf16.msra.mxu0 %v1268
        %1278 = vmatprep.subr.bf16.mxu0 0
        %1279 = vmatpush1.bf16.msra.mxu0 0
        %1280 = vmatprep.subr.bf16.mxu0 0
        %1281 = vmatpush1.bf16.msra.mxu0 0
        %1282 = vmatprep.subr.bf16.mxu0 0
        %1283 = vmatpush1.bf16.msra.mxu0 0
        %1284 = vmatprep.subr.bf16.mxu0 0
        %1285 = vmatpush1.bf16.msra.mxu0 0
        %1286 = vmatprep.subr.bf16.mxu0 0
        %1287 = vmatpush1.bf16.msra.mxu0 0
        %1288 = vmatprep.subr.bf16.mxu0 0
        %1289 = vmatpush1.bf16.msra.mxu0 0
        %1290 = vmatprep.subr.bf16.mxu0 0
        %1291 = vmatpush1.bf16.msra.mxu0 0
        %1292 = vmatprep.subr.bf16.mxu0 0
        %1293 = vmatpush1.bf16.msra.mxu0 0
        %1294 = vmatprep.subr.bf16.mxu0 0
        %1295 = vmatpush1.bf16.msra.mxu0 0
        %1296 = vmatprep.subr.bf16.mxu0 0
        %1297 = vmatpush1.bf16.msra.mxu0 0
        %1298 = vmatprep.subr.bf16.mxu0 0
        %1299 = vmatpush1.bf16.msra.mxu0 0
        %1300 = vmatprep.subr.bf16.mxu0 0
        %1301 = vmatpush1.bf16.msra.mxu0 0
        %1302 = vmatprep.subr.bf16.mxu0 0
        %1303 = vmatpush1.bf16.msra.mxu0 0
        %1304 = vmatprep.subr.bf16.mxu0 0
        %1305 = vmatpush1.bf16.msra.mxu0 0
        %1306 = vmatprep.mubr.bf16.mxu0 0
        %1307 = vmatmul.mubr.bf16.gmra.mrb[0].mxu0 %v1272
        %v1308 = vpop.f32.mrb[0].mxu0
        %v1309 = vadd.f32 %v1257, %v1308
        %v1310 = vpop.f32.mrb[0].mxu0
        %v1311 = vpop.f32.mrb[0].mxu0
        %v1312 = vpop.f32.mrb[0].mxu0
        %1313 = vdwg.mxu0
        %v1314 = vadd.f32 %v757, %v1309
        %v1315 = vld [vmem:[%s14] sm:$0x1]
        %v1316 = vld [vmem:[%s15] sm:$0x1]
        %v1317 = vsel %vm762, %v1314, 0.0
        %1318 = vadd.xlane.f32.xlu0 %v1317
        %v1319 = vpop.xlane.xlu0 %1318
        %v1320 = vmul.f32 %v1319, %v766
        %v1321 = vsub.f32 %v1314, %v1320
        %v1322 = vmul.f32 %v1321, %v1321
        %v1323 = vsel %vm762, %v1322, 0.0
        %1324 = vadd.xlane.f32.xlu0 %v1323
        %v1325 = vpop.xlane.xlu0 %1324
        %v1326 = vmul.f32 %v1325, %v766
        %v1327 = vadd.f32 %v1326, 1e-05
        %v1328 = vrsqrt.pop %v1327
        %v1329 = vmul.f32 %v1321, %v1328
        %v1331 = vlaneseq
        %v1332 = vshrl.u32 %v1331, 7
        %v1333 = vsub.s32 0, %v1332
        %v1334 = vrot.slane %v1315, %v1333
        %v1336 = vmul.f32 %v1329, %v1334
        %v1338 = vlaneseq
        %v1339 = vshrl.u32 %v1338, 7
        %v1340 = vsub.s32 0, %v1339
        %v1341 = vrot.slane %v1316, %v1340
        %v1343 = vadd.f32 %v1336, %v1341
        %v1344 = vpack.c.bf16 %v1343, %v1343
        %v1345 = vld [vmem:[%s16] sm:$0xf]
        %v1346 = vld [vmem:[%s16 + $0x4] sm:$0xf]
        %v1347 = vld [vmem:[%s16 + $0x8] sm:$0xf]
        %v1348 = vld [vmem:[%s16 + $0xc] sm:$0xf]
        %v1349 = vld [vmem:[%s17] sm:$0x1]
        %v1351 = vlaneseq
        %v1352 = vshrl.u32 %v1351, 7
        %v1353 = vsub.s32 0, %v1352
        %v1354 = vrot.slane %v1349, %v1353
        %v1360 = vunpack.c.l.b16 %v1345
        %v1361 = vunpack.c.l.b16 %v1346
        %v1362 = vunpack.c.l.b16 %v1347
        %v1363 = vunpack.c.l.b16 %v1348
        %v1364 = vpack.c.b16 %v1361, %v1360
        %v1365 = vpack.c.b16 %v1363, %v1362
        %v1369 = vsel %vm762, %v1344, 0
        %1371 = vmatprep.subr.bf16.mxu0 0
        %1372 = vmatpush1.bf16.msra.mxu0 %v1364
        %1373 = vmatprep.subr.bf16.mxu0 0
        %1374 = vmatpush1.bf16.msra.mxu0 %v1365
        %1375 = vmatprep.subr.bf16.mxu0 0
        %1376 = vmatpush1.bf16.msra.mxu0 0
        %1377 = vmatprep.subr.bf16.mxu0 0
        %1378 = vmatpush1.bf16.msra.mxu0 0
        %1379 = vmatprep.subr.bf16.mxu0 0
        %1380 = vmatpush1.bf16.msra.mxu0 0
        %1381 = vmatprep.subr.bf16.mxu0 0
        %1382 = vmatpush1.bf16.msra.mxu0 0
        %1383 = vmatprep.subr.bf16.mxu0 0
        %1384 = vmatpush1.bf16.msra.mxu0 0
        %1385 = vmatprep.subr.bf16.mxu0 0
        %1386 = vmatpush1.bf16.msra.mxu0 0
        %1387 = vmatprep.subr.bf16.mxu0 0
        %1388 = vmatpush1.bf16.msra.mxu0 0
        %1389 = vmatprep.subr.bf16.mxu0 0
        %1390 = vmatpush1.bf16.msra.mxu0 0
        %1391 = vmatprep.subr.bf16.mxu0 0
        %1392 = vmatpush1.bf16.msra.mxu0 0
        %1393 = vmatprep.subr.bf16.mxu0 0
        %1394 = vmatpush1.bf16.msra.mxu0 0
        %1395 = vmatprep.subr.bf16.mxu0 0
        %1396 = vmatpush1.bf16.msra.mxu0 0
        %1397 = vmatprep.subr.bf16.mxu0 0
        %1398 = vmatpush1.bf16.msra.mxu0 0
        %1399 = vmatprep.subr.bf16.mxu0 0
        %1400 = vmatpush1.bf16.msra.mxu0 0
        %1401 = vmatprep.subr.bf16.mxu0 0
        %1402 = vmatpush1.bf16.msra.mxu0 0
        %1403 = vmatprep.mubr.bf16.mxu0 0
        %1404 = vmatmul.mubr.bf16.gmra.mrb[0].mxu0 %v1369
        %v1405 = vpop.f32.mrb[0].mxu0
        %v1406 = vadd.f32 %v1354, %v1405
        %v1407 = vpop.f32.mrb[0].mxu0
        %v1408 = vpop.f32.mrb[0].mxu0
        %v1409 = vpop.f32.mrb[0].mxu0
        %1410 = vdwg.mxu0
        %v1411 = vmul.f32 %v1406, 0.5
        %v1412 = vmul.f32 %v1406, 0.70710677
        %v1413 = vand.u32 2147483647, %v1412
        %v1414 = vmul.f32 %v1413, 0.3275911
        %v1415 = vadd.f32 %v1414, 1.0
        %v1416 = vrcp.pop %v1415
        %v1417 = vmul.f32 1.0, %v1416
        %v1418 = vmul.f32 %v1417, 1.0614054
        %v1419 = vadd.f32 %v1418, -1.4531521
        %v1420 = vmul.f32 %v1419, %v1417
        %v1421 = vadd.f32 %v1420, 1.4214138
        %v1422 = vmul.f32 %v1421, %v1417
        %v1423 = vadd.f32 %v1422, -0.28449672
        %v1424 = vmul.f32 %v1423, %v1417
        %v1425 = vadd.f32 %v1424, 0.2548296
        %v1426 = vmul.f32 %v1425, %v1417
        %v1427 = vsub.f32 0.0, %v1413
        %v1428 = vmul.f32 %v1427, %v1413
        %v1429 = vmul.f32 %v1428, 1.442695
        %v1430 = vpow.pop %v1429
        %v1431 = vmul.f32 %v1426, %v1430
        %v1432 = vsub.f32 1.0, %v1431
        %vm1433 = vcmp.ge.f32.partialorder %v1412, 0.0
        %v1434 = vsub.f32 0.0, %v1432
        %v1435 = vsel %vm1433, %v1432, %v1434
        %v1436 = vadd.f32 %v1435, 1.0
        %v1437 = vmul.f32 %v1411, %v1436
        %v1438 = vpack.c.bf16 %v1437, %v1437
        %v1439 = vld [vmem:[%s18] sm:$0xf]
        %v1440 = vld [vmem:[%s18 + $0x4] sm:$0xf]
        %v1441 = vld [vmem:[%s18 + $0x8] sm:$0xf]
        %v1442 = vld [vmem:[%s18 + $0xc] sm:$0xf]
        %v1443 = vld [vmem:[%s18 + $0x10] sm:$0xf]
        %v1444 = vld [vmem:[%s18 + $0x14] sm:$0xf]
        %v1445 = vld [vmem:[%s18 + $0x18] sm:$0xf]
        %v1446 = vld [vmem:[%s18 + $0x1c] sm:$0xf]
        %v1447 = vld [vmem:[%s18 + $0x20] sm:$0xf]
        %v1448 = vld [vmem:[%s18 + $0x24] sm:$0xf]
        %v1449 = vld [vmem:[%s18 + $0x28] sm:$0xf]
        %v1450 = vld [vmem:[%s18 + $0x2c] sm:$0xf]
        %v1451 = vld [vmem:[%s18 + $0x30] sm:$0xf]
        %v1452 = vld [vmem:[%s18 + $0x34] sm:$0xf]
        %v1453 = vld [vmem:[%s18 + $0x38] sm:$0xf]
        %v1454 = vld [vmem:[%s18 + $0x3c] sm:$0xf]
        %v1455 = vld [vmem:[%s19] sm:$0x1]
        %v1457 = vlaneseq
        %v1458 = vshrl.u32 %v1457, 7
        %v1459 = vsub.s32 0, %v1458
        %v1460 = vrot.slane %v1455, %v1459
        %v1478 = vunpack.c.l.b16 %v1439
        %v1479 = vunpack.c.l.b16 %v1440
        %v1480 = vunpack.c.l.b16 %v1441
        %v1481 = vunpack.c.l.b16 %v1442
        %v1482 = vunpack.c.l.b16 %v1443
        %v1483 = vunpack.c.l.b16 %v1444
        %v1484 = vunpack.c.l.b16 %v1445
        %v1485 = vunpack.c.l.b16 %v1446
        %v1486 = vunpack.c.l.b16 %v1447
        %v1487 = vunpack.c.l.b16 %v1448
        %v1488 = vunpack.c.l.b16 %v1449
        %v1489 = vunpack.c.l.b16 %v1450
        %v1490 = vunpack.c.l.b16 %v1451
        %v1491 = vunpack.c.l.b16 %v1452
        %v1492 = vunpack.c.l.b16 %v1453
        %v1493 = vunpack.c.l.b16 %v1454
        %v1494 = vpack.c.b16 %v1479, %v1478
        %v1495 = vpack.c.b16 %v1481, %v1480
        %v1496 = vpack.c.b16 %v1483, %v1482
        %v1497 = vpack.c.b16 %v1485, %v1484
        %v1498 = vpack.c.b16 %v1487, %v1486
        %v1499 = vpack.c.b16 %v1489, %v1488
        %v1500 = vpack.c.b16 %v1491, %v1490
        %v1501 = vpack.c.b16 %v1493, %v1492
        %1510 = vmatprep.subr.bf16.mxu0 0
        %1511 = vmatpush1.bf16.msra.mxu0 %v1494
        %1512 = vmatprep.subr.bf16.mxu0 0
        %1513 = vmatpush1.bf16.msra.mxu0 %v1495
        %1514 = vmatprep.subr.bf16.mxu0 0
        %1515 = vmatpush1.bf16.msra.mxu0 %v1496
        %1516 = vmatprep.subr.bf16.mxu0 0
        %1517 = vmatpush1.bf16.msra.mxu0 %v1497
        %1518 = vmatprep.subr.bf16.mxu0 0
        %1519 = vmatpush1.bf16.msra.mxu0 %v1498
        %1520 = vmatprep.subr.bf16.mxu0 0
        %1521 = vmatpush1.bf16.msra.mxu0 %v1499
        %1522 = vmatprep.subr.bf16.mxu0 0
        %1523 = vmatpush1.bf16.msra.mxu0 %v1500
        %1524 = vmatprep.subr.bf16.mxu0 0
        %1525 = vmatpush1.bf16.msra.mxu0 %v1501
        %1526 = vmatprep.subr.bf16.mxu0 0
        %1527 = vmatpush1.bf16.msra.mxu0 0
        %1528 = vmatprep.subr.bf16.mxu0 0
        %1529 = vmatpush1.bf16.msra.mxu0 0
        %1530 = vmatprep.subr.bf16.mxu0 0
        %1531 = vmatpush1.bf16.msra.mxu0 0
        %1532 = vmatprep.subr.bf16.mxu0 0
        %1533 = vmatpush1.bf16.msra.mxu0 0
        %1534 = vmatprep.subr.bf16.mxu0 0
        %1535 = vmatpush1.bf16.msra.mxu0 0
        %1536 = vmatprep.subr.bf16.mxu0 0
        %1537 = vmatpush1.bf16.msra.mxu0 0
        %1538 = vmatprep.subr.bf16.mxu0 0
        %1539 = vmatpush1.bf16.msra.mxu0 0
        %1540 = vmatprep.subr.bf16.mxu0 0
        %1541 = vmatpush1.bf16.msra.mxu0 0
        %1542 = vmatprep.mubr.bf16.mxu0 0
        %1543 = vmatmul.mubr.bf16.gmra.mrb[0].mxu0 %v1438
        %v1544 = vpop.f32.mrb[0].mxu0
        %v1545 = vadd.f32 %v1460, %v1544
        %v1546 = vpop.f32.mrb[0].mxu0
        %v1547 = vpop.f32.mrb[0].mxu0
        %v1548 = vpop.f32.mrb[0].mxu0
        %1549 = vdwg.mxu0
        %v1550 = vadd.f32 %v1314, %v1545
        %1551 = vst.msk [vmem:[%s755] sm:$0xff] %vm762, %v1550
        %p1552 = scmp.lt.s32.totalorder %s35, 1
        %s1553 = scalar_select %p1552, %s35, 1
        %p1554 = scmp.lt.s32.totalorder %s36, 1
        %s1555 = scalar_select %p1554, %s36, 1
        %s1556 = smul.addr %s1553, 2
        %s1557 = sadd.s32 %s1555, %s1556
        %s1558 = smul.addr %s1557, 8
        %s1559 = scalar_lea.vmem %s20, %s1558
        // Predicated region
        $region139: #{encoder_forward.8} parent=133 // pred_check
          %p1560 = pneg %p505
        $region140: #{encoder_forward.8} parent=133 // pred_check_branch
          %1562 = sbr.rel (%p1560) target = $region142
        $region141: #{encoder_forward.8} parent=133 // pred_region
          _
        $region142: #{encoder_forward.8} parent=133 // pred_fallthru
          _
      $region134: #{encoder_forward.8} parent=5 // pred_fallthru
        _
      %p1563 = scmp.le.s32.totalorder 2, %s26
      // Predicated region
      $region143: #{encoder_forward.8} parent=5 // pred_check
        %p1564 = pneg %p1563
      $region144: #{encoder_forward.8} parent=5 // pred_check_branch
        %1566 = sbr.rel (%p1564) target = $region146
      $region145: #{encoder_forward.8} parent=5 // pred_region
        %s1567 = ssub.s32 %s26, 2
        // Predicated region
        $region147: #{encoder_forward.8} parent=145 // pred_check
          %p1568 = pneg %p511
        $region148: #{encoder_forward.8} parent=145 // pred_check_branch
          %1570 = sbr.rel (%p1568) target = $region150
        $region149: #{encoder_forward.8} parent=145 // pred_region
          %p1571 = scmp.lt.s32.totalorder %s37, 1
          %s1572 = scalar_select %p1571, %s37, 1
          %p1573 = scmp.lt.s32.totalorder %s38, 1
          %s1574 = scalar_select %p1573, %s38, 1
          %s1575 = smul.addr %s1572, 2
          %s1576 = sadd.s32 %s1574, %s1575
          %s1577 = smul.addr %s1576, 8
          %s1578 = scalar_lea.vmem %s20, %s1577
        $region150: #{encoder_forward.8} parent=145 // pred_fallthru
          _
      $region146: #{encoder_forward.8} parent=5 // pred_fallthru
        _
    $region6: #{encoder_forward.8} parent=1 // loop_footer
      %s30 = sadd.s32 1, %s26
    $region7: #{encoder_forward.8} parent=1 // loop_footer_branch
      %25 = sbr.rel target = $region3
    $region8: #{encoder_forward.8} parent=1 // loop_exit
      _

// kernel: encoder_forward.10
$region0: #{encoder_forward.10}
  #allocation0 [shape = 'u32[]', space=smem, size = 0x4, offset = 0x4, fixed_abs, tag = 'smem constant byte address 0x4 - core index']
  #allocation1 [shape = 'u32[144,128]{1,0:T(1,128)}', space=vmem, size = 0x12000, scoped, tag = 'internal scratch']
  %s0 = inlined_call_operand.vmem [shape: f32[2,4,128], index: 0, kind: input, shape index: {}]
  %s1 = inlined_call_operand.vmem [shape: f32[1,128], index: 1, kind: input, shape index: {}]
  %s2 = inlined_call_operand.vmem [shape: f32[1,128], index: 2, kind: input, shape index: {}]
  %s3 = inlined_call_operand.vmem [shape: bf16[128,64], index: 3, kind: input, shape index: {}]
  %s4 = inlined_call_operand.vmem [shape: f32[2,4,64], index: 4, kind: output, shape index: {}]
  %s5 = sld [smem:[#allocation0]]
  $region49: #{encoder_forward.10} parent=0
    _
  %s7 = ssub.s32 1, %s5
  %s8 = scalar_select 0, %s7, %s5
  loop: start=0, step=1, limit=4
  $region2: #{encoder_forward.10} parent=0 // loop_pre_header
    _
  $region3: #{encoder_forward.10} parent=0 // loop_header
    %s10 = sphi 0, %s14
    %p11 = scmp.ge.s32.totalorder %s10, 4
    %s20 = sphi 0, %s22
    %s23 = sphi 0, %s20
    %s24 = sphi 0, %s23
    %s40 = sphi 0, %s24
    %s44 = sphi 0, %s44
    %s46 = sphi 0, %s44
    %s47 = sphi 0, %s46
    %s61 = sphi 0, %s47
    %s65 = sphi 0, %s65
    %s67 = sphi 0, %s65
    %s68 = sphi 0, %s67
    %s82 = sphi 0, %s68
    %s86 = sphi 0, %s86
    %s88 = sphi 0, %s86
    %s89 = sphi 0, %s88
    %s103 = sphi 0, %s89
    %s109 = sphi 0, %s111
    %s112 = sphi 0, %s109
    %s113 = sphi 0, %s112
    %s129 = sphi 0, %s113
  $region4: #{encoder_forward.10} parent=0 // loop_header_branch
    %13 = sbr.rel (%p11) target = $region8
  $region5: #{encoder_forward.10} parent=0 // loop_body
    %s15 = ssub.s32 %s10, 1
    %s16 = ssub.s32 %s10, 2
    %s17 = sadd.s32 %s10, 1
    %s18 = ssub.s32 %s10, %s17
    %p19 = scmp.eq.s32.totalorder %s18, 0
    %s21 = sadd.s32 %s20, 1
    %s22 = scalar_select %p19, %s20, %s21
    %p25 = pneg %p19
    %p26 = scmp.eq.s32.totalorder %s10, 1
    %p27 = por %p25, %p26
    %p28 = scmp.ne.s32.totalorder %s20, %s23
    %p29 = scmp.eq.s32.totalorder %s10, 0
    %p30 = por %p28, %p29
    %p31 = scmp.ne.s32.totalorder %s20, %s23
    %p32 = scmp.eq.s32.totalorder %s15, 1
    %p33 = por %p31, %p32
    %p34 = scmp.ne.s32.totalorder %s23, %s24
    %p35 = scmp.eq.s32.totalorder %s15, 0
    %p36 = por %p34, %p35
    %p37 = scmp.ne.s32.totalorder %s23, %s24
    %p38 = scmp.eq.s32.totalorder %s16, 1
    %p39 = por %p37, %p38
    %p41 = scmp.ne.s32.totalorder %s24, %s40
    %p42 = scmp.eq.s32.totalorder %s16, 0
    %p43 = por %p41, %p42
    %s45 = sadd.s32 %s44, 1
    %p48 = scmp.eq.s32.totalorder %s10, 1
    %p49 = scmp.ne.s32.totalorder %s44, %s46
    %p50 = scmp.eq.s32.totalorder %s10, 0
    %p51 = por %p49, %p50
    %p52 = scmp.ne.s32.totalorder %s44, %s46
    %p53 = scmp.eq.s32.totalorder %s15, 1
    %p54 = por %p52, %p53
    %p55 = scmp.ne.s32.totalorder %s46, %s47
    %p56 = scmp.eq.s32.totalorder %s15, 0
    %p57 = por %p55, %p56
    %p58 = scmp.ne.s32.totalorder %s46, %s47
    %p59 = scmp.eq.s32.totalorder %s16, 1
    %p60 = por %p58, %p59
    %p62 = scmp.ne.s32.totalorder %s47, %s61
    %p63 = scmp.eq.s32.totalorder %s16, 0
    %p64 = por %p62, %p63
    %s66 = sadd.s32 %s65, 1
    %p69 = scmp.eq.s32.totalorder %s10, 1
    %p70 = scmp.ne.s32.totalorder %s65, %s67
    %p71 = scmp.eq.s32.totalorder %s10, 0
    %p72 = por %p70, %p71
    %p73 = scmp.ne.s32.totalorder %s65, %s67
    %p74 = scmp.eq.s32.totalorder %s15, 1
    %p75 = por %p73, %p74
    %p76 = scmp.ne.s32.totalorder %s67, %s68
    %p77 = scmp.eq.s32.totalorder %s15, 0
    %p78 = por %p76, %p77
    %p79 = scmp.ne.s32.totalorder %s67, %s68
    %p80 = scmp.eq.s32.totalorder %s16, 1
    %p81 = por %p79, %p80
    %p83 = scmp.ne.s32.totalorder %s68, %s82
    %p84 = scmp.eq.s32.totalorder %s16, 0
    %p85 = por %p83, %p84
    %s87 = sadd.s32 %s86, 1
    %p90 = scmp.eq.s32.totalorder %s10, 1
    %p91 = scmp.ne.s32.totalorder %s86, %s88
    %p92 = scmp.eq.s32.totalorder %s10, 0
    %p93 = por %p91, %p92
    %p94 = scmp.ne.s32.totalorder %s86, %s88
    %p95 = scmp.eq.s32.totalorder %s15, 1
    %p96 = por %p94, %p95
    %p97 = scmp.ne.s32.totalorder %s88, %s89
    %p98 = scmp.eq.s32.totalorder %s15, 0
    %p99 = por %p97, %p98
    %p100 = scmp.ne.s32.totalorder %s88, %s89
    %p101 = scmp.eq.s32.totalorder %s16, 1
    %p102 = por %p100, %p101
    %p104 = scmp.ne.s32.totalorder %s89, %s103
    %p105 = scmp.eq.s32.totalorder %s16, 0
    %p106 = por %p104, %p105
    %s107 = ssub.s32 %s10, %s17
    %p108 = scmp.eq.s32.totalorder %s107, 0
    %s110 = sadd.s32 %s109, 1
    %s111 = scalar_select %p108, %s109, %s110
    %p114 = pneg %p108
    %p115 = scmp.eq.s32.totalorder %s10, 1
    %p116 = por %p114, %p115
    %p117 = scmp.ne.s32.totalorder %s109, %s112
    %p118 = scmp.eq.s32.totalorder %s10, 0
    %p119 = por %p117, %p118
    %p120 = scmp.ne.s32.totalorder %s109, %s112
    %p121 = scmp.eq.s32.totalorder %s15, 1
    %p122 = por %p120, %p121
    %p123 = scmp.ne.s32.totalorder %s112, %s113
    %p124 = scmp.eq.s32.totalorder %s15, 0
    %p125 = por %p123, %p124
    %p126 = scmp.ne.s32.totalorder %s112, %s113
    %p127 = scmp.eq.s32.totalorder %s16, 1
    %p128 = por %p126, %p127
    %p130 = scmp.ne.s32.totalorder %s113, %s129
    %p131 = scmp.eq.s32.totalorder %s16, 0
    %p132 = por %p130, %p131
    %p133 = scmp.le.s32.totalorder 1, %s10
    %p134 = scmp.lt.s32.totalorder %s10, 3
    %p135 = pnand %p133, %p134
    %p136 = pneg %p135
    // Predicated region
    $region9: #{encoder_forward.10} parent=5 // pred_check
      _
    $region10: #{encoder_forward.10} parent=5 // pred_check_branch
      %138 = sbr.rel (%p135) target = $region12
    $region11: #{encoder_forward.10} parent=5 // pred_region
      %s139 = ssub.s32 %s10, 1
      // Predicated region
      $region13: #{encoder_forward.10} parent=11 // pred_check
        %p140 = pneg %p57
      $region14: #{encoder_forward.10} parent=11 // pred_check_branch
        %142 = sbr.rel (%p140) target = $region16
      $region15: #{encoder_forward.10} parent=11 // pred_region
        _
      $region16: #{encoder_forward.10} parent=11 // pred_fallthru
        _
      // Predicated region
      $region17: #{encoder_forward.10} parent=11 // pred_check
        %p143 = pneg %p78
      $region18: #{encoder_forward.10} parent=11 // pred_check_branch
        %145 = sbr.rel (%p143) target = $region20
      $region19: #{encoder_forward.10} parent=11 // pred_region
        _
      $region20: #{encoder_forward.10} parent=11 // pred_fallthru
        _
      // Predicated region
      $region21: #{encoder_forward.10} parent=11 // pred_check
        %p146 = pneg %p99
      $region22: #{encoder_forward.10} parent=11 // pred_check_branch
        %148 = sbr.rel (%p146) target = $region24
      $region23: #{encoder_forward.10} parent=11 // pred_region
        _
      $region24: #{encoder_forward.10} parent=11 // pred_fallthru
        _
    $region12: #{encoder_forward.10} parent=5 // pred_fallthru
      _
    %p149 = scmp.lt.s32.totalorder %s10, 2
    // Predicated region
    $region25: #{encoder_forward.10} parent=5 // pred_check
      %p150 = pneg %p149
    $region26: #{encoder_forward.10} parent=5 // pred_check_branch
      %152 = sbr.rel (%p150) target = $region28
    $region27: #{encoder_forward.10} parent=5 // pred_region
      // Predicated region
      $region29: #{encoder_forward.10} parent=27 // pred_check
        %p153 = pneg %p30
      $region30: #{encoder_forward.10} parent=27 // pred_check_branch
        %155 = sbr.rel (%p153) target = $region32
      $region31: #{encoder_forward.10} parent=27 // pred_region
        %p156 = scmp.lt.s32.totalorder %s10, 1
        %s157 = scalar_select %p156, %s10, 1
        %s158 = smul.addr %s157, 4
        %s159 = scalar_lea.vmem %s0, %s158
      $region32: #{encoder_forward.10} parent=27 // pred_fallthru
        _
    $region28: #{encoder_forward.10} parent=5 // pred_fallthru
      _
    %p160 = scmp.le.s32.totalorder 1, %s10
    %p161 = scmp.lt.s32.totalorder %s10, 3
    %p162 = pnand %p160, %p161
    %p163 = pneg %p162
    // Predicated region
    $region33: #{encoder_forward.10} parent=5 // pred_check
      _
    $region34: #{encoder_forward.10} parent=5 // pred_check_branch
      %165 = sbr.rel (%p162) target = $region36
    $region35: #{encoder_forward.10} parent=5 // pred_region
      %s166 = ssub.s32 %s10, 1
      %p167 = scmp.lt.s32.totalorder %s15, 1
      %s168 = scalar_select %p167, %s15, 1
      %s169 = smul.addr %s168, 4
      %s170 = scalar_lea.vmem %s0, %s169
      %p171 = pneg %p36
      %p172 = pneg %p33
      %p173 = pneg %p57
      %p174 = pneg %p54
      %p175 = pneg %p78
      %p176 = pneg %p75
      %p177 = pneg %p99
      %p178 = pneg %p96
      %p179 = pneg %p125
      %p180 = pneg %p122
      %p181 = scmp.lt.s32.totalorder %s15, 1
      %s182 = scalar_select %p181, %s15, 1
      %s183 = smul.addr %s182, 4
      %s184 = scalar_lea.vmem %s4, %s183
      %p185 = scmp.lt.s32.totalorder %s15, 1
      %s186 = scalar_select %p185, %s15, 1
      %s187 = smul.addr %s186, 4
      %s188 = scalar_lea.vmem %s0, %s187
      %p189 = scmp.lt.s32.totalorder %s15, 1
      %s190 = scalar_select %p189, %s15, 1
      %s191 = smul.addr %s190, 4
      %s192 = scalar_lea.vmem %s4, %s191
      %v194 = vld [vmem:[%s188] sm:$0xf]
      %v195 = vld [vmem:[%s1] sm:$0x1]
      %v196 = vld [vmem:[%s2] sm:$0x1]
      %vm197 = vcmask 1043456
      %v198 = vsel %vm197, %v194, 0.0
      %199 = vadd.xlane.f32.xlu0 %v198
      %v200 = vpop.xlane.xlu0 %199
      %v201 = vrcp.pop 128.0
      %v202 = vmul.f32 %v200, %v201
      %v203 = vsub.f32 %v194, %v202
      %v204 = vmul.f32 %v203, %v203
      %v205 = vsel %vm197, %v204, 0.0
      %206 = vadd.xlane.f32.xlu0 %v205
      %v207 = vpop.xlane.xlu0 %206
      %v208 = vmul.f32 %v207, %v201
      %v209 = vadd.f32 %v208, 1e-05
      %v210 = vrsqrt.pop %v209
      %v211 = vmul.f32 %v203, %v210
      %v213 = vlaneseq
      %v214 = vshrl.u32 %v213, 7
      %v215 = vsub.s32 0, %v214
      %v216 = vrot.slane %v195, %v215
      %v218 = vmul.f32 %v211, %v216
      %v220 = vlaneseq
      %v221 = vshrl.u32 %v220, 7
      %v222 = vsub.s32 0, %v221
      %v223 = vrot.slane %v196, %v222
      %v225 = vadd.f32 %v218, %v223
      %v226 = vpack.c.bf16 %v225, %v225
      %v227 = vld [vmem:[%s3] sm:$0xf]
      %v228 = vld [vmem:[%s3 + $0x4] sm:$0xf]
      %v229 = vld [vmem:[%s3 + $0x8] sm:$0xf]
      %v230 = vld [vmem:[%s3 + $0xc] sm:$0xf]
      %v231 = vld [vmem:[%s3 + $0x10] sm:$0xf]
      %v232 = vld [vmem:[%s3 + $0x14] sm:$0xf]
      %v233 = vld [vmem:[%s3 + $0x18] sm:$0xf]
      %v234 = vld [vmem:[%s3 + $0x1c] sm:$0xf]
      %v235 = vld [vmem:[%s3 + $0x20] sm:$0xf]
      %v236 = vld [vmem:[%s3 + $0x24] sm:$0xf]
      %v237 = vld [vmem:[%s3 + $0x28] sm:$0xf]
      %v238 = vld [vmem:[%s3 + $0x2c] sm:$0xf]
      %v239 = vld [vmem:[%s3 + $0x30] sm:$0xf]
      %v240 = vld [vmem:[%s3 + $0x34] sm:$0xf]
      %v241 = vld [vmem:[%s3 + $0x38] sm:$0xf]
      %v242 = vld [vmem:[%s3 + $0x3c] sm:$0xf]
      %v259 = vunpack.c.l.b16 %v227
      %v260 = vunpack.c.l.b16 %v228
      %v261 = vunpack.c.l.b16 %v229
      %v262 = vunpack.c.l.b16 %v230
      %v263 = vunpack.c.l.b16 %v231
      %v264 = vunpack.c.l.b16 %v232
      %v265 = vunpack.c.l.b16 %v233
      %v266 = vunpack.c.l.b16 %v234
      %v267 = vunpack.c.l.b16 %v235
      %v268 = vunpack.c.l.b16 %v236
      %v269 = vunpack.c.l.b16 %v237
      %v270 = vunpack.c.l.b16 %v238
      %v271 = vunpack.c.l.b16 %v239
      %v272 = vunpack.c.l.b16 %v240
      %v273 = vunpack.c.l.b16 %v241
      %v274 = vunpack.c.l.b16 %v242
      %v275 = vpack.c.b16 %v260, %v259
      %v276 = vpack.c.b16 %v262, %v261
      %v277 = vpack.c.b16 %v264, %v263
      %v278 = vpack.c.b16 %v266, %v265
      %v279 = vpack.c.b16 %v268, %v267
      %v280 = vpack.c.b16 %v270, %v269
      %v281 = vpack.c.b16 %v272, %v271
      %v282 = vpack.c.b16 %v274, %v273
      %291 = vmatprep.subr.bf16.mxu0 0
      %292 = vmatpush1.bf16.msra.mxu0 %v275
      %293 = vmatprep.subr.bf16.mxu0 0
      %294 = vmatpush1.bf16.msra.mxu0 %v276
      %295 = vmatprep.subr.bf16.mxu0 0
      %296 = vmatpush1.bf16.msra.mxu0 %v277
      %297 = vmatprep.subr.bf16.mxu0 0
      %298 = vmatpush1.bf16.msra.mxu0 %v278
      %299 = vmatprep.subr.bf16.mxu0 0
      %300 = vmatpush1.bf16.msra.mxu0 %v279
      %301 = vmatprep.subr.bf16.mxu0 0
      %302 = vmatpush1.bf16.msra.mxu0 %v280
      %303 = vmatprep.subr.bf16.mxu0 0
      %304 = vmatpush1.bf16.msra.mxu0 %v281
      %305 = vmatprep.subr.bf16.mxu0 0
      %306 = vmatpush1.bf16.msra.mxu0 %v282
      %307 = vmatprep.subr.bf16.mxu0 0
      %308 = vmatpush1.bf16.msra.mxu0 0
      %309 = vmatprep.subr.bf16.mxu0 0
      %310 = vmatpush1.bf16.msra.mxu0 0
      %311 = vmatprep.subr.bf16.mxu0 0
      %312 = vmatpush1.bf16.msra.mxu0 0
      %313 = vmatprep.subr.bf16.mxu0 0
      %314 = vmatpush1.bf16.msra.mxu0 0
      %315 = vmatprep.subr.bf16.mxu0 0
      %316 = vmatpush1.bf16.msra.mxu0 0
      %317 = vmatprep.subr.bf16.mxu0 0
      %318 = vmatpush1.bf16.msra.mxu0 0
      %319 = vmatprep.subr.bf16.mxu0 0
      %320 = vmatpush1.bf16.msra.mxu0 0
      %321 = vmatprep.subr.bf16.mxu0 0
      %322 = vmatpush1.bf16.msra.mxu0 0
      %323 = vmatprep.mubr.bf16.mxu0 0
      %324 = vmatmul.mubr.bf16.gmra.mrb[0].mxu0 %v226
      %v325 = vpop.f32.mrb[0].mxu0
      %v326 = vadd.f32 0.0, %v325
      %v327 = vpop.f32.mrb[0].mxu0
      %v328 = vpop.f32.mrb[0].mxu0
      %v329 = vpop.f32.mrb[0].mxu0
      %330 = vdwg.mxu0
      %vm331 = vcmask 519168
      %332 = vst.msk [vmem:[%s192] sm:$0xf] %vm331, %v326
      %p333 = scmp.lt.s32.totalorder %s15, 1
      %s334 = scalar_select %p333, %s15, 1
      %s335 = smul.addr %s334, 4
      %s336 = scalar_lea.vmem %s4, %s335
      // Predicated region
      $region37: #{encoder_forward.10} parent=35 // pred_check
        %p337 = pneg %p122
      $region38: #{encoder_forward.10} parent=35 // pred_check_branch
        %339 = sbr.rel (%p337) target = $region40
      $region39: #{encoder_forward.10} parent=35 // pred_region
        _
      $region40: #{encoder_forward.10} parent=35 // pred_fallthru
        _
    $region36: #{encoder_forward.10} parent=5 // pred_fallthru
      _
    %p340 = scmp.le.s32.totalorder 2, %s10
    // Predicated region
    $region41: #{encoder_forward.10} parent=5 // pred_check
      %p341 = pneg %p340
    $region42: #{encoder_forward.10} parent=5 // pred_check_branch
      %343 = sbr.rel (%p341) target = $region44
    $region43: #{encoder_forward.10} parent=5 // pred_region
      %s344 = ssub.s32 %s10, 2
      // Predicated region
      $region45: #{encoder_forward.10} parent=43 // pred_check
        %p345 = pneg %p128
      $region46: #{encoder_forward.10} parent=43 // pred_check_branch
        %347 = sbr.rel (%p345) target = $region48
      $region47: #{encoder_forward.10} parent=43 // pred_region
        %p348 = scmp.lt.s32.totalorder %s16, 1
        %s349 = scalar_select %p348, %s16, 1
        %s350 = smul.addr %s349, 4
        %s351 = scalar_lea.vmem %s4, %s350
      $region48: #{encoder_forward.10} parent=43 // pred_fallthru
        _
    $region44: #{encoder_forward.10} parent=5 // pred_fallthru
      _
  $region6: #{encoder_forward.10} parent=0 // loop_footer
    %s14 = sadd.s32 1, %s10
  $region7: #{encoder_forward.10} parent=0 // loop_footer_branch
    %9 = sbr.rel target = $region3
  $region8: #{encoder_forward.10} parent=0 // loop_exit
    _

// kernel: encoder_forward.13
$region0: #{encoder_forward.13}
  #allocation0 [shape = 'u32[]', space=smem, size = 0x4, offset = 0x4, fixed_abs, tag = 'smem constant byte address 0x4 - core index']
  #allocation1 [shape = 'u32[144,128]{1,0:T(1,128)}', space=vmem, size = 0x12000, scoped, tag = 'internal scratch']
  %s0 = inlined_call_operand.vmem [shape: f32[2,4,64], index: 0, kind: input, shape index: {}]
  %s1 = inlined_call_operand.vmem [shape: f32[1,64], index: 1, kind: input, shape index: {}]
  %s2 = inlined_call_operand.vmem [shape: f32[1,64], index: 2, kind: input, shape index: {}]
  %s3 = inlined_call_operand.hbm [shape: f32[2,4,64], index: 3, kind: output, shape index: {}]
  %s4 = sld [smem:[#allocation0]]
  $region45: #{encoder_forward.13} parent=0
    _
  %s6 = ssub.s32 1, %s4
  %s7 = scalar_select 0, %s6, %s4
  $region1: #{encoder_forward.13} parent=0
    #allocation2 [shape = 'u8[4096]{0}', space=vmem, size = 0x1000, scoped, tag = 'output window, operand 0']
    #allocation3 [shape = 's32[2]{0}', space=sflag, size = 0x8, scoped, tag = 'scoped memory for encoder_forward.13']
    %8 = vsyncpa [#allocation3], 0
    %s9 = scalar_lea.sflag [#allocation3], 1
    %10 = vsyncpa %s9, 0
    loop: start=0, step=1, limit=4
    $region2: #{encoder_forward.13} parent=1 // loop_pre_header
      _
    $region3: #{encoder_forward.13} parent=1 // loop_header
      %s12 = sphi 0, %s16
      %p13 = scmp.ge.s32.totalorder %s12, 4
      %s22 = sphi 0, %s24
      %s25 = sphi 0, %s22
      %s26 = sphi 0, %s25
      %s42 = sphi 0, %s26
      %s46 = sphi 0, %s46
      %s48 = sphi 0, %s46
      %s49 = sphi 0, %s48
      %s63 = sphi 0, %s49
      %s67 = sphi 0, %s67
      %s69 = sphi 0, %s67
      %s70 = sphi 0, %s69
      %s84 = sphi 0, %s70
      %s90 = sphi 0, %s92
      %s93 = sphi 0, %s90
      %s94 = sphi 0, %s93
      %s110 = sphi 0, %s94
    $region4: #{encoder_forward.13} parent=1 // loop_header_branch
      %15 = sbr.rel (%p13) target = $region8
    $region5: #{encoder_forward.13} parent=1 // loop_body
      %s17 = ssub.s32 %s12, 1
      %s18 = ssub.s32 %s12, 2
      %s19 = sadd.s32 %s12, 1
      %s20 = ssub.s32 %s12, %s19
      %p21 = scmp.eq.s32.totalorder %s20, 0
      %s23 = sadd.s32 %s22, 1
      %s24 = scalar_select %p21, %s22, %s23
      %p27 = pneg %p21
      %p28 = scmp.eq.s32.totalorder %s12, 1
      %p29 = por %p27, %p28
      %p30 = scmp.ne.s32.totalorder %s22, %s25
      %p31 = scmp.eq.s32.totalorder %s12, 0
      %p32 = por %p30, %p31
      %p33 = scmp.ne.s32.totalorder %s22, %s25
      %p34 = scmp.eq.s32.totalorder %s17, 1
      %p35 = por %p33, %p34
      %p36 = scmp.ne.s32.totalorder %s25, %s26
      %p37 = scmp.eq.s32.totalorder %s17, 0
      %p38 = por %p36, %p37
      %p39 = scmp.ne.s32.totalorder %s25, %s26
      %p40 = scmp.eq.s32.totalorder %s18, 1
      %p41 = por %p39, %p40
      %p43 = scmp.ne.s32.totalorder %s26, %s42
      %p44 = scmp.eq.s32.totalorder %s18, 0
      %p45 = por %p43, %p44
      %s47 = sadd.s32 %s46, 1
      %p50 = scmp.eq.s32.totalorder %s12, 1
      %p51 = scmp.ne.s32.totalorder %s46, %s48
      %p52 = scmp.eq.s32.totalorder %s12, 0
      %p53 = por %p51, %p52
      %p54 = scmp.ne.s32.totalorder %s46, %s48
      %p55 = scmp.eq.s32.totalorder %s17, 1
      %p56 = por %p54, %p55
      %p57 = scmp.ne.s32.totalorder %s48, %s49
      %p58 = scmp.eq.s32.totalorder %s17, 0
      %p59 = por %p57, %p58
      %p60 = scmp.ne.s32.totalorder %s48, %s49
      %p61 = scmp.eq.s32.totalorder %s18, 1
      %p62 = por %p60, %p61
      %p64 = scmp.ne.s32.totalorder %s49, %s63
      %p65 = scmp.eq.s32.totalorder %s18, 0
      %p66 = por %p64, %p65
      %s68 = sadd.s32 %s67, 1
      %p71 = scmp.eq.s32.totalorder %s12, 1
      %p72 = scmp.ne.s32.totalorder %s67, %s69
      %p73 = scmp.eq.s32.totalorder %s12, 0
      %p74 = por %p72, %p73
      %p75 = scmp.ne.s32.totalorder %s67, %s69
      %p76 = scmp.eq.s32.totalorder %s17, 1
      %p77 = por %p75, %p76
      %p78 = scmp.ne.s32.totalorder %s69, %s70
      %p79 = scmp.eq.s32.totalorder %s17, 0
      %p80 = por %p78, %p79
      %p81 = scmp.ne.s32.totalorder %s69, %s70
      %p82 = scmp.eq.s32.totalorder %s18, 1
      %p83 = por %p81, %p82
      %p85 = scmp.ne.s32.totalorder %s70, %s84
      %p86 = scmp.eq.s32.totalorder %s18, 0
      %p87 = por %p85, %p86
      %s88 = ssub.s32 %s12, %s19
      %p89 = scmp.eq.s32.totalorder %s88, 0
      %s91 = sadd.s32 %s90, 1
      %s92 = scalar_select %p89, %s90, %s91
      %p95 = pneg %p89
      %p96 = scmp.eq.s32.totalorder %s12, 1
      %p97 = por %p95, %p96
      %p98 = scmp.ne.s32.totalorder %s90, %s93
      %p99 = scmp.eq.s32.totalorder %s12, 0
      %p100 = por %p98, %p99
      %p101 = scmp.ne.s32.totalorder %s90, %s93
      %p102 = scmp.eq.s32.totalorder %s17, 1
      %p103 = por %p101, %p102
      %p104 = scmp.ne.s32.totalorder %s93, %s94
      %p105 = scmp.eq.s32.totalorder %s17, 0
      %p106 = por %p104, %p105
      %p107 = scmp.ne.s32.totalorder %s93, %s94
      %p108 = scmp.eq.s32.totalorder %s18, 1
      %p109 = por %p107, %p108
      %p111 = scmp.ne.s32.totalorder %s94, %s110
      %p112 = scmp.eq.s32.totalorder %s18, 0
      %p113 = por %p111, %p112
      %p114 = scmp.le.s32.totalorder 1, %s12
      %p115 = scmp.lt.s32.totalorder %s12, 3
      %p116 = pnand %p114, %p115
      %p117 = pneg %p116
      // Predicated region
      $region9: #{encoder_forward.13} parent=5 // pred_check
        _
      $region10: #{encoder_forward.13} parent=5 // pred_check_branch
        %119 = sbr.rel (%p116) target = $region12
      $region11: #{encoder_forward.13} parent=5 // pred_region
        %s120 = ssub.s32 %s12, 1
        // Predicated region
        $region13: #{encoder_forward.13} parent=11 // pred_check
          %p121 = pneg %p59
        $region14: #{encoder_forward.13} parent=11 // pred_check_branch
          %123 = sbr.rel (%p121) target = $region16
        $region15: #{encoder_forward.13} parent=11 // pred_region
          _
        $region16: #{encoder_forward.13} parent=11 // pred_fallthru
          _
        // Predicated region
        $region17: #{encoder_forward.13} parent=11 // pred_check
          %p124 = pneg %p80
        $region18: #{encoder_forward.13} parent=11 // pred_check_branch
          %126 = sbr.rel (%p124) target = $region20
        $region19: #{encoder_forward.13} parent=11 // pred_region
          _
        $region20: #{encoder_forward.13} parent=11 // pred_fallthru
          _
      $region12: #{encoder_forward.13} parent=5 // pred_fallthru
        _
      %p127 = scmp.lt.s32.totalorder %s12, 2
      // Predicated region
      $region21: #{encoder_forward.13} parent=5 // pred_check
        %p128 = pneg %p127
      $region22: #{encoder_forward.13} parent=5 // pred_check_branch
        %130 = sbr.rel (%p128) target = $region24
      $region23: #{encoder_forward.13} parent=5 // pred_region
        // Predicated region
        $region25: #{encoder_forward.13} parent=23 // pred_check
          %p131 = pneg %p32
        $region26: #{encoder_forward.13} parent=23 // pred_check_branch
          %133 = sbr.rel (%p131) target = $region28
        $region27: #{encoder_forward.13} parent=23 // pred_region
          %p134 = scmp.lt.s32.totalorder %s12, 1
          %s135 = scalar_select %p134, %s12, 1
          %s136 = smul.addr %s135, 4
          %s137 = scalar_lea.vmem %s0, %s136
        $region28: #{encoder_forward.13} parent=23 // pred_fallthru
          _
      $region24: #{encoder_forward.13} parent=5 // pred_fallthru
        _
      %p138 = scmp.le.s32.totalorder 1, %s12
      %p139 = scmp.lt.s32.totalorder %s12, 3
      %p140 = pnand %p138, %p139
      %p141 = pneg %p140
      // Predicated region
      $region29: #{encoder_forward.13} parent=5 // pred_check
        _
      $region30: #{encoder_forward.13} parent=5 // pred_check_branch
        %143 = sbr.rel (%p140) target = $region32
      $region31: #{encoder_forward.13} parent=5 // pred_region
        %s144 = ssub.s32 %s12, 1
        %p145 = scmp.lt.s32.totalorder %s17, 1
        %s146 = scalar_select %p145, %s17, 1
        %s147 = smul.addr %s146, 4
        %s148 = scalar_lea.vmem %s0, %s147
        %p149 = pneg %p38
        %p150 = pneg %p35
        %p151 = pneg %p59
        %p152 = pneg %p56
        %p153 = pneg %p80
        %p154 = pneg %p77
        %p155 = pneg %p106
        %p156 = pneg %p103
        %s157 = sand.u32 %s93, 1
        %s158 = scalar_lea.sflag [#allocation3], %s157
        %s159 = sand.u32 %s93, 1
        %s160 = smul.addr %s159, 4
        %s161 = scalar_lea.vmem [#allocation2], %s160
        %p162 = scmp.lt.s32.totalorder %s17, 1
        %s163 = scalar_select %p162, %s17, 1
        %s164 = smul.addr %s163, 4
        %s165 = scalar_lea.vmem %s0, %s164
        %v166 = vld [vmem:[%s165] sm:$0xf]
        %v167 = vld [vmem:[%s1] sm:$0x1]
        %v168 = vld [vmem:[%s2] sm:$0x1]
        %vm169 = vcmask 519168
        %v170 = vsel %vm169, %v166, 0.0
        %171 = vadd.xlane.f32.xlu0 %v170
        %v172 = vpop.xlane.xlu0 %171
        %v173 = vrcp.pop 64.0
        %v174 = vmul.f32 %v172, %v173
        %v175 = vsub.f32 %v166, %v174
        %v176 = vmul.f32 %v175, %v175
        %v177 = vsel %vm169, %v176, 0.0
        %178 = vadd.xlane.f32.xlu0 %v177
        %v179 = vpop.xlane.xlu0 %178
        %v180 = vmul.f32 %v179, %v173
        %v181 = vadd.f32 %v180, 1e-05
        %v182 = vrsqrt.pop %v181
        %v183 = vmul.f32 %v175, %v182
        %v185 = vlaneseq
        %v186 = vshrl.u32 %v185, 7
        %v187 = vsub.s32 0, %v186
        %v188 = vrot.slane %v167, %v187
        %v190 = vmul.f32 %v183, %v188
        %v192 = vlaneseq
        %v193 = vshrl.u32 %v192, 7
        %v194 = vsub.s32 0, %v193
        %v195 = vrot.slane %v168, %v194
        %v197 = vadd.f32 %v190, %v195
        %198 = vst.msk [vmem:[%s161] sm:$0xf] %vm169, %v197
        %s199 = sand.u32 %s93, 1
        %s200 = scalar_lea.sflag [#allocation3], %s199
        %s201 = sand.u32 %s93, 1
        %s202 = smul.addr %s201, 4
        %s203 = scalar_lea.vmem [#allocation2], %s202
        // Predicated region
        $region33: #{encoder_forward.13} parent=31 // pred_check
          %p204 = pneg %p103
        $region34: #{encoder_forward.13} parent=31 // pred_check_branch
          %206 = sbr.rel (%p204) target = $region36
        $region35: #{encoder_forward.13} parent=31 // pred_region
          %s208 = ssub.s32 64, 64
          %209 = vsyncadd %s200, %s208
          %s210 = smul.addr %s17, 64
          %s211 = scalar_lea.hbm %s3, %s210
          %s213 = sshll.u32 %s203, 4
          %s214 = int_to_ptr.vmem [resolvable:$true] %s213
          %216 = dma.vmem_to_hbm [thread:$0]  %s214, 64, %s211, %s200
        $region36: #{encoder_forward.13} parent=31 // pred_fallthru
          _
      $region32: #{encoder_forward.13} parent=5 // pred_fallthru
        _
      %p217 = scmp.le.s32.totalorder 2, %s12
      // Predicated region
      $region37: #{encoder_forward.13} parent=5 // pred_check
        %p218 = pneg %p217
      $region38: #{encoder_forward.13} parent=5 // pred_check_branch
        %220 = sbr.rel (%p218) target = $region40
      $region39: #{encoder_forward.13} parent=5 // pred_region
        %s221 = ssub.s32 %s12, 2
        // Predicated region
        $region41: #{encoder_forward.13} parent=39 // pred_check
          %p222 = pneg %p109
        $region42: #{encoder_forward.13} parent=39 // pred_check_branch
          %224 = sbr.rel (%p222) target = $region44
        $region43: #{encoder_forward.13} parent=39 // pred_region
          %s225 = sand.u32 %s94, 1
          %s226 = scalar_lea.sflag [#allocation3], %s225
          %s227 = sand.u32 %s94, 1
          %s228 = smul.addr %s227, 4
          %s229 = scalar_lea.vmem [#allocation2], %s228
          %230 = dma.done %s226, 64
        $region44: #{encoder_forward.13} parent=39 // pred_fallthru
          _
      $region40: #{encoder_forward.13} parent=5 // pred_fallthru
        _
    $region6: #{encoder_forward.13} parent=1 // loop_footer
      %s16 = sadd.s32 1, %s12
    $region7: #{encoder_forward.13} parent=1 // loop_footer_branch
      %11 = sbr.rel target = $region3
    $region8: #{encoder_forward.13} parent=1 // loop_exit
      _
    %231 = vsyncpa [#allocation3], 1
    %s232 = scalar_lea.sflag [#allocation3], 1
    %233 = vsyncpa %s232, 1

// kernel: encoder_forward.11
$region0: #{encoder_forward.11}
  #allocation0 [shape = 'u32[]', space=smem, size = 0x4, offset = 0x4, fixed_abs, tag = 'smem constant byte address 0x4 - core index']
  #allocation1 [shape = 'u32[144,128]{1,0:T(1,128)}', space=vmem, size = 0x12000, scoped, tag = 'internal scratch']
  %s0 = inlined_call_operand.vmem [shape: f32[2,4,64], index: 0, kind: input, shape index: {}, may-alias: {0,1}]
  %s1 = inlined_call_operand.vmem [shape: f32[2,4,64], index: 1, kind: input, shape index: {}, may-alias: {0,1}]
  %s2 = inlined_call_operand.vmem [shape: f32[4,4,4], index: 2, kind: input, shape index: {}]
  %s3 = inlined_call_operand.vmem [shape: f32[4,4], index: 3, kind: input, shape index: {}]
  %s4 = inlined_call_operand.vmem [shape: f32[1,64], index: 4, kind: input, shape index: {}]
  %s5 = inlined_call_operand.vmem [shape: f32[1,64], index: 5, kind: input, shape index: {}]
  %s6 = inlined_call_operand.vmem [shape: bf16[64,64], index: 6, kind: input, shape index: {}]
  %s7 = inlined_call_operand.vmem [shape: f32[1,64], index: 7, kind: input, shape index: {}]
  %s8 = inlined_call_operand.vmem [shape: bf16[64,64], index: 8, kind: input, shape index: {}]
  %s9 = inlined_call_operand.vmem [shape: f32[1,64], index: 9, kind: input, shape index: {}]
  %s10 = inlined_call_operand.vmem [shape: bf16[64,64], index: 10, kind: input, shape index: {}]
  %s11 = inlined_call_operand.vmem [shape: f32[1,64], index: 11, kind: input, shape index: {}]
  %s12 = inlined_call_operand.vmem [shape: bf16[64,64], index: 12, kind: input, shape index: {}]
  %s13 = inlined_call_operand.vmem [shape: f32[1,64], index: 13, kind: input, shape index: {}]
  %s14 = inlined_call_operand.vmem [shape: f32[1,64], index: 14, kind: input, shape index: {}]
  %s15 = inlined_call_operand.vmem [shape: f32[1,64], index: 15, kind: input, shape index: {}]
  %s16 = inlined_call_operand.vmem [shape: bf16[64,256], index: 16, kind: input, shape index: {}]
  %s17 = inlined_call_operand.vmem [shape: f32[1,256], index: 17, kind: input, shape index: {}]
  %s18 = inlined_call_operand.vmem [shape: bf16[256,64], index: 18, kind: input, shape index: {}]
  %s19 = inlined_call_operand.vmem [shape: f32[1,64], index: 19, kind: input, shape index: {}]
  %s20 = inlined_call_operand.vmem [shape: f32[2,4,64], index: 20, kind: output, shape index: {}]
  %s21 = sld [smem:[#allocation0]]
  $region113: #{encoder_forward.11} parent=0
    _
  %s23 = ssub.s32 1, %s21
  %s24 = scalar_select 0, %s23, %s21
  loop: start=0, step=1, limit=4
  $region2: #{encoder_forward.11} parent=0 // loop_pre_header
    _
  $region3: #{encoder_forward.11} parent=0 // loop_header
    %s26 = sphi 0, %s30
    %p27 = scmp.ge.s32.totalorder %s26, 4
    %s33 = sphi 0, %s45
    %s34 = sphi 0, %s41
    %s35 = sphi 0, %s33
    %s36 = sphi 0, %s34
    %s37 = sphi 0, %s35
    %s38 = sphi 0, %s36
    %s50 = sphi 0, %s52
    %s53 = sphi 0, %s50
    %s54 = sphi 0, %s53
    %s70 = sphi 0, %s54
    %s76 = sphi 0, %s78
    %s79 = sphi 0, %s76
    %s80 = sphi 0, %s79
    %s96 = sphi 0, %s80
    %s102 = sphi 0, %s104
    %s105 = sphi 0, %s102
    %s106 = sphi 0, %s105
    %s122 = sphi 0, %s106
    %s128 = sphi 0, %s130
    %s131 = sphi 0, %s128
    %s132 = sphi 0, %s131
    %s148 = sphi 0, %s132
    %s152 = sphi 0, %s152
    %s154 = sphi 0, %s152
    %s155 = sphi 0, %s154
    %s169 = sphi 0, %s155
    %s173 = sphi 0, %s173
    %s175 = sphi 0, %s173
    %s176 = sphi 0, %s175
    %s190 = sphi 0, %s176
    %s194 = sphi 0, %s194
    %s196 = sphi 0, %s194
    %s197 = sphi 0, %s196
    %s211 = sphi 0, %s197
    %s215 = sphi 0, %s215
    %s217 = sphi 0, %s215
    %s218 = sphi 0, %s217
    %s232 = sphi 0, %s218
    %s236 = sphi 0, %s236
    %s238 = sphi 0, %s236
    %s239 = sphi 0, %s238
    %s253 = sphi 0, %s239
    %s257 = sphi 0, %s257
    %s259 = sphi 0, %s257
    %s260 = sphi 0, %s259
    %s274 = sphi 0, %s260
    %s278 = sphi 0, %s278
    %s280 = sphi 0, %s278
    %s281 = sphi 0, %s280
    %s295 = sphi 0, %s281
    %s299 = sphi 0, %s299
    %s301 = sphi 0, %s299
    %s302 = sphi 0, %s301
    %s316 = sphi 0, %s302
    %s320 = sphi 0, %s320
    %s322 = sphi 0, %s320
    %s323 = sphi 0, %s322
    %s337 = sphi 0, %s323
    %s341 = sphi 0, %s341
    %s343 = sphi 0, %s341
    %s344 = sphi 0, %s343
    %s358 = sphi 0, %s344
    %s362 = sphi 0, %s362
    %s364 = sphi 0, %s362
    %s365 = sphi 0, %s364
    %s379 = sphi 0, %s365
    %s383 = sphi 0, %s383
    %s385 = sphi 0, %s383
    %s386 = sphi 0, %s385
    %s400 = sphi 0, %s386
    %s404 = sphi 0, %s404
    %s406 = sphi 0, %s404
    %s407 = sphi 0, %s406
    %s421 = sphi 0, %s407
    %s425 = sphi 0, %s425
    %s427 = sphi 0, %s425
    %s428 = sphi 0, %s427
    %s442 = sphi 0, %s428
    %s446 = sphi 0, %s446
    %s448 = sphi 0, %s446
    %s449 = sphi 0, %s448
    %s463 = sphi 0, %s449
    %s467 = sphi 0, %s467
    %s469 = sphi 0, %s467
    %s470 = sphi 0, %s469
    %s484 = sphi 0, %s470
    %s492 = sphi 0, %s494
    %s495 = sphi 0, %s492
    %s496 = sphi 0, %s495
    %s512 = sphi 0, %s496
  $region4: #{encoder_forward.11} parent=0 // loop_header_branch
    %29 = sbr.rel (%p27) target = $region8
  $region5: #{encoder_forward.11} parent=0 // loop_body
    %s31 = ssub.s32 %s26, 1
    %s32 = ssub.s32 %s26, 2
    %s39 = sadd.s32 1, %s34
    %p40 = scmp.ge.s32.totalorder %s39, 1
    %s41 = scalar_select %p40, 0, %s39
    %s42 = sadd.s32 1, %s33
    %s43 = scalar_select %p40, %s42, %s33
    %p44 = scmp.ge.s32.totalorder %s43, 2
    %s45 = scalar_select %p44, 0, %s43
    %s46 = ssub.s32 %s33, %s45
    %s47 = ssub.s32 %s34, %s41
    %s48 = sor.u32 %s46, %s47
    %p49 = scmp.eq.s32.totalorder %s48, 0
    %s51 = sadd.s32 %s50, 1
    %s52 = scalar_select %p49, %s50, %s51
    %p55 = pneg %p49
    %p56 = scmp.eq.s32.totalorder %s26, 1
    %p57 = por %p55, %p56
    %p58 = scmp.ne.s32.totalorder %s50, %s53
    %p59 = scmp.eq.s32.totalorder %s26, 0
    %p60 = por %p58, %p59
    %p61 = scmp.ne.s32.totalorder %s50, %s53
    %p62 = scmp.eq.s32.totalorder %s31, 1
    %p63 = por %p61, %p62
    %p64 = scmp.ne.s32.totalorder %s53, %s54
    %p65 = scmp.eq.s32.totalorder %s31, 0
    %p66 = por %p64, %p65
    %p67 = scmp.ne.s32.totalorder %s53, %s54
    %p68 = scmp.eq.s32.totalorder %s32, 1
    %p69 = por %p67, %p68
    %p71 = scmp.ne.s32.totalorder %s54, %s70
    %p72 = scmp.eq.s32.totalorder %s32, 0
    %p73 = por %p71, %p72
    %s74 = ssub.s32 %s33, %s45
    %p75 = scmp.eq.s32.totalorder %s74, 0
    %s77 = sadd.s32 %s76, 1
    %s78 = scalar_select %p75, %s76, %s77
    %p81 = pneg %p75
    %p82 = scmp.eq.s32.totalorder %s26, 1
    %p83 = por %p81, %p82
    %p84 = scmp.ne.s32.totalorder %s76, %s79
    %p85 = scmp.eq.s32.totalorder %s26, 0
    %p86 = por %p84, %p85
    %p87 = scmp.ne.s32.totalorder %s76, %s79
    %p88 = scmp.eq.s32.totalorder %s31, 1
    %p89 = por %p87, %p88
    %p90 = scmp.ne.s32.totalorder %s79, %s80
    %p91 = scmp.eq.s32.totalorder %s31, 0
    %p92 = por %p90, %p91
    %p93 = scmp.ne.s32.totalorder %s79, %s80
    %p94 = scmp.eq.s32.totalorder %s32, 1
    %p95 = por %p93, %p94
    %p97 = scmp.ne.s32.totalorder %s80, %s96
    %p98 = scmp.eq.s32.totalorder %s32, 0
    %p99 = por %p97, %p98
    %s100 = ssub.s32 %s34, %s41
    %p101 = scmp.eq.s32.totalorder %s100, 0
    %s103 = sadd.s32 %s102, 1
    %s104 = scalar_select %p101, %s102, %s103
    %p107 = pneg %p101
    %p108 = scmp.eq.s32.totalorder %s26, 1
    %p109 = por %p107, %p108
    %p110 = scmp.ne.s32.totalorder %s102, %s105
    %p111 = scmp.eq.s32.totalorder %s26, 0
    %p112 = por %p110, %p111
    %p113 = scmp.ne.s32.totalorder %s102, %s105
    %p114 = scmp.eq.s32.totalorder %s31, 1
    %p115 = por %p113, %p114
    %p116 = scmp.ne.s32.totalorder %s105, %s106
    %p117 = scmp.eq.s32.totalorder %s31, 0
    %p118 = por %p116, %p117
    %p119 = scmp.ne.s32.totalorder %s105, %s106
    %p120 = scmp.eq.s32.totalorder %s32, 1
    %p121 = por %p119, %p120
    %p123 = scmp.ne.s32.totalorder %s106, %s122
    %p124 = scmp.eq.s32.totalorder %s32, 0
    %p125 = por %p123, %p124
    %s126 = ssub.s32 %s34, %s41
    %p127 = scmp.eq.s32.totalorder %s126, 0
    %s129 = sadd.s32 %s128, 1
    %s130 = scalar_select %p127, %s128, %s129
    %p133 = pneg %p127
    %p134 = scmp.eq.s32.totalorder %s26, 1
    %p135 = por %p133, %p134
    %p136 = scmp.ne.s32.totalorder %s128, %s131
    %p137 = scmp.eq.s32.totalorder %s26, 0
    %p138 = por %p136, %p137
    %p139 = scmp.ne.s32.totalorder %s128, %s131
    %p140 = scmp.eq.s32.totalorder %s31, 1
    %p141 = por %p139, %p140
    %p142 = scmp.ne.s32.totalorder %s131, %s132
    %p143 = scmp.eq.s32.totalorder %s31, 0
    %p144 = por %p142, %p143
    %p145 = scmp.ne.s32.totalorder %s131, %s132
    %p146 = scmp.eq.s32.totalorder %s32, 1
    %p147 = por %p145, %p146
    %p149 = scmp.ne.s32.totalorder %s132, %s148
    %p150 = scmp.eq.s32.totalorder %s32, 0
    %p151 = por %p149, %p150
    %s153 = sadd.s32 %s152, 1
    %p156 = scmp.eq.s32.totalorder %s26, 1
    %p157 = scmp.ne.s32.totalorder %s152, %s154
    %p158 = scmp.eq.s32.totalorder %s26, 0
    %p159 = por %p157, %p158
    %p160 = scmp.ne.s32.totalorder %s152, %s154
    %p161 = scmp.eq.s32.totalorder %s31, 1
    %p162 = por %p160, %p161
    %p163 = scmp.ne.s32.totalorder %s154, %s155
    %p164 = scmp.eq.s32.totalorder %s31, 0
    %p165 = por %p163, %p164
    %p166 = scmp.ne.s32.totalorder %s154, %s155
    %p167 = scmp.eq.s32.totalorder %s32, 1
    %p168 = por %p166, %p167
    %p170 = scmp.ne.s32.totalorder %s155, %s169
    %p171 = scmp.eq.s32.totalorder %s32, 0
    %p172 = por %p170, %p171
    %s174 = sadd.s32 %s173, 1
    %p177 = scmp.eq.s32.totalorder %s26, 1
    %p178 = scmp.ne.s32.totalorder %s173, %s175
    %p179 = scmp.eq.s32.totalorder %s26, 0
    %p180 = por %p178, %p179
    %p181 = scmp.ne.s32.totalorder %s173, %s175
    %p182 = scmp.eq.s32.totalorder %s31, 1
    %p183 = por %p181, %p182
    %p184 = scmp.ne.s32.totalorder %s175, %s176
    %p185 = scmp.eq.s32.totalorder %s31, 0
    %p186 = por %p184, %p185
    %p187 = scmp.ne.s32.totalorder %s175, %s176
    %p188 = scmp.eq.s32.totalorder %s32, 1
    %p189 = por %p187, %p188
    %p191 = scmp.ne.s32.totalorder %s176, %s190
    %p192 = scmp.eq.s32.totalorder %s32, 0
    %p193 = por %p191, %p192
    %s195 = sadd.s32 %s194, 1
    %p198 = scmp.eq.s32.totalorder %s26, 1
    %p199 = scmp.ne.s32.totalorder %s194, %s196
    %p200 = scmp.eq.s32.totalorder %s26, 0
    %p201 = por %p199, %p200
    %p202 = scmp.ne.s32.totalorder %s194, %s196
    %p203 = scmp.eq.s32.totalorder %s31, 1
    %p204 = por %p202, %p203
    %p205 = scmp.ne.s32.totalorder %s196, %s197
    %p206 = scmp.eq.s32.totalorder %s31, 0
    %p207 = por %p205, %p206
    %p208 = scmp.ne.s32.totalorder %s196, %s197
    %p209 = scmp.eq.s32.totalorder %s32, 1
    %p210 = por %p208, %p209
    %p212 = scmp.ne.s32.totalorder %s197, %s211
    %p213 = scmp.eq.s32.totalorder %s32, 0
    %p214 = por %p212, %p213
    %s216 = sadd.s32 %s215, 1
    %p219 = scmp.eq.s32.totalorder %s26, 1
    %p220 = scmp.ne.s32.totalorder %s215, %s217
    %p221 = scmp.eq.s32.totalorder %s26, 0
    %p222 = por %p220, %p221
    %p223 = scmp.ne.s32.totalorder %s215, %s217
    %p224 = scmp.eq.s32.totalorder %s31, 1
    %p225 = por %p223, %p224
    %p226 = scmp.ne.s32.totalorder %s217, %s218
    %p227 = scmp.eq.s32.totalorder %s31, 0
    %p228 = por %p226, %p227
    %p229 = scmp.ne.s32.totalorder %s217, %s218
    %p230 = scmp.eq.s32.totalorder %s32, 1
    %p231 = por %p229, %p230
    %p233 = scmp.ne.s32.totalorder %s218, %s232
    %p234 = scmp.eq.s32.totalorder %s32, 0
    %p235 = por %p233, %p234
    %s237 = sadd.s32 %s236, 1
    %p240 = scmp.eq.s32.totalorder %s26, 1
    %p241 = scmp.ne.s32.totalorder %s236, %s238
    %p242 = scmp.eq.s32.totalorder %s26, 0
    %p243 = por %p241, %p242
    %p244 = scmp.ne.s32.totalorder %s236, %s238
    %p245 = scmp.eq.s32.totalorder %s31, 1
    %p246 = por %p244, %p245
    %p247 = scmp.ne.s32.totalorder %s238, %s239
    %p248 = scmp.eq.s32.totalorder %s31, 0
    %p249 = por %p247, %p248
    %p250 = scmp.ne.s32.totalorder %s238, %s239
    %p251 = scmp.eq.s32.totalorder %s32, 1
    %p252 = por %p250, %p251
    %p254 = scmp.ne.s32.totalorder %s239, %s253
    %p255 = scmp.eq.s32.totalorder %s32, 0
    %p256 = por %p254, %p255
    %s258 = sadd.s32 %s257, 1
    %p261 = scmp.eq.s32.totalorder %s26, 1
    %p262 = scmp.ne.s32.totalorder %s257, %s259
    %p263 = scmp.eq.s32.totalorder %s26, 0
    %p264 = por %p262, %p263
    %p265 = scmp.ne.s32.totalorder %s257, %s259
    %p266 = scmp.eq.s32.totalorder %s31, 1
    %p267 = por %p265, %p266
    %p268 = scmp.ne.s32.totalorder %s259, %s260
    %p269 = scmp.eq.s32.totalorder %s31, 0
    %p270 = por %p268, %p269
    %p271 = scmp.ne.s32.totalorder %s259, %s260
    %p272 = scmp.eq.s32.totalorder %s32, 1
    %p273 = por %p271, %p272
    %p275 = scmp.ne.s32.totalorder %s260, %s274
    %p276 = scmp.eq.s32.totalorder %s32, 0
    %p277 = por %p275, %p276
    %s279 = sadd.s32 %s278, 1
    %p282 = scmp.eq.s32.totalorder %s26, 1
    %p283 = scmp.ne.s32.totalorder %s278, %s280
    %p284 = scmp.eq.s32.totalorder %s26, 0
    %p285 = por %p283, %p284
    %p286 = scmp.ne.s32.totalorder %s278, %s280
    %p287 = scmp.eq.s32.totalorder %s31, 1
    %p288 = por %p286, %p287
    %p289 = scmp.ne.s32.totalorder %s280, %s281
    %p290 = scmp.eq.s32.totalorder %s31, 0
    %p291 = por %p289, %p290
    %p292 = scmp.ne.s32.totalorder %s280, %s281
    %p293 = scmp.eq.s32.totalorder %s32, 1
    %p294 = por %p292, %p293
    %p296 = scmp.ne.s32.totalorder %s281, %s295
    %p297 = scmp.eq.s32.totalorder %s32, 0
    %p298 = por %p296, %p297
    %s300 = sadd.s32 %s299, 1
    %p303 = scmp.eq.s32.totalorder %s26, 1
    %p304 = scmp.ne.s32.totalorder %s299, %s301
    %p305 = scmp.eq.s32.totalorder %s26, 0
    %p306 = por %p304, %p305
    %p307 = scmp.ne.s32.totalorder %s299, %s301
    %p308 = scmp.eq.s32.totalorder %s31, 1
    %p309 = por %p307, %p308
    %p310 = scmp.ne.s32.totalorder %s301, %s302
    %p311 = scmp.eq.s32.totalorder %s31, 0
    %p312 = por %p310, %p311
    %p313 = scmp.ne.s32.totalorder %s301, %s302
    %p314 = scmp.eq.s32.totalorder %s32, 1
    %p315 = por %p313, %p314
    %p317 = scmp.ne.s32.totalorder %s302, %s316
    %p318 = scmp.eq.s32.totalorder %s32, 0
    %p319 = por %p317, %p318
    %s321 = sadd.s32 %s320, 1
    %p324 = scmp.eq.s32.totalorder %s26, 1
    %p325 = scmp.ne.s32.totalorder %s320, %s322
    %p326 = scmp.eq.s32.totalorder %s26, 0
    %p327 = por %p325, %p326
    %p328 = scmp.ne.s32.totalorder %s320, %s322
    %p329 = scmp.eq.s32.totalorder %s31, 1
    %p330 = por %p328, %p329
    %p331 = scmp.ne.s32.totalorder %s322, %s323
    %p332 = scmp.eq.s32.totalorder %s31, 0
    %p333 = por %p331, %p332
    %p334 = scmp.ne.s32.totalorder %s322, %s323
    %p335 = scmp.eq.s32.totalorder %s32, 1
    %p336 = por %p334, %p335
    %p338 = scmp.ne.s32.totalorder %s323, %s337
    %p339 = scmp.eq.s32.totalorder %s32, 0
    %p340 = por %p338, %p339
    %s342 = sadd.s32 %s341, 1
    %p345 = scmp.eq.s32.totalorder %s26, 1
    %p346 = scmp.ne.s32.totalorder %s341, %s343
    %p347 = scmp.eq.s32.totalorder %s26, 0
    %p348 = por %p346, %p347
    %p349 = scmp.ne.s32.totalorder %s341, %s343
    %p350 = scmp.eq.s32.totalorder %s31, 1
    %p351 = por %p349, %p350
    %p352 = scmp.ne.s32.totalorder %s343, %s344
    %p353 = scmp.eq.s32.totalorder %s31, 0
    %p354 = por %p352, %p353
    %p355 = scmp.ne.s32.totalorder %s343, %s344
    %p356 = scmp.eq.s32.totalorder %s32, 1
    %p357 = por %p355, %p356
    %p359 = scmp.ne.s32.totalorder %s344, %s358
    %p360 = scmp.eq.s32.totalorder %s32, 0
    %p361 = por %p359, %p360
    %s363 = sadd.s32 %s362, 1
    %p366 = scmp.eq.s32.totalorder %s26, 1
    %p367 = scmp.ne.s32.totalorder %s362, %s364
    %p368 = scmp.eq.s32.totalorder %s26, 0
    %p369 = por %p367, %p368
    %p370 = scmp.ne.s32.totalorder %s362, %s364
    %p371 = scmp.eq.s32.totalorder %s31, 1
    %p372 = por %p370, %p371
    %p373 = scmp.ne.s32.totalorder %s364, %s365
    %p374 = scmp.eq.s32.totalorder %s31, 0
    %p375 = por %p373, %p374
    %p376 = scmp.ne.s32.totalorder %s364, %s365
    %p377 = scmp.eq.s32.totalorder %s32, 1
    %p378 = por %p376, %p377
    %p380 = scmp.ne.s32.totalorder %s365, %s379
    %p381 = scmp.eq.s32.totalorder %s32, 0
    %p382 = por %p380, %p381
    %s384 = sadd.s32 %s383, 1
    %p387 = scmp.eq.s32.totalorder %s26, 1
    %p388 = scmp.ne.s32.totalorder %s383, %s385
    %p389 = scmp.eq.s32.totalorder %s26, 0
    %p390 = por %p388, %p389
    %p391 = scmp.ne.s32.totalorder %s383, %s385
    %p392 = scmp.eq.s32.totalorder %s31, 1
    %p393 = por %p391, %p392
    %p394 = scmp.ne.s32.totalorder %s385, %s386
    %p395 = scmp.eq.s32.totalorder %s31, 0
    %p396 = por %p394, %p395
    %p397 = scmp.ne.s32.totalorder %s385, %s386
    %p398 = scmp.eq.s32.totalorder %s32, 1
    %p399 = por %p397, %p398
    %p401 = scmp.ne.s32.totalorder %s386, %s400
    %p402 = scmp.eq.s32.totalorder %s32, 0
    %p403 = por %p401, %p402
    %s405 = sadd.s32 %s404, 1
    %p408 = scmp.eq.s32.totalorder %s26, 1
    %p409 = scmp.ne.s32.totalorder %s404, %s406
    %p410 = scmp.eq.s32.totalorder %s26, 0
    %p411 = por %p409, %p410
    %p412 = scmp.ne.s32.totalorder %s404, %s406
    %p413 = scmp.eq.s32.totalorder %s31, 1
    %p414 = por %p412, %p413
    %p415 = scmp.ne.s32.totalorder %s406, %s407
    %p416 = scmp.eq.s32.totalorder %s31, 0
    %p417 = por %p415, %p416
    %p418 = scmp.ne.s32.totalorder %s406, %s407
    %p419 = scmp.eq.s32.totalorder %s32, 1
    %p420 = por %p418, %p419
    %p422 = scmp.ne.s32.totalorder %s407, %s421
    %p423 = scmp.eq.s32.totalorder %s32, 0
    %p424 = por %p422, %p423
    %s426 = sadd.s32 %s425, 1
    %p429 = scmp.eq.s32.totalorder %s26, 1
    %p430 = scmp.ne.s32.totalorder %s425, %s427
    %p431 = scmp.eq.s32.totalorder %s26, 0
    %p432 = por %p430, %p431
    %p433 = scmp.ne.s32.totalorder %s425, %s427
    %p434 = scmp.eq.s32.totalorder %s31, 1
    %p435 = por %p433, %p434
    %p436 = scmp.ne.s32.totalorder %s427, %s428
    %p437 = scmp.eq.s32.totalorder %s31, 0
    %p438 = por %p436, %p437
    %p439 = scmp.ne.s32.totalorder %s427, %s428
    %p440 = scmp.eq.s32.totalorder %s32, 1
    %p441 = por %p439, %p440
    %p443 = scmp.ne.s32.totalorder %s428, %s442
    %p444 = scmp.eq.s32.totalorder %s32, 0
    %p445 = por %p443, %p444
    %s447 = sadd.s32 %s446, 1
    %p450 = scmp.eq.s32.totalorder %s26, 1
    %p451 = scmp.ne.s32.totalorder %s446, %s448
    %p452 = scmp.eq.s32.totalorder %s26, 0
    %p453 = por %p451, %p452
    %p454 = scmp.ne.s32.totalorder %s446, %s448
    %p455 = scmp.eq.s32.totalorder %s31, 1
    %p456 = por %p454, %p455
    %p457 = scmp.ne.s32.totalorder %s448, %s449
    %p458 = scmp.eq.s32.totalorder %s31, 0
    %p459 = por %p457, %p458
    %p460 = scmp.ne.s32.totalorder %s448, %s449
    %p461 = scmp.eq.s32.totalorder %s32, 1
    %p462 = por %p460, %p461
    %p464 = scmp.ne.s32.totalorder %s449, %s463
    %p465 = scmp.eq.s32.totalorder %s32, 0
    %p466 = por %p464, %p465
    %s468 = sadd.s32 %s467, 1
    %p471 = scmp.eq.s32.totalorder %s26, 1
    %p472 = scmp.ne.s32.totalorder %s467, %s469
    %p473 = scmp.eq.s32.totalorder %s26, 0
    %p474 = por %p472, %p473
    %p475 = scmp.ne.s32.totalorder %s467, %s469
    %p476 = scmp.eq.s32.totalorder %s31, 1
    %p477 = por %p475, %p476
    %p478 = scmp.ne.s32.totalorder %s469, %s470
    %p479 = scmp.eq.s32.totalorder %s31, 0
    %p480 = por %p478, %p479
    %p481 = scmp.ne.s32.totalorder %s469, %s470
    %p482 = scmp.eq.s32.totalorder %s32, 1
    %p483 = por %p481, %p482
    %p485 = scmp.ne.s32.totalorder %s470, %s484
    %p486 = scmp.eq.s32.totalorder %s32, 0
    %p487 = por %p485, %p486
    %s488 = ssub.s32 %s33, %s45
    %s489 = ssub.s32 %s34, %s41
    %s490 = sor.u32 %s488, %s489
    %p491 = scmp.eq.s32.totalorder %s490, 0
    %s493 = sadd.s32 %s492, 1
    %s494 = scalar_select %p491, %s492, %s493
    %p497 = pneg %p491
    %p498 = scmp.eq.s32.totalorder %s26, 1
    %p499 = por %p497, %p498
    %p500 = scmp.ne.s32.totalorder %s492, %s495
    %p501 = scmp.eq.s32.totalorder %s26, 0
    %p502 = por %p500, %p501
    %p503 = scmp.ne.s32.totalorder %s492, %s495
    %p504 = scmp.eq.s32.totalorder %s31, 1
    %p505 = por %p503, %p504
    %p506 = scmp.ne.s32.totalorder %s495, %s496
    %p507 = scmp.eq.s32.totalorder %s31, 0
    %p508 = por %p506, %p507
    %p509 = scmp.ne.s32.totalorder %s495, %s496
    %p510 = scmp.eq.s32.totalorder %s32, 1
    %p511 = por %p509, %p510
    %p513 = scmp.ne.s32.totalorder %s496, %s512
    %p514 = scmp.eq.s32.totalorder %s32, 0
    %p515 = por %p513, %p514
    %p516 = scmp.le.s32.totalorder 1, %s26
    %p517 = scmp.lt.s32.totalorder %s26, 3
    %p518 = pnand %p516, %p517
    %p519 = pneg %p518
    // Predicated region
    $region9: #{encoder_forward.11} parent=5 // pred_check
      _
    $region10: #{encoder_forward.11} parent=5 // pred_check_branch
      %521 = sbr.rel (%p518) target = $region12
    $region11: #{encoder_forward.11} parent=5 // pred_region
      %s522 = ssub.s32 %s26, 1
      // Predicated region
      $region13: #{encoder_forward.11} parent=11 // pred_check
        %p523 = pneg %p118
      $region14: #{encoder_forward.11} parent=11 // pred_check_branch
        %525 = sbr.rel (%p523) target = $region16
      $region15: #{encoder_forward.11} parent=11 // pred_region
        %p526 = scmp.lt.s32.totalorder %s36, 0
        %s527 = scalar_select %p526, %s36, 0
        %s528 = smul.addr %s527, 4
        %s529 = scalar_lea.vmem %s2, %s528
      $region16: #{encoder_forward.11} parent=11 // pred_fallthru
        _
      // Predicated region
      $region17: #{encoder_forward.11} parent=11 // pred_check
        %p530 = pneg %p144
      $region18: #{encoder_forward.11} parent=11 // pred_check_branch
        %532 = sbr.rel (%p530) target = $region20
      $region19: #{encoder_forward.11} parent=11 // pred_region
        %p533 = scmp.lt.s32.totalorder %s36, 0
        %s534 = scalar_select %p533, %s36, 0
        %s535 = smul.addr %s534, 4
        %s536 = scalar_lea.vmem %s3, %s535
      $region20: #{encoder_forward.11} parent=11 // pred_fallthru
        _
      // Predicated region
      $region21: #{encoder_forward.11} parent=11 // pred_check
        %p537 = pneg %p165
      $region22: #{encoder_forward.11} parent=11 // pred_check_branch
        %539 = sbr.rel (%p537) target = $region24
      $region23: #{encoder_forward.11} parent=11 // pred_region
        _
      $region24: #{encoder_forward.11} parent=11 // pred_fallthru
        _
      // Predicated region
      $region25: #{encoder_forward.11} parent=11 // pred_check
        %p540 = pneg %p186
      $region26: #{encoder_forward.11} parent=11 // pred_check_branch
        %542 = sbr.rel (%p540) target = $region28
      $region27: #{encoder_forward.11} parent=11 // pred_region
        _
      $region28: #{encoder_forward.11} parent=11 // pred_fallthru
        _
      // Predicated region
      $region29: #{encoder_forward.11} parent=11 // pred_check
        %p543 = pneg %p207
      $region30: #{encoder_forward.11} parent=11 // pred_check_branch
        %545 = sbr.rel (%p543) target = $region32
      $region31: #{encoder_forward.11} parent=11 // pred_region
        _
      $region32: #{encoder_forward.11} parent=11 // pred_fallthru
        _
      // Predicated region
      $region33: #{encoder_forward.11} parent=11 // pred_check
        %p546 = pneg %p228
      $region34: #{encoder_forward.11} parent=11 // pred_check_branch
        %548 = sbr.rel (%p546) target = $region36
      $region35: #{encoder_forward.11} parent=11 // pred_region
        _
      $region36: #{encoder_forward.11} parent=11 // pred_fallthru
        _
      // Predicated region
      $region37: #{encoder_forward.11} parent=11 // pred_check
        %p549 = pneg %p249
      $region38: #{encoder_forward.11} parent=11 // pred_check_branch
        %551 = sbr.rel (%p549) target = $region40
      $region39: #{encoder_forward.11} parent=11 // pred_region
        _
      $region40: #{encoder_forward.11} parent=11 // pred_fallthru
        _
      // Predicated region
      $region41: #{encoder_forward.11} parent=11 // pred_check
        %p552 = pneg %p270
      $region42: #{encoder_forward.11} parent=11 // pred_check_branch
        %554 = sbr.rel (%p552) target = $region44
      $region43: #{encoder_forward.11} parent=11 // pred_region
        _
      $region44: #{encoder_forward.11} parent=11 // pred_fallthru
        _
      // Predicated region
      $region45: #{encoder_forward.11} parent=11 // pred_check
        %p555 = pneg %p291
      $region46: #{encoder_forward.11} parent=11 // pred_check_branch
        %557 = sbr.rel (%p555) target = $region48
      $region47: #{encoder_forward.11} parent=11 // pred_region
        _
      $region48: #{encoder_forward.11} parent=11 // pred_fallthru
        _
      // Predicated region
      $region49: #{encoder_forward.11} parent=11 // pred_check
        %p558 = pneg %p312
      $region50: #{encoder_forward.11} parent=11 // pred_check_branch
        %560 = sbr.rel (%p558) target = $region52
      $region51: #{encoder_forward.11} parent=11 // pred_region
        _
      $region52: #{encoder_forward.11} parent=11 // pred_fallthru
        _
      // Predicated region
      $region53: #{encoder_forward.11} parent=11 // pred_check
        %p561 = pneg %p333
      $region54: #{encoder_forward.11} parent=11 // pred_check_branch
        %563 = sbr.rel (%p561) target = $region56
      $region55: #{encoder_forward.11} parent=11 // pred_region
        _
      $region56: #{encoder_forward.11} parent=11 // pred_fallthru
        _
      // Predicated region
      $region57: #{encoder_forward.11} parent=11 // pred_check
        %p564 = pneg %p354
      $region58: #{encoder_forward.11} parent=11 // pred_check_branch
        %566 = sbr.rel (%p564) target = $region60
      $region59: #{encoder_forward.11} parent=11 // pred_region
        _
      $region60: #{encoder_forward.11} parent=11 // pred_fallthru
        _
      // Predicated region
      $region61: #{encoder_forward.11} parent=11 // pred_check
        %p567 = pneg %p375
      $region62: #{encoder_forward.11} parent=11 // pred_check_branch
        %569 = sbr.rel (%p567) target = $region64
      $region63: #{encoder_forward.11} parent=11 // pred_region
        _
      $region64: #{encoder_forward.11} parent=11 // pred_fallthru
        _
      // Predicated region
      $region65: #{encoder_forward.11} parent=11 // pred_check
        %p570 = pneg %p396
      $region66: #{encoder_forward.11} parent=11 // pred_check_branch
        %572 = sbr.rel (%p570) target = $region68
      $region67: #{encoder_forward.11} parent=11 // pred_region
        _
      $region68: #{encoder_forward.11} parent=11 // pred_fallthru
        _
      // Predicated region
      $region69: #{encoder_forward.11} parent=11 // pred_check
        %p573 = pneg %p417
      $region70: #{encoder_forward.11} parent=11 // pred_check_branch
        %575 = sbr.rel (%p573) target = $region72
      $region71: #{encoder_forward.11} parent=11 // pred_region
        _
      $region72: #{encoder_forward.11} parent=11 // pred_fallthru
        _
      // Predicated region
      $region73: #{encoder_forward.11} parent=11 // pred_check
        %p576 = pneg %p438
      $region74: #{encoder_forward.11} parent=11 // pred_check_branch
        %578 = sbr.rel (%p576) target = $region76
      $region75: #{encoder_forward.11} parent=11 // pred_region
        _
      $region76: #{encoder_forward.11} parent=11 // pred_fallthru
        _
      // Predicated region
      $region77: #{encoder_forward.11} parent=11 // pred_check
        %p579 = pneg %p459
      $region78: #{encoder_forward.11} parent=11 // pred_check_branch
        %581 = sbr.rel (%p579) target = $region80
      $region79: #{encoder_forward.11} parent=11 // pred_region
        _
      $region80: #{encoder_forward.11} parent=11 // pred_fallthru
        _
      // Predicated region
      $region81: #{encoder_forward.11} parent=11 // pred_check
        %p582 = pneg %p480
      $region82: #{encoder_forward.11} parent=11 // pred_check_branch
        %584 = sbr.rel (%p582) target = $region84
      $region83: #{encoder_forward.11} parent=11 // pred_region
        _
      $region84: #{encoder_forward.11} parent=11 // pred_fallthru
        _
    $region12: #{encoder_forward.11} parent=5 // pred_fallthru
      _
    %p585 = scmp.lt.s32.totalorder %s26, 2
    // Predicated region
    $region85: #{encoder_forward.11} parent=5 // pred_check
      %p586 = pneg %p585
    $region86: #{encoder_forward.11} parent=5 // pred_check_branch
      %588 = sbr.rel (%p586) target = $region88
    $region87: #{encoder_forward.11} parent=5 // pred_region
      // Predicated region
      $region89: #{encoder_forward.11} parent=87 // pred_check
        %p589 = pneg %p60
      $region90: #{encoder_forward.11} parent=87 // pred_check_branch
        %591 = sbr.rel (%p589) target = $region92
      $region91: #{encoder_forward.11} parent=87 // pred_region
        %p592 = scmp.lt.s32.totalorder %s33, 1
        %s593 = scalar_select %p592, %s33, 1
        %p594 = scmp.lt.s32.totalorder %s34, 0
        %s595 = scalar_select %p594, %s34, 0
        %s596 = sadd.s32 %s595, %s593
        %s597 = smul.addr %s596, 4
        %s598 = scalar_lea.vmem %s0, %s597
      $region92: #{encoder_forward.11} parent=87 // pred_fallthru
        _
      // Predicated region
      $region93: #{encoder_forward.11} parent=87 // pred_check
        %p599 = pneg %p86
      $region94: #{encoder_forward.11} parent=87 // pred_check_branch
        %601 = sbr.rel (%p599) target = $region96
      $region95: #{encoder_forward.11} parent=87 // pred_region
        %p602 = scmp.lt.s32.totalorder %s33, 1
        %s603 = scalar_select %p602, %s33, 1
        %s604 = smul.addr %s603, 4
        %s605 = scalar_lea.vmem %s1, %s604
      $region96: #{encoder_forward.11} parent=87 // pred_fallthru
        _
    $region88: #{encoder_forward.11} parent=5 // pred_fallthru
      _
    %p606 = scmp.le.s32.totalorder 1, %s26
    %p607 = scmp.lt.s32.totalorder %s26, 3
    %p608 = pnand %p606, %p607
    %p609 = pneg %p608
    // Predicated region
    $region97: #{encoder_forward.11} parent=5 // pred_check
      _
    $region98: #{encoder_forward.11} parent=5 // pred_check_branch
      %611 = sbr.rel (%p608) target = $region100
    $region99: #{encoder_forward.11} parent=5 // pred_region
      %s612 = ssub.s32 %s26, 1
      %p613 = scmp.lt.s32.totalorder %s35, 1
      %s614 = scalar_select %p613, %s35, 1
      %p615 = scmp.lt.s32.totalorder %s36, 0
      %s616 = scalar_select %p615, %s36, 0
      %s617 = sadd.s32 %s616, %s614
      %s618 = smul.addr %s617, 4
      %s619 = scalar_lea.vmem %s0, %s618
      %p620 = pneg %p66
      %p621 = pneg %p63
      %p622 = scmp.lt.s32.totalorder %s35, 1
      %s623 = scalar_select %p622, %s35, 1
      %s624 = smul.addr %s623, 4
      %s625 = scalar_lea.vmem %s1, %s624
      %p626 = pneg %p92
      %p627 = pneg %p89
      %p628 = scmp.lt.s32.totalorder %s36, 0
      %s629 = scalar_select %p628, %s36, 0
      %s630 = smul.addr %s629, 4
      %s631 = scalar_lea.vmem %s2, %s630
      %p632 = pneg %p118
      %p633 = pneg %p115
      %p634 = scmp.lt.s32.totalorder %s36, 0
      %s635 = scalar_select %p634, %s36, 0
      %s636 = smul.addr %s635, 4
      %s637 = scalar_lea.vmem %s3, %s636
      %p638 = pneg %p144
      %p639 = pneg %p141
      %p640 = pneg %p165
      %p641 = pneg %p162
      %p642 = pneg %p186
      %p643 = pneg %p183
      %p644 = pneg %p207
      %p645 = pneg %p204
      %p646 = pneg %p228
      %p647 = pneg %p225
      %p648 = pneg %p249
      %p649 = pneg %p246
      %p650 = pneg %p270
      %p651 = pneg %p267
      %p652 = pneg %p291
      %p653 = pneg %p288
      %p654 = pneg %p312
      %p655 = pneg %p309
      %p656 = pneg %p333
      %p657 = pneg %p330
      %p658 = pneg %p354
      %p659 = pneg %p351
      %p660 = pneg %p375
      %p661 = pneg %p372
      %p662 = pneg %p396
      %p663 = pneg %p393
      %p664 = pneg %p417
      %p665 = pneg %p414
      %p666 = pneg %p438
      %p667 = pneg %p435
      %p668 = pneg %p459
      %p669 = pneg %p456
      %p670 = pneg %p480
      %p671 = pneg %p477
      %p672 = pneg %p508
      %p673 = pneg %p505
      %p674 = scmp.lt.s32.totalorder %s35, 1
      %s675 = scalar_select %p674, %s35, 1
      %p676 = scmp.lt.s32.totalorder %s36, 0
      %s677 = scalar_select %p676, %s36, 0
      %s678 = sadd.s32 %s677, %s675
      %s679 = smul.addr %s678, 4
      %s680 = scalar_lea.vmem %s20, %s679
      %p681 = scmp.lt.s32.totalorder %s35, 1
      %s682 = scalar_select %p681, %s35, 1
      %p683 = scmp.lt.s32.totalorder %s36, 0
      %s684 = scalar_select %p683, %s36, 0
      %s685 = sadd.s32 %s684, %s682
      %s686 = smul.addr %s685, 4
      %s687 = scalar_lea.vmem %s0, %s686
      %p688 = scmp.lt.s32.totalorder %s35, 1
      %s689 = scalar_select %p688, %s35, 1
      %s690 = smul.addr %s689, 4
      %s691 = scalar_lea.vmem %s1, %s690
      %p692 = scmp.lt.s32.totalorder %s36, 0
      %s693 = scalar_select %p692, %s36, 0
      %s694 = smul.addr %s693, 4
      %s695 = scalar_lea.vmem %s2, %s694
      %p696 = scmp.lt.s32.totalorder %s36, 0
      %s697 = scalar_select %p696, %s36, 0
      %s698 = smul.addr %s697, 4
      %s699 = scalar_lea.vmem %s3, %s698
      %p700 = scmp.lt.s32.totalorder %s35, 1
      %s701 = scalar_select %p700, %s35, 1
      %p702 = scmp.lt.s32.totalorder %s36, 0
      %s703 = scalar_select %p702, %s36, 0
      %s704 = sadd.s32 %s703, %s701
      %s705 = smul.addr %s704, 4
      %s706 = scalar_lea.vmem %s20, %s705
      %v708 = vld [vmem:[%s687] sm:$0xf]
      %v709 = vld [vmem:[%s691] sm:$0xf]
      %v710 = vld [vmem:[%s4] sm:$0x1]
      %v711 = vld [vmem:[%s5] sm:$0x1]
      %vm712 = vcmask 519168
      %v713 = vsel %vm712, %v708, 0.0
      %714 = vadd.xlane.f32.xlu0 %v713
      %v715 = vpop.xlane.xlu0 %714
      %v716 = vrcp.pop 64.0
      %v717 = vmul.f32 %v715, %v716
      %v718 = vsub.f32 %v708, %v717
      %v719 = vmul.f32 %v718, %v718
      %v720 = vsel %vm712, %v719, 0.0
      %721 = vadd.xlane.f32.xlu0 %v720
      %v722 = vpop.xlane.xlu0 %721
      %v723 = vmul.f32 %v722, %v716
      %v724 = vadd.f32 %v723, 1e-05
      %v725 = vrsqrt.pop %v724
      %v726 = vmul.f32 %v718, %v725
      %v728 = vlaneseq
      %v729 = vshrl.u32 %v728, 7
      %v730 = vsub.s32 0, %v729
      %v731 = vrot.slane %v710, %v730
      %v733 = vmul.f32 %v726, %v731
      %v735 = vlaneseq
      %v736 = vshrl.u32 %v735, 7
      %v737 = vsub.s32 0, %v736
      %v738 = vrot.slane %v711, %v737
      %v740 = vadd.f32 %v733, %v738
      %v741 = vpack.c.bf16 %v740, %v740
      %v742 = vsel %vm712, %v709, 0.0
      %743 = vadd.xlane.f32.xlu0 %v742
      %v744 = vpop.xlane.xlu0 %743
      %v745 = vmul.f32 %v744, %v716
      %v746 = vsub.f32 %v709, %v745
      %v747 = vmul.f32 %v746, %v746
      %v748 = vsel %vm712, %v747, 0.0
      %749 = vadd.xlane.f32.xlu0 %v748
      %v750 = vpop.xlane.xlu0 %749
      %v751 = vmul.f32 %v750, %v716
      %v752 = vadd.f32 %v751, 1e-05
      %v753 = vrsqrt.pop %v752
      %v754 = vmul.f32 %v746, %v753
      %v755 = vmul.f32 %v754, %v731
      %v756 = vadd.f32 %v755, %v738
      %v757 = vpack.c.bf16 %v756, %v756
      %v758 = vld [vmem:[%s6] sm:$0xf]
      %v759 = vld [vmem:[%s6 + $0x4] sm:$0xf]
      %v760 = vld [vmem:[%s6 + $0x8] sm:$0xf]
      %v761 = vld [vmem:[%s6 + $0xc] sm:$0xf]
      %v762 = vld [vmem:[%s6 + $0x10] sm:$0xf]
      %v763 = vld [vmem:[%s6 + $0x14] sm:$0xf]
      %v764 = vld [vmem:[%s6 + $0x18] sm:$0xf]
      %v765 = vld [vmem:[%s6 + $0x1c] sm:$0xf]
      %v766 = vld [vmem:[%s7] sm:$0x1]
      %v768 = vlaneseq
      %v769 = vshrl.u32 %v768, 7
      %v770 = vsub.s32 0, %v769
      %v771 = vrot.slane %v766, %v770
      %v781 = vunpack.c.l.b16 %v758
      %v782 = vunpack.c.l.b16 %v759
      %v783 = vunpack.c.l.b16 %v760
      %v784 = vunpack.c.l.b16 %v761
      %v785 = vunpack.c.l.b16 %v762
      %v786 = vunpack.c.l.b16 %v763
      %v787 = vunpack.c.l.b16 %v764
      %v788 = vunpack.c.l.b16 %v765
      %v789 = vpack.c.b16 %v782, %v781
      %v790 = vpack.c.b16 %v784, %v783
      %v791 = vpack.c.b16 %v786, %v785
      %v792 = vpack.c.b16 %v788, %v787
      %vm797 = vcmask 523264
      %v799 = vsel %vm797, %v741, 0
      %801 = vmatprep.subr.bf16.mxu0 0
      %802 = vmatpush1.bf16.msra.mxu0 %v789
      %803 = vmatprep.subr.bf16.mxu0 0
      %804 = vmatpush1.bf16.msra.mxu0 %v790
      %805 = vmatprep.subr.bf16.mxu0 0
      %806 = vmatpush1.bf16.msra.mxu0 %v791
      %807 = vmatprep.subr.bf16.mxu0 0
      %808 = vmatpush1.bf16.msra.mxu0 %v792
      %809 = vmatprep.subr.bf16.mxu0 0
      %810 = vmatpush1.bf16.msra.mxu0 0
      %811 = vmatprep.subr.bf16.mxu0 0
      %812 = vmatpush1.bf16.msra.mxu0 0
      %813 = vmatprep.subr.bf16.mxu0 0
      %814 = vmatpush1.bf16.msra.mxu0 0
      %815 = vmatprep.subr.bf16.mxu0 0
      %816 = vmatpush1.bf16.msra.mxu0 0
      %817 = vmatprep.subr.bf16.mxu0 0
      %818 = vmatpush1.bf16.msra.mxu0 0
      %819 = vmatprep.subr.bf16.mxu0 0
      %820 = vmatpush1.bf16.msra.mxu0 0
      %821 = vmatprep.subr.bf16.mxu0 0
      %822 = vmatpush1.bf16.msra.mxu0 0
      %823 = vmatprep.subr.bf16.mxu0 0
      %824 = vmatpush1.bf16.msra.mxu0 0
      %825 = vmatprep.subr.bf16.mxu0 0
      %826 = vmatpush1.bf16.msra.mxu0 0
      %827 = vmatprep.subr.bf16.mxu0 0
      %828 = vmatpush1.bf16.msra.mxu0 0
      %829 = vmatprep.subr.bf16.mxu0 0
      %830 = vmatpush1.bf16.msra.mxu0 0
      %831 = vmatprep.subr.bf16.mxu0 0
      %832 = vmatpush1.bf16.msra.mxu0 0
      %833 = vmatprep.mubr.bf16.mxu0 0
      %834 = vmatmul.mubr.bf16.gmra.mrb[0].mxu0 %v799
      %v835 = vpop.f32.mrb[0].mxu0
      %v836 = vadd.f32 %v771, %v835
      %v837 = vpop.f32.mrb[0].mxu0
      %v838 = vpop.f32.mrb[0].mxu0
      %v839 = vpop.f32.mrb[0].mxu0
      %840 = vdwg.mxu0
      %v841 = vld [vmem:[%s8] sm:$0xf]
      %v842 = vld [vmem:[%s8 + $0x4] sm:$0xf]
      %v843 = vld [vmem:[%s8 + $0x8] sm:$0xf]
      %v844 = vld [vmem:[%s8 + $0xc] sm:$0xf]
      %v845 = vld [vmem:[%s8 + $0x10] sm:$0xf]
      %v846 = vld [vmem:[%s8 + $0x14] sm:$0xf]
      %v847 = vld [vmem:[%s8 + $0x18] sm:$0xf]
      %v848 = vld [vmem:[%s8 + $0x1c] sm:$0xf]
      %v849 = vld [vmem:[%s9] sm:$0x1]
      %v851 = vlaneseq
      %v852 = vshrl.u32 %v851, 7
      %v853 = vsub.s32 0, %v852
      %v854 = vrot.slane %v849, %v853
      %v864 = vunpack.c.l.b16 %v841
      %v865 = vunpack.c.l.b16 %v842
      %v866 = vunpack.c.l.b16 %v843
      %v867 = vunpack.c.l.b16 %v844
      %v868 = vunpack.c.l.b16 %v845
      %v869 = vunpack.c.l.b16 %v846
      %v870 = vunpack.c.l.b16 %v847
      %v871 = vunpack.c.l.b16 %v848
      %v872 = vpack.c.b16 %v865, %v864
      %v873 = vpack.c.b16 %v867, %v866
      %v874 = vpack.c.b16 %v869, %v868
      %v875 = vpack.c.b16 %v871, %v870
      %v881 = vsel %vm797, %v757, 0
      %883 = vmatprep.subr.bf16.mxu0 0
      %884 = vmatpush1.bf16.msra.mxu0 %v872
      %885 = vmatprep.subr.bf16.mxu0 0
      %886 = vmatpush1.bf16.msra.mxu0 %v873
      %887 = vmatprep.subr.bf16.mxu0 0
      %888 = vmatpush1.bf16.msra.mxu0 %v874
      %889 = vmatprep.subr.bf16.mxu0 0
      %890 = vmatpush1.bf16.msra.mxu0 %v875
      %891 = vmatprep.subr.bf16.mxu0 0
      %892 = vmatpush1.bf16.msra.mxu0 0
      %893 = vmatprep.subr.bf16.mxu0 0
      %894 = vmatpush1.bf16.msra.mxu0 0
      %895 = vmatprep.subr.bf16.mxu0 0
      %896 = vmatpush1.bf16.msra.mxu0 0
      %897 = vmatprep.subr.bf16.mxu0 0
      %898 = vmatpush1.bf16.msra.mxu0 0
      %899 = vmatprep.subr.bf16.mxu0 0
      %900 = vmatpush1.bf16.msra.mxu0 0
      %901 = vmatprep.subr.bf16.mxu0 0
      %902 = vmatpush1.bf16.msra.mxu0 0
      %903 = vmatprep.subr.bf16.mxu0 0
      %904 = vmatpush1.bf16.msra.mxu0 0
      %905 = vmatprep.subr.bf16.mxu0 0
      %906 = vmatpush1.bf16.msra.mxu0 0
      %907 = vmatprep.subr.bf16.mxu0 0
      %908 = vmatpush1.bf16.msra.mxu0 0
      %909 = vmatprep.subr.bf16.mxu0 0
      %910 = vmatpush1.bf16.msra.mxu0 0
      %911 = vmatprep.subr.bf16.mxu0 0
      %912 = vmatpush1.bf16.msra.mxu0 0
      %913 = vmatprep.subr.bf16.mxu0 0
      %914 = vmatpush1.bf16.msra.mxu0 0
      %915 = vmatprep.mubr.bf16.mxu0 0
      %916 = vmatmul.mubr.bf16.gmra.mrb[0].mxu0 %v881
      %v917 = vpop.f32.mrb[0].mxu0
      %v918 = vadd.f32 %v854, %v917
      %v919 = vpop.f32.mrb[0].mxu0
      %v920 = vpop.f32.mrb[0].mxu0
      %v921 = vpop.f32.mrb[0].mxu0
      %922 = vdwg.mxu0
      %v923 = vld [vmem:[%s10] sm:$0xf]
      %v924 = vld [vmem:[%s10 + $0x4] sm:$0xf]
      %v925 = vld [vmem:[%s10 + $0x8] sm:$0xf]
      %v926 = vld [vmem:[%s10 + $0xc] sm:$0xf]
      %v927 = vld [vmem:[%s10 + $0x10] sm:$0xf]
      %v928 = vld [vmem:[%s10 + $0x14] sm:$0xf]
      %v929 = vld [vmem:[%s10 + $0x18] sm:$0xf]
      %v930 = vld [vmem:[%s10 + $0x1c] sm:$0xf]
      %v931 = vld [vmem:[%s11] sm:$0x1]
      %v933 = vlaneseq
      %v934 = vshrl.u32 %v933, 7
      %v935 = vsub.s32 0, %v934
      %v936 = vrot.slane %v931, %v935
      %v946 = vunpack.c.l.b16 %v923
      %v947 = vunpack.c.l.b16 %v924
      %v948 = vunpack.c.l.b16 %v925
      %v949 = vunpack.c.l.b16 %v926
      %v950 = vunpack.c.l.b16 %v927
      %v951 = vunpack.c.l.b16 %v928
      %v952 = vunpack.c.l.b16 %v929
      %v953 = vunpack.c.l.b16 %v930
      %v954 = vpack.c.b16 %v947, %v946
      %v955 = vpack.c.b16 %v949, %v948
      %v956 = vpack.c.b16 %v951, %v950
      %v957 = vpack.c.b16 %v953, %v952
      %962 = vmatprep.subr.bf16.mxu0 0
      %963 = vmatpush1.bf16.msra.mxu0 %v954
      %964 = vmatprep.subr.bf16.mxu0 0
      %965 = vmatpush1.bf16.msra.mxu0 %v955
      %966 = vmatprep.subr.bf16.mxu0 0
      %967 = vmatpush1.bf16.msra.mxu0 %v956
      %968 = vmatprep.subr.bf16.mxu0 0
      %969 = vmatpush1.bf16.msra.mxu0 %v957
      %970 = vmatprep.subr.bf16.mxu0 0
      %971 = vmatpush1.bf16.msra.mxu0 0
      %972 = vmatprep.subr.bf16.mxu0 0
      %973 = vmatpush1.bf16.msra.mxu0 0
      %974 = vmatprep.subr.bf16.mxu0 0
      %975 = vmatpush1.bf16.msra.mxu0 0
      %976 = vmatprep.subr.bf16.mxu0 0
      %977 = vmatpush1.bf16.msra.mxu0 0
      %978 = vmatprep.subr.bf16.mxu0 0
      %979 = vmatpush1.bf16.msra.mxu0 0
      %980 = vmatprep.subr.bf16.mxu0 0
      %981 = vmatpush1.bf16.msra.mxu0 0
      %982 = vmatprep.subr.bf16.mxu0 0
      %983 = vmatpush1.bf16.msra.mxu0 0
      %984 = vmatprep.subr.bf16.mxu0 0
      %985 = vmatpush1.bf16.msra.mxu0 0
      %986 = vmatprep.subr.bf16.mxu0 0
      %987 = vmatpush1.bf16.msra.mxu0 0
      %988 = vmatprep.subr.bf16.mxu0 0
      %989 = vmatpush1.bf16.msra.mxu0 0
      %990 = vmatprep.subr.bf16.mxu0 0
      %991 = vmatpush1.bf16.msra.mxu0 0
      %992 = vmatprep.subr.bf16.mxu0 0
      %993 = vmatpush1.bf16.msra.mxu0 0
      %994 = vmatprep.mubr.bf16.mxu0 0
      %995 = vmatmul.mubr.bf16.gmra.mrb[0].mxu0 %v881
      %v996 = vpop.f32.mrb[0].mxu0
      %v997 = vadd.f32 %v936, %v996
      %v998 = vpop.f32.mrb[0].mxu0
      %v999 = vpop.f32.mrb[0].mxu0
      %v1000 = vpop.f32.mrb[0].mxu0
      %1001 = vdwg.mxu0
      %v1002 = vmul.f32 %v836, 0.25
      %v1003 = vpack.c.bf16 %v1002, %v1002
      %1005 = vrot.lane.b32.xlu0 %v1003, 112
      %v1006 = vpop.permute.xlu0 %1005
      %1007 = vrot.lane.b32.xlu0 %v1003, 96
      %v1008 = vpop.permute.xlu0 %1007
      %1009 = vrot.lane.b32.xlu0 %v1003, 80
      %v1010 = vpop.permute.xlu0 %1009
      %v1011 = vpack.c.bf16 %v918, %v918
      %1013 = vrot.lane.b32.xlu0 %v1011, 112
      %v1014 = vpop.permute.xlu0 %1013
      %1015 = vrot.lane.b32.xlu0 %v1011, 96
      %v1016 = vpop.permute.xlu0 %1015
      %1017 = vrot.lane.b32.xlu0 %v1011, 80
      %v1018 = vpop.permute.xlu0 %1017
      %v1019 = vpack.c.bf16 %v997, %v997
      %1021 = vrot.lane.b32.xlu0 %v1019, 112
      %v1022 = vpop.permute.xlu0 %1021
      %1023 = vrot.lane.b32.xlu0 %v1019, 96
      %v1024 = vpop.permute.xlu0 %1023
      %1025 = vrot.lane.b32.xlu0 %v1019, 80
      %v1026 = vpop.permute.xlu0 %1025
      %v1027 = vld [vmem:[%s695] sm:$0xf]
      %v1028 = vld [vmem:[%s695 + $0x4] sm:$0xf]
      %v1029 = vld [vmem:[%s695 + $0x8] sm:$0xf]
      %v1030 = vld [vmem:[%s695 + $0xc] sm:$0xf]
      %vm1031 = vcmask 130048
      %v1033 = vsel %vm1031, %v1003, 0
      %v1036 = vsel %vm1031, %v1011, 0
      %1038 = vmatprep.subr.bf16.mxu0 0
      %1039 = vmatpush1.bf16.xpose.msra.mxu0 %v1036
      %1040 = vmatprep.subr.bf16.mxu0 0
      %1041 = vmatpush1.bf16.xpose.msra.mxu0 0
      %1042 = vmatprep.subr.bf16.mxu0 0
      %1043 = vmatpush1.bf16.xpose.msra.mxu0 0
      %1044 = vmatprep.subr.bf16.mxu0 0
      %1045 = vmatpush1.bf16.xpose.msra.mxu0 0
      %1046 = vmatprep.subr.bf16.mxu0 0
      %1047 = vmatpush1.bf16.xpose.msra.mxu0 0
      %1048 = vmatprep.subr.bf16.mxu0 0
      %1049 = vmatpush1.bf16.xpose.msra.mxu0 0
      %1050 = vmatprep.subr.bf16.mxu0 0
      %1051 = vmatpush1.bf16.xpose.msra.mxu0 0
      %1052 = vmatprep.subr.bf16.mxu0 0
      %1053 = vmatpush1.bf16.xpose.msra.mxu0 0
      %1054 = vmatprep.subr.bf16.mxu0 0
      %1055 = vmatpush1.bf16.xpose.msra.mxu0 0
      %1056 = vmatprep.subr.bf16.mxu0 0
      %1057 = vmatpush1.bf16.xpose.msra.mxu0 0
      %1058 = vmatprep.subr.bf16.mxu0 0
      %1059 = vmatpush1.bf16.xpose.msra.mxu0 0
      %1060 = vmatprep.subr.bf16.mxu0 0
      %1061 = vmatpush1.bf16.xpose.msra.mxu0 0
      %1062 = vmatprep.subr.bf16.mxu0 0
      %1063 = vmatpush1.bf16.xpose.msra.mxu0 0
      %1064 = vmatprep.subr.bf16.mxu0 0
      %1065 = vmatpush1.bf16.xpose.msra.mxu0 0
      %1066 = vmatprep.subr.bf16.mxu0 0
      %1067 = vmatpush1.bf16.xpose.msra.mxu0 0
      %1068 = vmatprep.subr.bf16.mxu0 0
      %1069 = vmatpush1.bf16.xpose.msra.mxu0 0
      %1070 = vmatprep.mubr.bf16.mxu0 0
      %1071 = vmatmul.mubr.bf16.gmra.mrb[0].mxu0 %v1033
      %v1072 = vpop.f32.mrb[0].mxu0
      %v1073 = vadd.f32 %v1027, %v1072
      %v1074 = vpop.f32.mrb[0].mxu0
      %v1075 = vpop.f32.mrb[0].mxu0
      %v1076 = vpop.f32.mrb[0].mxu0
      %1077 = vdwg.mxu0
      %v1079 = vsel %vm1031, %v1006, 0
      %v1082 = vsel %vm1031, %v1014, 0
      %1084 = vmatprep.subr.bf16.mxu0 0
      %1085 = vmatpush1.bf16.xpose.msra.mxu0 %v1082
      %1086 = vmatprep.subr.bf16.mxu0 0
      %1087 = vmatpush1.bf16.xpose.msra.mxu0 0
      %1088 = vmatprep.subr.bf16.mxu0 0
      %1089 = vmatpush1.bf16.xpose.msra.mxu0 0
      %1090 = vmatprep.subr.bf16.mxu0 0
      %1091 = vmatpush1.bf16.xpose.msra.mxu0 0
      %1092 = vmatprep.subr.bf16.mxu0 0
      %1093 = vmatpush1.bf16.xpose.msra.mxu0 0
      %1094 = vmatprep.subr.bf16.mxu0 0
      %1095 = vmatpush1.bf16.xpose.msra.mxu0 0
      %1096 = vmatprep.subr.bf16.mxu0 0
      %1097 = vmatpush1.bf16.xpose.msra.mxu0 0
      %1098 = vmatprep.subr.bf16.mxu0 0
      %1099 = vmatpush1.bf16.xpose.msra.mxu0 0
      %1100 = vmatprep.subr.bf16.mxu0 0
      %1101 = vmatpush1.bf16.xpose.msra.mxu0 0
      %1102 = vmatprep.subr.bf16.mxu0 0
      %1103 = vmatpush1.bf16.xpose.msra.mxu0 0
      %1104 = vmatprep.subr.bf16.mxu0 0
      %1105 = vmatpush1.bf16.xpose.msra.mxu0 0
      %1106 = vmatprep.subr.bf16.mxu0 0
      %1107 = vmatpush1.bf16.xpose.msra.mxu0 0
      %1108 = vmatprep.subr.bf16.mxu0 0
      %1109 = vmatpush1.bf16.xpose.msra.mxu0 0
      %1110 = vmatprep.subr.bf16.mxu0 0
      %1111 = vmatpush1.bf16.xpose.msra.mxu0 0
      %1112 = vmatprep.subr.bf16.mxu0 0
      %1113 = vmatpush1.bf16.xpose.msra.mxu0 0
      %1114 = vmatprep.subr.bf16.mxu0 0
      %1115 = vmatpush1.bf16.xpose.msra.mxu0 0
      %1116 = vmatprep.mubr.bf16.mxu0 0
      %1117 = vmatmul.mubr.bf16.gmra.mrb[0].mxu0 %v1079
      %v1118 = vpop.f32.mrb[0].mxu0
      %v1119 = vadd.f32 %v1028, %v1118
      %v1120 = vpop.f32.mrb[0].mxu0
      %v1121 = vpop.f32.mrb[0].mxu0
      %v1122 = vpop.f32.mrb[0].mxu0
      %1123 = vdwg.mxu0
      %v1125 = vsel %vm1031, %v1008, 0
      %v1128 = vsel %vm1031, %v1016, 0
      %1130 = vmatprep.subr.bf16.mxu0 0
      %1131 = vmatpush1.bf16.xpose.msra.mxu0 %v1128
      %1132 = vmatprep.subr.bf16.mxu0 0
      %1133 = vmatpush1.bf16.xpose.msra.mxu0 0
      %1134 = vmatprep.subr.bf16.mxu0 0
      %1135 = vmatpush1.bf16.xpose.msra.mxu0 0
      %1136 = vmatprep.subr.bf16.mxu0 0
      %1137 = vmatpush1.bf16.xpose.msra.mxu0 0
      %1138 = vmatprep.subr.bf16.mxu0 0
      %1139 = vmatpush1.bf16.xpose.msra.mxu0 0
      %1140 = vmatprep.subr.bf16.mxu0 0
      %1141 = vmatpush1.bf16.xpose.msra.mxu0 0
      %1142 = vmatprep.subr.bf16.mxu0 0
      %1143 = vmatpush1.bf16.xpose.msra.mxu0 0
      %1144 = vmatprep.subr.bf16.mxu0 0
      %1145 = vmatpush1.bf16.xpose.msra.mxu0 0
      %1146 = vmatprep.subr.bf16.mxu0 0
      %1147 = vmatpush1.bf16.xpose.msra.mxu0 0
      %1148 = vmatprep.subr.bf16.mxu0 0
      %1149 = vmatpush1.bf16.xpose.msra.mxu0 0
      %1150 = vmatprep.subr.bf16.mxu0 0
      %1151 = vmatpush1.bf16.xpose.msra.mxu0 0
      %1152 = vmatprep.subr.bf16.mxu0 0
      %1153 = vmatpush1.bf16.xpose.msra.mxu0 0
      %1154 = vmatprep.subr.bf16.mxu0 0
      %1155 = vmatpush1.bf16.xpose.msra.mxu0 0
      %1156 = vmatprep.subr.bf16.mxu0 0
      %1157 = vmatpush1.bf16.xpose.msra.mxu0 0
      %1158 = vmatprep.subr.bf16.mxu0 0
      %1159 = vmatpush1.bf16.xpose.msra.mxu0 0
      %1160 = vmatprep.subr.bf16.mxu0 0
      %1161 = vmatpush1.bf16.xpose.msra.mxu0 0
      %1162 = vmatprep.mubr.bf16.mxu0 0
      %1163 = vmatmul.mubr.bf16.gmra.mrb[0].mxu0 %v1125
      %v1164 = vpop.f32.mrb[0].mxu0
      %v1165 = vadd.f32 %v1029, %v1164
      %v1166 = vpop.f32.mrb[0].mxu0
      %v1167 = vpop.f32.mrb[0].mxu0
      %v1168 = vpop.f32.mrb[0].mxu0
      %1169 = vdwg.mxu0
      %v1171 = vsel %vm1031, %v1010, 0
      %v1174 = vsel %vm1031, %v1018, 0
      %1176 = vmatprep.subr.bf16.mxu0 0
      %1177 = vmatpush1.bf16.xpose.msra.mxu0 %v1174
      %1178 = vmatprep.subr.bf16.mxu0 0
      %1179 = vmatpush1.bf16.xpose.msra.mxu0 0
      %1180 = vmatprep.subr.bf16.mxu0 0
      %1181 = vmatpush1.bf16.xpose.msra.mxu0 0
      %1182 = vmatprep.subr.bf16.mxu0 0
      %1183 = vmatpush1.bf16.xpose.msra.mxu0 0
      %1184 = vmatprep.subr.bf16.mxu0 0
      %1185 = vmatpush1.bf16.xpose.msra.mxu0 0
      %1186 = vmatprep.subr.bf16.mxu0 0
      %1187 = vmatpush1.bf16.xpose.msra.mxu0 0
      %1188 = vmatprep.subr.bf16.mxu0 0
      %1189 = vmatpush1.bf16.xpose.msra.mxu0 0
      %1190 = vmatprep.subr.bf16.mxu0 0
      %1191 = vmatpush1.bf16.xpose.msra.mxu0 0
      %1192 = vmatprep.subr.bf16.mxu0 0
      %1193 = vmatpush1.bf16.xpose.msra.mxu0 0
      %1194 = vmatprep.subr.bf16.mxu0 0
      %1195 = vmatpush1.bf16.xpose.msra.mxu0 0
      %1196 = vmatprep.subr.bf16.mxu0 0
      %1197 = vmatpush1.bf16.xpose.msra.mxu0 0
      %1198 = vmatprep.subr.bf16.mxu0 0
      %1199 = vmatpush1.bf16.xpose.msra.mxu0 0
      %1200 = vmatprep.subr.bf16.mxu0 0
      %1201 = vmatpush1.bf16.xpose.msra.mxu0 0
      %1202 = vmatprep.subr.bf16.mxu0 0
      %1203 = vmatpush1.bf16.xpose.msra.mxu0 0
      %1204 = vmatprep.subr.bf16.mxu0 0
      %1205 = vmatpush1.bf16.xpose.msra.mxu0 0
      %1206 = vmatprep.subr.bf16.mxu0 0
      %1207 = vmatpush1.bf16.xpose.msra.mxu0 0
      %1208 = vmatprep.mubr.bf16.mxu0 0
      %1209 = vmatmul.mubr.bf16.gmra.mrb[0].mxu0 %v1171
      %v1210 = vpop.f32.mrb[0].mxu0
      %v1211 = vadd.f32 %v1030, %v1210
      %v1212 = vpop.f32.mrb[0].mxu0
      %v1213 = vpop.f32.mrb[0].mxu0
      %v1214 = vpop.f32.mrb[0].mxu0
      %1215 = vdwg.mxu0
      %v1216 = vld [vmem:[%s699] sm:$0xf]
      %v1217 = vadd.f32 %v1073, %v1216
      %v1218 = vadd.f32 %v1119, %v1216
      %v1219 = vadd.f32 %v1165, %v1216
      %v1220 = vadd.f32 %v1211, %v1216
      %vm1221 = vcmask 27648
      %v1222 = vsel %vm1221, %v1217, -inf
      %1223 = vmax.xlane.f32.xlu0 %v1222
      %v1224 = vpop.xlane.xlu0 %1223
      %v1225 = vsel %vm1221, %v1218, -inf
      %1226 = vmax.xlane.f32.xlu0 %v1225
      %v1227 = vpop.xlane.xlu0 %1226
      %v1228 = vsel %vm1221, %v1219, -inf
      %1229 = vmax.xlane.f32.xlu0 %v1228
      %v1230 = vpop.xlane.xlu0 %1229
      %v1231 = vsel %vm1221, %v1220, -inf
      %1232 = vmax.xlane.f32.xlu0 %v1231
      %v1233 = vpop.xlane.xlu0 %1232
      %v1234 = vsub.f32 %v1217, %v1224
      %v1235 = vsub.f32 %v1218, %v1227
      %v1236 = vsub.f32 %v1219, %v1230
      %v1237 = vsub.f32 %v1220, %v1233
      %v1238 = vmul.f32 %v1234, 1.442695
      %v1239 = vpow.pop %v1238
      %v1240 = vmul.f32 %v1235, 1.442695
      %v1241 = vpow.pop %v1240
      %v1242 = vmul.f32 %v1236, 1.442695
      %v1243 = vpow.pop %v1242
      %v1244 = vmul.f32 %v1237, 1.442695
      %v1245 = vpow.pop %v1244
      %v1246 = vsel %vm1221, %v1239, 0.0
      %1247 = vadd.xlane.f32.xlu0 %v1246
      %v1248 = vpop.xlane.xlu0 %1247
      %v1249 = vsel %vm1221, %v1241, 0.0
      %1250 = vadd.xlane.f32.xlu0 %v1249
      %v1251 = vpop.xlane.xlu0 %1250
      %v1252 = vsel %vm1221, %v1243, 0.0
      %1253 = vadd.xlane.f32.xlu0 %v1252
      %v1254 = vpop.xlane.xlu0 %1253
      %v1255 = vsel %vm1221, %v1245, 0.0
      %1256 = vadd.xlane.f32.xlu0 %v1255
      %v1257 = vpop.xlane.xlu0 %1256
      %v1258 = vrcp.pop %v1248
      %v1259 = vrcp.pop %v1251
      %v1260 = vrcp.pop %v1254
      %v1261 = vrcp.pop %v1257
      %v1262 = vmul.f32 %v1239, %v1258
      %v1263 = vmul.f32 %v1241, %v1259
      %v1264 = vmul.f32 %v1243, %v1260
      %v1265 = vmul.f32 %v1245, %v1261
      %v1266 = vpack.c.bf16 %v1262, %v1262
      %v1267 = vpack.c.bf16 %v1263, %v1263
      %v1268 = vpack.c.bf16 %v1264, %v1264
      %v1269 = vpack.c.bf16 %v1265, %v1265
      %vm1270 = vcmask 31744
      %v1272 = vsel %vm1270, %v1266, 0
      %vm1274 = vcmask 1041408
      %v1276 = vsel %vm1274, %v1019, 0
      %1278 = vmatprep.subr.bf16.mxu0 0
      %1279 = vmatpush1.bf16.msra.mxu0 %v1276
      %1280 = vmatprep.subr.bf16.mxu0 0
      %1281 = vmatpush1.bf16.msra.mxu0 0
      %1282 = vmatprep.subr.bf16.mxu0 0
      %1283 = vmatpush1.bf16.msra.mxu0 0
      %1284 = vmatprep.subr.bf16.mxu0 0
      %1285 = vmatpush1.bf16.msra.mxu0 0
      %1286 = vmatprep.subr.bf16.mxu0 0
      %1287 = vmatpush1.bf16.msra.mxu0 0
      %1288 = vmatprep.subr.bf16.mxu0 0
      %1289 = vmatpush1.bf16.msra.mxu0 0
      %1290 = vmatprep.subr.bf16.mxu0 0
      %1291 = vmatpush1.bf16.msra.mxu0 0
      %1292 = vmatprep.subr.bf16.mxu0 0
      %1293 = vmatpush1.bf16.msra.mxu0 0
      %1294 = vmatprep.subr.bf16.mxu0 0
      %1295 = vmatpush1.bf16.msra.mxu0 0
      %1296 = vmatprep.subr.bf16.mxu0 0
      %1297 = vmatpush1.bf16.msra.mxu0 0
      %1298 = vmatprep.subr.bf16.mxu0 0
      %1299 = vmatpush1.bf16.msra.mxu0 0
      %1300 = vmatprep.subr.bf16.mxu0 0
      %1301 = vmatpush1.bf16.msra.mxu0 0
      %1302 = vmatprep.subr.bf16.mxu0 0
      %1303 = vmatpush1.bf16.msra.mxu0 0
      %1304 = vmatprep.subr.bf16.mxu0 0
      %1305 = vmatpush1.bf16.msra.mxu0 0
      %1306 = vmatprep.subr.bf16.mxu0 0
      %1307 = vmatpush1.bf16.msra.mxu0 0
      %1308 = vmatprep.subr.bf16.mxu0 0
      %1309 = vmatpush1.bf16.msra.mxu0 0
      %1310 = vmatprep.mubr.bf16.mxu0 0
      %1311 = vmatmul.mubr.bf16.gmra.mrb[0].mxu0 %v1272
      %v1312 = vpop.f32.mrb[0].mxu0
      %v1313 = vadd.f32 0.0, %v1312
      %v1314 = vpop.f32.mrb[0].mxu0
      %v1315 = vpop.f32.mrb[0].mxu0
      %v1316 = vpop.f32.mrb[0].mxu0
      %1317 = vdwg.mxu0
      %v1319 = vsel %vm1270, %v1267, 0
      %v1322 = vsel %vm1274, %v1022, 0
      %1324 = vmatprep.subr.bf16.mxu0 0
      %1325 = vmatpush1.bf16.msra.mxu0 %v1322
      %1326 = vmatprep.subr.bf16.mxu0 0
      %1327 = vmatpush1.bf16.msra.mxu0 0
      %1328 = vmatprep.subr.bf16.mxu0 0
      %1329 = vmatpush1.bf16.msra.mxu0 0
      %1330 = vmatprep.subr.bf16.mxu0 0
      %1331 = vmatpush1.bf16.msra.mxu0 0
      %1332 = vmatprep.subr.bf16.mxu0 0
      %1333 = vmatpush1.bf16.msra.mxu0 0
      %1334 = vmatprep.subr.bf16.mxu0 0
      %1335 = vmatpush1.bf16.msra.mxu0 0
      %1336 = vmatprep.subr.bf16.mxu0 0
      %1337 = vmatpush1.bf16.msra.mxu0 0
      %1338 = vmatprep.subr.bf16.mxu0 0
      %1339 = vmatpush1.bf16.msra.mxu0 0
      %1340 = vmatprep.subr.bf16.mxu0 0
      %1341 = vmatpush1.bf16.msra.mxu0 0
      %1342 = vmatprep.subr.bf16.mxu0 0
      %1343 = vmatpush1.bf16.msra.mxu0 0
      %1344 = vmatprep.subr.bf16.mxu0 0
      %1345 = vmatpush1.bf16.msra.mxu0 0
      %1346 = vmatprep.subr.bf16.mxu0 0
      %1347 = vmatpush1.bf16.msra.mxu0 0
      %1348 = vmatprep.subr.bf16.mxu0 0
      %1349 = vmatpush1.bf16.msra.mxu0 0
      %1350 = vmatprep.subr.bf16.mxu0 0
      %1351 = vmatpush1.bf16.msra.mxu0 0
      %1352 = vmatprep.subr.bf16.mxu0 0
      %1353 = vmatpush1.bf16.msra.mxu0 0
      %1354 = vmatprep.subr.bf16.mxu0 0
      %1355 = vmatpush1.bf16.msra.mxu0 0
      %1356 = vmatprep.mubr.bf16.mxu0 0
      %1357 = vmatmul.mubr.bf16.gmra.mrb[0].mxu0 %v1319
      %v1358 = vpop.f32.mrb[0].mxu0
      %v1359 = vadd.f32 0.0, %v1358
      %v1360 = vpop.f32.mrb[0].mxu0
      %v1361 = vpop.f32.mrb[0].mxu0
      %v1362 = vpop.f32.mrb[0].mxu0
      %1363 = vdwg.mxu0
      %v1365 = vsel %vm1270, %v1268, 0
      %v1368 = vsel %vm1274, %v1024, 0
      %1370 = vmatprep.subr.bf16.mxu0 0
      %1371 = vmatpush1.bf16.msra.mxu0 %v1368
      %1372 = vmatprep.subr.bf16.mxu0 0
      %1373 = vmatpush1.bf16.msra.mxu0 0
      %1374 = vmatprep.subr.bf16.mxu0 0
      %1375 = vmatpush1.bf16.msra.mxu0 0
      %1376 = vmatprep.subr.bf16.mxu0 0
      %1377 = vmatpush1.bf16.msra.mxu0 0
      %1378 = vmatprep.subr.bf16.mxu0 0
      %1379 = vmatpush1.bf16.msra.mxu0 0
      %1380 = vmatprep.subr.bf16.mxu0 0
      %1381 = vmatpush1.bf16.msra.mxu0 0
      %1382 = vmatprep.subr.bf16.mxu0 0
      %1383 = vmatpush1.bf16.msra.mxu0 0
      %1384 = vmatprep.subr.bf16.mxu0 0
      %1385 = vmatpush1.bf16.msra.mxu0 0
      %1386 = vmatprep.subr.bf16.mxu0 0
      %1387 = vmatpush1.bf16.msra.mxu0 0
      %1388 = vmatprep.subr.bf16.mxu0 0
      %1389 = vmatpush1.bf16.msra.mxu0 0
      %1390 = vmatprep.subr.bf16.mxu0 0
      %1391 = vmatpush1.bf16.msra.mxu0 0
      %1392 = vmatprep.subr.bf16.mxu0 0
      %1393 = vmatpush1.bf16.msra.mxu0 0
      %1394 = vmatprep.subr.bf16.mxu0 0
      %1395 = vmatpush1.bf16.msra.mxu0 0
      %1396 = vmatprep.subr.bf16.mxu0 0
      %1397 = vmatpush1.bf16.msra.mxu0 0
      %1398 = vmatprep.subr.bf16.mxu0 0
      %1399 = vmatpush1.bf16.msra.mxu0 0
      %1400 = vmatprep.subr.bf16.mxu0 0
      %1401 = vmatpush1.bf16.msra.mxu0 0
      %1402 = vmatprep.mubr.bf16.mxu0 0
      %1403 = vmatmul.mubr.bf16.gmra.mrb[0].mxu0 %v1365
      %v1404 = vpop.f32.mrb[0].mxu0
      %v1405 = vadd.f32 0.0, %v1404
      %v1406 = vpop.f32.mrb[0].mxu0
      %v1407 = vpop.f32.mrb[0].mxu0
      %v1408 = vpop.f32.mrb[0].mxu0
      %1409 = vdwg.mxu0
      %v1411 = vsel %vm1270, %v1269, 0
      %v1414 = vsel %vm1274, %v1026, 0
      %1416 = vmatprep.subr.bf16.mxu0 0
      %1417 = vmatpush1.bf16.msra.mxu0 %v1414
      %1418 = vmatprep.subr.bf16.mxu0 0
      %1419 = vmatpush1.bf16.msra.mxu0 0
      %1420 = vmatprep.subr.bf16.mxu0 0
      %1421 = vmatpush1.bf16.msra.mxu0 0
      %1422 = vmatprep.subr.bf16.mxu0 0
      %1423 = vmatpush1.bf16.msra.mxu0 0
      %1424 = vmatprep.subr.bf16.mxu0 0
      %1425 = vmatpush1.bf16.msra.mxu0 0
      %1426 = vmatprep.subr.bf16.mxu0 0
      %1427 = vmatpush1.bf16.msra.mxu0 0
      %1428 = vmatprep.subr.bf16.mxu0 0
      %1429 = vmatpush1.bf16.msra.mxu0 0
      %1430 = vmatprep.subr.bf16.mxu0 0
      %1431 = vmatpush1.bf16.msra.mxu0 0
      %1432 = vmatprep.subr.bf16.mxu0 0
      %1433 = vmatpush1.bf16.msra.mxu0 0
      %1434 = vmatprep.subr.bf16.mxu0 0
      %1435 = vmatpush1.bf16.msra.mxu0 0
      %1436 = vmatprep.subr.bf16.mxu0 0
      %1437 = vmatpush1.bf16.msra.mxu0 0
      %1438 = vmatprep.subr.bf16.mxu0 0
      %1439 = vmatpush1.bf16.msra.mxu0 0
      %1440 = vmatprep.subr.bf16.mxu0 0
      %1441 = vmatpush1.bf16.msra.mxu0 0
      %1442 = vmatprep.subr.bf16.mxu0 0
      %1443 = vmatpush1.bf16.msra.mxu0 0
      %1444 = vmatprep.subr.bf16.mxu0 0
      %1445 = vmatpush1.bf16.msra.mxu0 0
      %1446 = vmatprep.subr.bf16.mxu0 0
      %1447 = vmatpush1.bf16.msra.mxu0 0
      %1448 = vmatprep.mubr.bf16.mxu0 0
      %1449 = vmatmul.mubr.bf16.gmra.mrb[0].mxu0 %v1411
      %v1450 = vpop.f32.mrb[0].mxu0
      %v1451 = vadd.f32 0.0, %v1450
      %v1452 = vpop.f32.mrb[0].mxu0
      %v1453 = vpop.f32.mrb[0].mxu0
      %v1454 = vpop.f32.mrb[0].mxu0
      %1455 = vdwg.mxu0
      %1457 = vrot.lane.b32.xlu0 %v1359, 16
      %v1458 = vpop.permute.xlu0 %1457
      %1461 = vrot.lane.b32.xlu0 %v1405, 32
      %v1462 = vpop.permute.xlu0 %1461
      %1465 = vrot.lane.b32.xlu0 %v1451, 48
      %v1466 = vpop.permute.xlu0 %1465
      %v1468 = vsel %vm1031, %v1313, %v1458
      %vm1469 = vcmask 261120
      %v1470 = vsel %vm1469, %v1468, %v1462
      %vm1471 = vcmask 392192
      %v1472 = vsel %vm1471, %v1470, %v1466
      %v1473 = vpack.c.bf16 %v1472, %v1472
      %v1474 = vld [vmem:[%s12] sm:$0xf]
      %v1475 = vld [vmem:[%s12 + $0x4] sm:$0xf]
      %v1476 = vld [vmem:[%s12 + $0x8] sm:$0xf]
      %v1477 = vld [vmem:[%s12 + $0xc] sm:$0xf]
      %v1478 = vld [vmem:[%s12 + $0x10] sm:$0xf]
      %v1479 = vld [vmem:[%s12 + $0x14] sm:$0xf]
      %v1480 = vld [vmem:[%s12 + $0x18] sm:$0xf]
      %v1481 = vld [vmem:[%s12 + $0x1c] sm:$0xf]
      %v1482 = vld [vmem:[%s13] sm:$0x1]
      %v1484 = vlaneseq
      %v1485 = vshrl.u32 %v1484, 7
      %v1486 = vsub.s32 0, %v1485
      %v1487 = vrot.slane %v1482, %v1486
      %v1497 = vunpack.c.l.b16 %v1474
      %v1498 = vunpack.c.l.b16 %v1475
      %v1499 = vunpack.c.l.b16 %v1476
      %v1500 = vunpack.c.l.b16 %v1477
      %v1501 = vunpack.c.l.b16 %v1478
      %v1502 = vunpack.c.l.b16 %v1479
      %v1503 = vunpack.c.l.b16 %v1480
      %v1504 = vunpack.c.l.b16 %v1481
      %v1505 = vpack.c.b16 %v1498, %v1497
      %v1506 = vpack.c.b16 %v1500, %v1499
      %v1507 = vpack.c.b16 %v1502, %v1501
      %v1508 = vpack.c.b16 %v1504, %v1503
      %v1514 = vsel %vm797, %v1473, 0
      %1516 = vmatprep.subr.bf16.mxu0 0
      %1517 = vmatpush1.bf16.msra.mxu0 %v1505
      %1518 = vmatprep.subr.bf16.mxu0 0
      %1519 = vmatpush1.bf16.msra.mxu0 %v1506
      %1520 = vmatprep.subr.bf16.mxu0 0
      %1521 = vmatpush1.bf16.msra.mxu0 %v1507
      %1522 = vmatprep.subr.bf16.mxu0 0
      %1523 = vmatpush1.bf16.msra.mxu0 %v1508
      %1524 = vmatprep.subr.bf16.mxu0 0
      %1525 = vmatpush1.bf16.msra.mxu0 0
      %1526 = vmatprep.subr.bf16.mxu0 0
      %1527 = vmatpush1.bf16.msra.mxu0 0
      %1528 = vmatprep.subr.bf16.mxu0 0
      %1529 = vmatpush1.bf16.msra.mxu0 0
      %1530 = vmatprep.subr.bf16.mxu0 0
      %1531 = vmatpush1.bf16.msra.mxu0 0
      %1532 = vmatprep.subr.bf16.mxu0 0
      %1533 = vmatpush1.bf16.msra.mxu0 0
      %1534 = vmatprep.subr.bf16.mxu0 0
      %1535 = vmatpush1.bf16.msra.mxu0 0
      %1536 = vmatprep.subr.bf16.mxu0 0
      %1537 = vmatpush1.bf16.msra.mxu0 0
      %1538 = vmatprep.subr.bf16.mxu0 0
      %1539 = vmatpush1.bf16.msra.mxu0 0
      %1540 = vmatprep.subr.bf16.mxu0 0
      %1541 = vmatpush1.bf16.msra.mxu0 0
      %1542 = vmatprep.subr.bf16.mxu0 0
      %1543 = vmatpush1.bf16.msra.mxu0 0
      %1544 = vmatprep.subr.bf16.mxu0 0
      %1545 = vmatpush1.bf16.msra.mxu0 0
      %1546 = vmatprep.subr.bf16.mxu0 0
      %1547 = vmatpush1.bf16.msra.mxu0 0
      %1548 = vmatprep.mubr.bf16.mxu0 0
      %1549 = vmatmul.mubr.bf16.gmra.mrb[0].mxu0 %v1514
      %v1550 = vpop.f32.mrb[0].mxu0
      %v1551 = vadd.f32 %v1487, %v1550
      %v1552 = vpop.f32.mrb[0].mxu0
      %v1553 = vpop.f32.mrb[0].mxu0
      %v1554 = vpop.f32.mrb[0].mxu0
      %1555 = vdwg.mxu0
      %v1556 = vadd.f32 %v708, %v1551
      %v1557 = vld [vmem:[%s14] sm:$0x1]
      %v1558 = vld [vmem:[%s15] sm:$0x1]
      %v1559 = vsel %vm712, %v1556, 0.0
      %1560 = vadd.xlane.f32.xlu0 %v1559
      %v1561 = vpop.xlane.xlu0 %1560
      %v1562 = vmul.f32 %v1561, %v716
      %v1563 = vsub.f32 %v1556, %v1562
      %v1564 = vmul.f32 %v1563, %v1563
      %v1565 = vsel %vm712, %v1564, 0.0
      %1566 = vadd.xlane.f32.xlu0 %v1565
      %v1567 = vpop.xlane.xlu0 %1566
      %v1568 = vmul.f32 %v1567, %v716
      %v1569 = vadd.f32 %v1568, 1e-05
      %v1570 = vrsqrt.pop %v1569
      %v1571 = vmul.f32 %v1563, %v1570
      %v1573 = vlaneseq
      %v1574 = vshrl.u32 %v1573, 7
      %v1575 = vsub.s32 0, %v1574
      %v1576 = vrot.slane %v1557, %v1575
      %v1578 = vmul.f32 %v1571, %v1576
      %v1580 = vlaneseq
      %v1581 = vshrl.u32 %v1580, 7
      %v1582 = vsub.s32 0, %v1581
      %v1583 = vrot.slane %v1558, %v1582
      %v1585 = vadd.f32 %v1578, %v1583
      %v1586 = vpack.c.bf16 %v1585, %v1585
      %v1587 = vld [vmem:[%s16] sm:$0xff]
      %v1588 = vld [vmem:[%s16 + $0x8] sm:$0xff]
      %v1589 = vld [vmem:[%s16 + $0x10] sm:$0xff]
      %v1590 = vld [vmem:[%s16 + $0x18] sm:$0xff]
      %v1591 = vld [vmem:[%s16 + $0x20] sm:$0xff]
      %v1592 = vld [vmem:[%s16 + $0x28] sm:$0xff]
      %v1593 = vld [vmem:[%s16 + $0x30] sm:$0xff]
      %v1594 = vld [vmem:[%s16 + $0x38] sm:$0xff]
      %v1595 = vld [vmem:[%s17] sm:$0x3]
      %v1597 = vlaneseq
      %v1598 = vshrl.u32 %v1597, 7
      %v1599 = vsub.s32 0, %v1598
      %v1600 = vrot.slane %v1595, %v1599
      %v1601 = vlaneseq
      %v1602 = vshrl.u32 %v1601, 7
      %v1603 = vsub.s32 1, %v1602
      %v1604 = vrot.slane %v1595, %v1603
      %v1615 = vunpack.c.l.b16 %v1587
      %v1616 = vunpack.c.h.b16 %v1587
      %v1617 = vunpack.c.l.b16 %v1588
      %v1618 = vunpack.c.h.b16 %v1588
      %v1619 = vunpack.c.l.b16 %v1589
      %v1620 = vunpack.c.h.b16 %v1589
      %v1621 = vunpack.c.l.b16 %v1590
      %v1622 = vunpack.c.h.b16 %v1590
      %v1623 = vunpack.c.l.b16 %v1591
      %v1624 = vunpack.c.h.b16 %v1591
      %v1625 = vunpack.c.l.b16 %v1592
      %v1626 = vunpack.c.h.b16 %v1592
      %v1627 = vunpack.c.l.b16 %v1593
      %v1628 = vunpack.c.h.b16 %v1593
      %v1629 = vunpack.c.l.b16 %v1594
      %v1630 = vunpack.c.h.b16 %v1594
      %v1631 = vpack.c.b16 %v1617, %v1615
      %v1632 = vpack.c.b16 %v1618, %v1616
      %v1633 = vpack.c.b16 %v1621, %v1619
      %v1634 = vpack.c.b16 %v1622, %v1620
      %v1635 = vpack.c.b16 %v1625, %v1623
      %v1636 = vpack.c.b16 %v1626, %v1624
      %v1637 = vpack.c.b16 %v1629, %v1627
      %v1638 = vpack.c.b16 %v1630, %v1628
      %v1648 = vsel %vm797, %v1586, 0
      %1650 = vmatprep.subr.bf16.mxu0 %v1632
      %1651 = vmatpush1.bf16.msra.mxu0 %v1631
      %1652 = vmatprep.subr.bf16.mxu0 %v1634
      %1653 = vmatpush1.bf16.msra.mxu0 %v1633
      %1654 = vmatprep.subr.bf16.mxu0 %v1636
      %1655 = vmatpush1.bf16.msra.mxu0 %v1635
      %1656 = vmatprep.subr.bf16.mxu0 %v1638
      %1657 = vmatpush1.bf16.msra.mxu0 %v1637
      %1658 = vmatprep.subr.bf16.mxu0 0
      %1659 = vmatpush1.bf16.msra.mxu0 0
      %1660 = vmatprep.subr.bf16.mxu0 0
      %1661 = vmatpush1.bf16.msra.mxu0 0
      %1662 = vmatprep.subr.bf16.mxu0 0
      %1663 = vmatpush1.bf16.msra.mxu0 0
      %1664 = vmatprep.subr.bf16.mxu0 0
      %1665 = vmatpush1.bf16.msra.mxu0 0
      %1666 = vmatprep.subr.bf16.mxu0 0
      %1667 = vmatpush1.bf16.msra.mxu0 0
      %1668 = vmatprep.subr.bf16.mxu0 0
      %1669 = vmatpush1.bf16.msra.mxu0 0
      %1670 = vmatprep.subr.bf16.mxu0 0
      %1671 = vmatpush1.bf16.msra.mxu0 0
      %1672 = vmatprep.subr.bf16.mxu0 0
      %1673 = vmatpush1.bf16.msra.mxu0 0
      %1674 = vmatprep.subr.bf16.mxu0 0
      %1675 = vmatpush1.bf16.msra.mxu0 0
      %1676 = vmatprep.subr.bf16.mxu0 0
      %1677 = vmatpush1.bf16.msra.mxu0 0
      %1678 = vmatprep.subr.bf16.mxu0 0
      %1679 = vmatpush1.bf16.msra.mxu0 0
      %1680 = vmatprep.subr.bf16.mxu0 0
      %1681 = vmatpush1.bf16.msra.mxu0 0
      %1682 = vmatprep.mubr.bf16.mxu0 0
      %1683 = vmatmul.mubr.bf16.gmra.mrb[0].mxu0 %v1648
      %v1684 = vpop.f32.mrb[0].mxu0
      %v1685 = vadd.f32 %v1600, %v1684
      %v1686 = vpop.f32.mrb[0].mxu0
      %v1687 = vadd.f32 %v1604, %v1686
      %v1688 = vpop.f32.mrb[0].mxu0
      %v1689 = vpop.f32.mrb[0].mxu0
      %1690 = vdwg.mxu0
      %v1691 = vmul.f32 %v1685, 0.5
      %v1692 = vmul.f32 %v1687, 0.5
      %v1693 = vmul.f32 %v1685, 0.70710677
      %v1694 = vmul.f32 %v1687, 0.70710677
      %v1695 = vand.u32 2147483647, %v1693
      %v1696 = vand.u32 2147483647, %v1694
      %v1697 = vmul.f32 %v1695, 0.3275911
      %v1698 = vmul.f32 %v1696, 0.3275911
      %v1699 = vadd.f32 %v1697, 1.0
      %v1700 = vadd.f32 %v1698, 1.0
      %v1701 = vrcp.pop %v1699
      %v1702 = vmul.f32 1.0, %v1701
      %v1703 = vrcp.pop %v1700
      %v1704 = vmul.f32 1.0, %v1703
      %v1705 = vmul.f32 %v1702, 1.0614054
      %v1706 = vmul.f32 %v1704, 1.0614054
      %v1707 = vadd.f32 %v1705, -1.4531521
      %v1708 = vadd.f32 %v1706, -1.4531521
      %v1709 = vmul.f32 %v1707, %v1702
      %v1710 = vmul.f32 %v1708, %v1704
      %v1711 = vadd.f32 %v1709, 1.4214138
      %v1712 = vadd.f32 %v1710, 1.4214138
      %v1713 = vmul.f32 %v1711, %v1702
      %v1714 = vmul.f32 %v1712, %v1704
      %v1715 = vadd.f32 %v1713, -0.28449672
      %v1716 = vadd.f32 %v1714, -0.28449672
      %v1717 = vmul.f32 %v1715, %v1702
      %v1718 = vmul.f32 %v1716, %v1704
      %v1719 = vadd.f32 %v1717, 0.2548296
      %v1720 = vadd.f32 %v1718, 0.2548296
      %v1721 = vmul.f32 %v1719, %v1702
      %v1722 = vmul.f32 %v1720, %v1704
      %v1723 = vsub.f32 0.0, %v1695
      %v1724 = vsub.f32 0.0, %v1696
      %v1725 = vmul.f32 %v1723, %v1695
      %v1726 = vmul.f32 %v1724, %v1696
      %v1727 = vmul.f32 %v1725, 1.442695
      %v1728 = vpow.pop %v1727
      %v1729 = vmul.f32 %v1726, 1.442695
      %v1730 = vpow.pop %v1729
      %v1731 = vmul.f32 %v1721, %v1728
      %v1732 = vmul.f32 %v1722, %v1730
      %v1733 = vsub.f32 1.0, %v1731
      %v1734 = vsub.f32 1.0, %v1732
      %vm1735 = vcmp.ge.f32.partialorder %v1693, 0.0
      %vm1736 = vcmp.ge.f32.partialorder %v1694, 0.0
      %v1737 = vsub.f32 0.0, %v1733
      %v1738 = vsub.f32 0.0, %v1734
      %v1739 = vsel %vm1735, %v1733, %v1737
      %v1740 = vsel %vm1736, %v1734, %v1738
      %v1741 = vadd.f32 %v1739, 1.0
      %v1742 = vadd.f32 %v1740, 1.0
      %v1743 = vmul.f32 %v1691, %v1741
      %v1744 = vmul.f32 %v1692, %v1742
      %v1745 = vpack.c.bf16 %v1743, %v1743
      %v1746 = vpack.c.bf16 %v1744, %v1744
      %v1747 = vld [vmem:[%s18] sm:$0xf]
      %v1748 = vld [vmem:[%s18 + $0x4] sm:$0xf]
      %v1749 = vld [vmem:[%s18 + $0x8] sm:$0xf]
      %v1750 = vld [vmem:[%s18 + $0xc] sm:$0xf]
      %v1751 = vld [vmem:[%s18 + $0x10] sm:$0xf]
      %v1752 = vld [vmem:[%s18 + $0x14] sm:$0xf]
      %v1753 = vld [vmem:[%s18 + $0x18] sm:$0xf]
      %v1754 = vld [vmem:[%s18 + $0x1c] sm:$0xf]
      %v1755 = vld [vmem:[%s18 + $0x20] sm:$0xf]
      %v1756 = vld [vmem:[%s18 + $0x24] sm:$0xf]
      %v1757 = vld [vmem:[%s18 + $0x28] sm:$0xf]
      %v1758 = vld [vmem:[%s18 + $0x2c] sm:$0xf]
      %v1759 = vld [vmem:[%s18 + $0x30] sm:$0xf]
      %v1760 = vld [vmem:[%s18 + $0x34] sm:$0xf]
      %v1761 = vld [vmem:[%s18 + $0x38] sm:$0xf]
      %v1762 = vld [vmem:[%s18 + $0x3c] sm:$0xf]
      %v1763 = vld [vmem:[%s18 + $0x40] sm:$0xf]
      %v1764 = vld [vmem:[%s18 + $0x44] sm:$0xf]
      %v1765 = vld [vmem:[%s18 + $0x48] sm:$0xf]
      %v1766 = vld [vmem:[%s18 + $0x4c] sm:$0xf]
      %v1767 = vld [vmem:[%s18 + $0x50] sm:$0xf]
      %v1768 = vld [vmem:[%s18 + $0x54] sm:$0xf]
      %v1769 = vld [vmem:[%s18 + $0x58] sm:$0xf]
      %v1770 = vld [vmem:[%s18 + $0x5c] sm:$0xf]
      %v1771 = vld [vmem:[%s18 + $0x60] sm:$0xf]
      %v1772 = vld [vmem:[%s18 + $0x64] sm:$0xf]
      %v1773 = vld [vmem:[%s18 + $0x68] sm:$0xf]
      %v1774 = vld [vmem:[%s18 + $0x6c] sm:$0xf]
      %v1775 = vld [vmem:[%s18 + $0x70] sm:$0xf]
      %v1776 = vld [vmem:[%s18 + $0x74] sm:$0xf]
      %v1777 = vld [vmem:[%s18 + $0x78] sm:$0xf]
      %v1778 = vld [vmem:[%s18 + $0x7c] sm:$0xf]
      %v1779 = vld [vmem:[%s19] sm:$0x1]
      %v1781 = vlaneseq
      %v1782 = vshrl.u32 %v1781, 7
      %v1783 = vsub.s32 0, %v1782
      %v1784 = vrot.slane %v1779, %v1783
      %v1818 = vunpack.c.l.b16 %v1747
      %v1819 = vunpack.c.l.b16 %v1748
      %v1820 = vunpack.c.l.b16 %v1749
      %v1821 = vunpack.c.l.b16 %v1750
      %v1822 = vunpack.c.l.b16 %v1751
      %v1823 = vunpack.c.l.b16 %v1752
      %v1824 = vunpack.c.l.b16 %v1753
      %v1825 = vunpack.c.l.b16 %v1754
      %v1826 = vunpack.c.l.b16 %v1755
      %v1827 = vunpack.c.l.b16 %v1756
      %v1828 = vunpack.c.l.b16 %v1757
      %v1829 = vunpack.c.l.b16 %v1758
      %v1830 = vunpack.c.l.b16 %v1759
      %v1831 = vunpack.c.l.b16 %v1760
      %v1832 = vunpack.c.l.b16 %v1761
      %v1833 = vunpack.c.l.b16 %v1762
      %v1834 = vunpack.c.l.b16 %v1763
      %v1835 = vunpack.c.l.b16 %v1764
      %v1836 = vunpack.c.l.b16 %v1765
      %v1837 = vunpack.c.l.b16 %v1766
      %v1838 = vunpack.c.l.b16 %v1767
      %v1839 = vunpack.c.l.b16 %v1768
      %v1840 = vunpack.c.l.b16 %v1769
      %v1841 = vunpack.c.l.b16 %v1770
      %v1842 = vunpack.c.l.b16 %v1771
      %v1843 = vunpack.c.l.b16 %v1772
      %v1844 = vunpack.c.l.b16 %v1773
      %v1845 = vunpack.c.l.b16 %v1774
      %v1846 = vunpack.c.l.b16 %v1775
      %v1847 = vunpack.c.l.b16 %v1776
      %v1848 = vunpack.c.l.b16 %v1777
      %v1849 = vunpack.c.l.b16 %v1778
      %v1850 = vpack.c.b16 %v1819, %v1818
      %v1851 = vpack.c.b16 %v1821, %v1820
      %v1852 = vpack.c.b16 %v1823, %v1822
      %v1853 = vpack.c.b16 %v1825, %v1824
      %v1854 = vpack.c.b16 %v1827, %v1826
      %v1855 = vpack.c.b16 %v1829, %v1828
      %v1856 = vpack.c.b16 %v1831, %v1830
      %v1857 = vpack.c.b16 %v1833, %v1832
      %v1858 = vpack.c.b16 %v1835, %v1834
      %v1859 = vpack.c.b16 %v1837, %v1836
      %v1860 = vpack.c.b16 %v1839, %v1838
      %v1861 = vpack.c.b16 %v1841, %v1840
      %v1862 = vpack.c.b16 %v1843, %v1842
      %v1863 = vpack.c.b16 %v1845, %v1844
      %v1864 = vpack.c.b16 %v1847, %v1846
      %v1865 = vpack.c.b16 %v1849, %v1848
      %1882 = vmatprep.subr.bf16.mxu0 0
      %1883 = vmatpush1.bf16.msra.mxu0 %v1850
      %1884 = vmatprep.subr.bf16.mxu0 0
      %1885 = vmatpush1.bf16.msra.mxu0 %v1851
      %1886 = vmatprep.subr.bf16.mxu0 0
      %1887 = vmatpush1.bf16.msra.mxu0 %v1852
      %1888 = vmatprep.subr.bf16.mxu0 0
      %1889 = vmatpush1.bf16.msra.mxu0 %v1853
      %1890 = vmatprep.subr.bf16.mxu0 0
      %1891 = vmatpush1.bf16.msra.mxu0 %v1854
      %1892 = vmatprep.subr.bf16.mxu0 0
      %1893 = vmatpush1.bf16.msra.mxu0 %v1855
      %1894 = vmatprep.subr.bf16.mxu0 0
      %1895 = vmatpush1.bf16.msra.mxu0 %v1856
      %1896 = vmatprep.subr.bf16.mxu0 0
      %1897 = vmatpush1.bf16.msra.mxu0 %v1857
      %1898 = vmatprep.subr.bf16.mxu0 0
      %1899 = vmatpush1.bf16.msra.mxu0 %v1858
      %1900 = vmatprep.subr.bf16.mxu0 0
      %1901 = vmatpush1.bf16.msra.mxu0 %v1859
      %1902 = vmatprep.subr.bf16.mxu0 0
      %1903 = vmatpush1.bf16.msra.mxu0 %v1860
      %1904 = vmatprep.subr.bf16.mxu0 0
      %1905 = vmatpush1.bf16.msra.mxu0 %v1861
      %1906 = vmatprep.subr.bf16.mxu0 0
      %1907 = vmatpush1.bf16.msra.mxu0 %v1862
      %1908 = vmatprep.subr.bf16.mxu0 0
      %1909 = vmatpush1.bf16.msra.mxu0 %v1863
      %1910 = vmatprep.subr.bf16.mxu0 0
      %1911 = vmatpush1.bf16.msra.mxu0 %v1864
      %1912 = vmatprep.subr.bf16.mxu0 0
      %1913 = vmatpush1.bf16.msra.mxu0 %v1865
      %1914 = vmatprep.mubr.bf16.mxu0 %v1746
      %1915 = vmatmul.mubr.bf16.gmra.mrb[0].mxu0 %v1745
      %v1916 = vpop.f32.mrb[0].mxu0
      %v1917 = vadd.f32 %v1784, %v1916
      %v1918 = vpop.f32.mrb[0].mxu0
      %v1919 = vpop.f32.mrb[0].mxu0
      %v1920 = vpop.f32.mrb[0].mxu0
      %1921 = vdwg.mxu0
      %v1922 = vadd.f32 %v1556, %v1917
      %1923 = vst.msk [vmem:[%s706] sm:$0xf] %vm712, %v1922
      %p1924 = scmp.lt.s32.totalorder %s35, 1
      %s1925 = scalar_select %p1924, %s35, 1
      %p1926 = scmp.lt.s32.totalorder %s36, 0
      %s1927 = scalar_select %p1926, %s36, 0
      %s1928 = sadd.s32 %s1927, %s1925
      %s1929 = smul.addr %s1928, 4
      %s1930 = scalar_lea.vmem %s20, %s1929
      // Predicated region
      $region101: #{encoder_forward.11} parent=99 // pred_check
        %p1931 = pneg %p505
      $region102: #{encoder_forward.11} parent=99 // pred_check_branch
        %1933 = sbr.rel (%p1931) target = $region104
      $region103: #{encoder_forward.11} parent=99 // pred_region
        _
      $region104: #{encoder_forward.11} parent=99 // pred_fallthru
        _
    $region100: #{encoder_forward.11} parent=5 // pred_fallthru
      _
    %p1934 = scmp.le.s32.totalorder 2, %s26
    // Predicated region
    $region105: #{encoder_forward.11} parent=5 // pred_check
      %p1935 = pneg %p1934
    $region106: #{encoder_forward.11} parent=5 // pred_check_branch
      %1937 = sbr.rel (%p1935) target = $region108
    $region107: #{encoder_forward.11} parent=5 // pred_region
      %s1938 = ssub.s32 %s26, 2
      // Predicated region
      $region109: #{encoder_forward.11} parent=107 // pred_check
        %p1939 = pneg %p511
      $region110: #{encoder_forward.11} parent=107 // pred_check_branch
        %1941 = sbr.rel (%p1939) target = $region112
      $region111: #{encoder_forward.11} parent=107 // pred_region
        %p1942 = scmp.lt.s32.totalorder %s37, 1
        %s1943 = scalar_select %p1942, %s37, 1
        %p1944 = scmp.lt.s32.totalorder %s38, 0
        %s1945 = scalar_select %p1944, %s38, 0
        %s1946 = sadd.s32 %s1945, %s1943
        %s1947 = smul.addr %s1946, 4
        %s1948 = scalar_lea.vmem %s20, %s1947
      $region112: #{encoder_forward.11} parent=107 // pred_fallthru
        _
    $region108: #{encoder_forward.11} parent=5 // pred_fallthru
      _
  $region6: #{encoder_forward.11} parent=0 // loop_footer
    %s30 = sadd.s32 1, %s26
  $region7: #{encoder_forward.11} parent=0 // loop_footer_branch
    %25 = sbr.rel target = $region3
  $region8: #{encoder_forward.11} parent=0 // loop_exit
    _

</llo_original>
